<compile_context>
chip_gen: v7x
topology: tpu7x:2x2x1
jax: 0.10.0
libtpu: 0.0.40
codegen_flags: <defaults>
</compile_context>

<pallas_src>
import functools
import math

import numpy as np
import jax
import jax.numpy as jnp
from jax import lax
from jax.experimental import pallas as pl
from jax.experimental.pallas import tpu as pltpu

# ------------------------- configuration -------------------------
DIM_IN = 36
SEQLEN = 8
D_MODEL = 32
D_WORD_VEC = D_MODEL
D_HIDDEN = 64
N_LAYERS = 2
N_HEADS = 4
D_K = 8
D_V = 8
N_SRC_VOCAB = SEQLEN * DIM_IN          # per-timestep feature size of src_seq (288)
N_TRG_VOCAB = 16
N_POSITION = 200
LN_EPS = 1e-6                          # all LayerNorms in the reference use eps=1e-06

NFINGER = DIM_IN // 6                  # 6
NCONV_IN = DIM_IN // (DIM_IN // 6)     # 6 (Conv1d in-channels)
ENC2_IN = SEQLEN * DIM_IN // NFINGER   # 48
PRJ_PAD = 128                          # lane-dense output width (real cols: N_TRG_VOCAB)
DPACK_W = 64                           # lane width of the per-call data pack

assert N_HEADS * D_K == D_MODEL
assert D_K == D_V                      # head mask is shared between Q and V/O columns


def _round8(n):
    return -(-n // 8) * 8


# ============================ packed-weight layouts ============================

def _layout_a(batch):
    """Row offsets inside wpack_a (width = D_MODEL = 32 columns)."""
    bl = batch * SEQLEN
    hr = N_HEADS * bl
    items = [('emb_w', N_SRC_VOCAB), ('emb_b', 1), ('emb_ln', 2), ('enc_ln', 2),
             ('pos', bl), ('qmask', hr)]
    for l in range(N_LAYERS):
        items += [(f'wq{l}', D_MODEL), (f'wk{l}', D_MODEL), (f'wv{l}', D_MODEL),
                  (f'fc{l}', N_HEADS * D_V), (f'attn_ln{l}', 2),
                  (f'w2{l}', D_HIDDEN), (f'b2{l}', 1), (f'ffn_ln{l}', 2)]
    items += [('enc2_w', ENC2_IN), ('enc2_b', 1), ('enc2_ln', 2),
              ('conv_w', bl), ('conv_b', bl), ('conv_ln', 2)]
    offs, r = {}, 0
    for name, rows in items:
        offs[name] = r
        r += _round8(rows)
    return offs, r


def _layout_b():
    """Row offsets inside wpack_b (width = PRJ_PAD = 128 columns)."""
    items = []
    for l in range(N_LAYERS):
        items += [(f'w1{l}', D_MODEL), (f'b1{l}', 1)]
    items += [('prj_a', D_MODEL), ('prj_b', D_MODEL)]
    offs, r = {}, 0
    for name, rows in items:
        offs[name] = r
        r += _round8(rows)
    return offs, r


# ============================ fused Pallas kernel ============================

def _fused_forward_kernel(src_ref, dpack_ref, wa_ref, wb_ref, out_ref,
                          *, batch, la, lb):
    f32 = jnp.float32
    bl = batch * SEQLEN
    hr = N_HEADS * bl                                    # head-row-stacked size

    def wa(name, rows, cols=D_MODEL):
        o = la[name]
        return wa_ref[o:o + rows, 0:cols]

    def wb(name, rows, cols):
        o = lb[name]
        return wb_ref[o:o + rows, 0:cols]

    def layer_norm(y, gb):                               # gb rows: [gamma, beta]
        mu = jnp.mean(y, axis=-1, keepdims=True)
        var = jnp.mean(jnp.square(y - mu), axis=-1, keepdims=True)
        return (y - mu) * lax.rsqrt(var + LN_EPS) * gb[0:1, :] + gb[1:2, :]

    # ---------- encoder1: src_word_emb (Linear + ReLU + LN) ----------
    # TODO(synk): nn.Dropout layers are omitted (eval/inference => identity).
    x = src_ref[...]                                               # (B*L, 288)
    h = jnp.dot(x, wa('emb_w', N_SRC_VOCAB), preferred_element_type=f32) + wa('emb_b', 1)
    h = jnp.maximum(h, 0.0)
    h = layer_norm(h, wa('emb_ln', 2))                             # (B*L, d_model)

    # pre-tiled positional encoding + encoder top-level LayerNorm
    h = h + wa('pos', bl)
    h = layer_norm(h, wa('enc_ln', 2))

    # head-packed attention helpers (static data, loaded once)
    qmask = wa('qmask', hr)                                        # (H*BL, d_model) 0/1 block-diag
    bias = dpack_ref[0:hr, 0:bl]                                   # (H*BL, B*L) additive mask

    # ---------- encoder layers (post-norm MHA + position-wise FFN) ----------
    for l in range(N_LAYERS):
        residual = h
        # 1/sqrt(d_k) is folded into the packed Wq.
        q = jnp.dot(h, wa(f'wq{l}', D_MODEL), preferred_element_type=f32)   # (BL, 32)
        k = jnp.dot(h, wa(f'wk{l}', D_MODEL), preferred_element_type=f32)
        v = jnp.dot(h, wa(f'wv{l}', D_MODEL), preferred_element_type=f32)

        # Row-stack queries over heads and mask to each head's d_k channel block:
        # row r of q_bd holds Q_{r//BL}[r % BL] in that head's columns, zero elsewhere.
        q_bd = jnp.concatenate([q] * N_HEADS, axis=0) * qmask               # (H*BL, 32)

        # One score matmul for all (head, query, key) triples; full-row softmax
        # is exactly the per-head softmax (each row is one head's query row).
        s = lax.dot_general(q_bd, k, (((1,), (1,)), ((), ())),
                            preferred_element_type=f32) + bias              # (H*BL, BL)
        s = s - jnp.max(s, axis=-1, keepdims=True)
        e = jnp.exp(s)
        p = e * pl.reciprocal(jnp.sum(e, axis=-1, keepdims=True), approx=True)

        # PV for all heads at once; the head mask keeps only each head's V columns,
        # then the shared output projection and a 3-add row-block reduction.
        o = jnp.dot(p, v, preferred_element_type=f32) * qmask               # (H*BL, 32)
        a = jnp.dot(o, wa(f'fc{l}', N_HEADS * D_V), preferred_element_type=f32)
        attn_proj = a[0:bl]
        for hh in range(1, N_HEADS):
            attn_proj = attn_proj + a[hh * bl:(hh + 1) * bl]                # (BL, 32)
        h = layer_norm(attn_proj + residual, wa(f'attn_ln{l}', 2))

        residual = h
        ff = jnp.dot(h, wb(f'w1{l}', D_MODEL, D_HIDDEN),
                     preferred_element_type=f32) + wb(f'b1{l}', 1, D_HIDDEN)
        ff = jnp.maximum(ff, 0.0)
        h = (jnp.dot(ff, wa(f'w2{l}', D_HIDDEN), preferred_element_type=f32)
             + wa(f'b2{l}', 1) + residual)
        h = layer_norm(h, wa(f'ffn_ln{l}', 2))

    enc_output = h                                                 # (B*L, d_model)

    # ---------- encoder2: Linear + LeakyReLU + LN on transformed seq ----------
    x2 = dpack_ref[hr:hr + batch * NFINGER, 0:ENC2_IN]             # (B*6, 48)
    h2 = jnp.dot(x2, wa('enc2_w', ENC2_IN), preferred_element_type=f32) + wa('enc2_b', 1)
    h2 = jnp.where(h2 >= 0.0, h2, 0.01 * h2)                       # LeakyReLU(0.01)
    h2 = layer_norm(h2, wa('enc2_ln', 2))                          # (B*6, d_model)

    # ---------- reshape = Conv1d(6 -> L, k=1) as block-diag matmul + LN(d_model) ----------
    convw = wa('conv_w', bl, batch * NCONV_IN)                     # (B*L, B*6)
    convb = wa('conv_b', bl, 1)                                    # (B*L, 1)
    y2 = jnp.dot(convw, h2, preferred_element_type=f32) + convb
    enc_output2 = layer_norm(y2, wa('conv_ln', 2))                 # (B*L, d_model)

    # ---------- concat + last_prj2 (bias-free), zero-padded to a 128-lane store ----------
    out_ref[...] = (jnp.dot(enc_output, wb('prj_a', D_MODEL, PRJ_PAD),
                            preferred_element_type=f32)
                    + jnp.dot(enc_output2, wb('prj_b', D_MODEL, PRJ_PAD),
                              preferred_element_type=f32))


# ============================ wrapper (plain JAX glue) ============================

def sinusoid_table(n_position, d_hid):
    pos = np.arange(n_position, dtype=np.float64)[:, None]
    hid = np.arange(d_hid)[None, :]
    angle = pos / np.power(10000.0, 2.0 * (hid // 2) / d_hid)
    table = np.zeros((n_position, d_hid), dtype=np.float64)
    table[:, 0::2] = np.sin(angle[:, 0::2])
    table[:, 1::2] = np.cos(angle[:, 1::2])
    return np.asarray(table, np.float32)


def transform_seq(data):
    """(b, seq, size) -> (b, dim_in//6, 6*(size//dim_in)); mirrors the torch version."""
    b, seq, size = data.shape
    x = data.reshape(b, seq * (size // DIM_IN), DIM_IN)
    x = jnp.transpose(x, (0, 2, 1))                  # (b, dim_in, seq*(size//dim_in))
    sample = jnp.arange(0, x.shape[2], seq)
    x = x[:, :, sample]                              # (b, dim_in, size//dim_in)
    parts = jnp.split(x, 6, axis=1)                  # 6 x (b, dim_in//6, size//dim_in)
    return jnp.concatenate(parts, axis=2)            # (b, dim_in//6, 6*size//dim_in)


def pack_params(params, batch):
    """Pack all weights / static constants into two lane-aligned f32 blobs (built once)."""
    bl = batch * SEQLEN
    hr = N_HEADS * bl
    la, rows_a = _layout_a(batch)
    lb, rows_b = _layout_b()
    wa = np.zeros((rows_a, D_MODEL), np.float32)
    wb = np.zeros((rows_b, PRJ_PAD), np.float32)

    def put_a(name, arr):
        arr = np.asarray(arr, np.float32)
        wa[la[name]:la[name] + arr.shape[0], :arr.shape[1]] = arr

    def put_b(name, arr):
        arr = np.asarray(arr, np.float32)
        wb[lb[name]:lb[name] + arr.shape[0], :arr.shape[1]] = arr

    put_a('emb_w', params['emb_w'])
    put_a('emb_b', params['emb_b'])
    put_a('emb_ln', params['emb_ln'])
    put_a('enc_ln', params['enc_ln'])
    put_a('pos', np.tile(np.asarray(params['pos_table'], np.float32)[:SEQLEN], (batch, 1)))
    # block-diag head mask: row block h keeps columns h*d_k:(h+1)*d_k
    col_head = np.arange(D_MODEL) // D_K
    row_head = np.arange(hr) // bl
    put_a('qmask', (col_head[None, :] == row_head[:, None]).astype(np.float32))

    scale = 1.0 / math.sqrt(D_K)
    for l in range(N_LAYERS):
        put_a(f'wq{l}', np.asarray(params['wq'][l], np.float32) * scale)  # fold softmax scale
        put_a(f'wk{l}', params['wk'][l])
        put_a(f'wv{l}', params['wv'][l])
        put_a(f'fc{l}', params['fc'][l])
        put_a(f'attn_ln{l}', params['attn_ln'][l])
        put_a(f'w2{l}', params['w2'][l])
        put_a(f'b2{l}', params['b2'][l])
        put_a(f'ffn_ln{l}', params['ffn_ln'][l])
        put_b(f'w1{l}', params['w1'][l])
        put_b(f'b1{l}', params['b1'][l])

    put_a('enc2_w', params['enc2_w'])
    put_a('enc2_b', params['enc2_b'])
    put_a('enc2_ln', params['enc2_ln'])
    # block-diagonal pointwise-conv weight so the whole batch is one matmul in-kernel
    put_a('conv_w', np.kron(np.eye(batch, dtype=np.float32),
                            np.asarray(params['conv_w'], np.float32)))
    put_a('conv_b', np.tile(np.asarray(params['conv_b'], np.float32).reshape(-1, 1), (batch, 1)))
    put_a('conv_ln', params['conv_ln'])

    prj = np.asarray(params['prj2_w'], np.float32)          # (2*d_model, n_trg), zero-pad to 128
    put_b('prj_a', prj[:D_MODEL])
    put_b('prj_b', prj[D_MODEL:])

    return jnp.asarray(wa), jnp.asarray(wb), la, lb


def make_forward(params, batch):
    """Returns (jitted forward fn, packed weight blob A, packed weight blob B)."""
    wa_pack, wb_pack, la, lb = pack_params(params, batch)
    bl = batch * SEQLEN
    hr = N_HEADS * bl
    n2 = batch * NFINGER
    rows_d = hr + _round8(n2)

    kernel = functools.partial(_fused_forward_kernel, batch=batch, la=la, lb=lb)

    def full_spec(shape):
        nd = len(shape)
        return pl.BlockSpec(shape, lambda i, _nd=nd: (0,) * _nd)

    @jax.jit
    def forward(wa_in, wb_in, src_seq, trg_seq=None):
        # cfg['finger_corr'] == False branch of Transformer2d.forward (trg_seq unused there).
        b, seq_len, size = src_seq.shape
        src_x = src_seq.reshape(bl, size).astype(jnp.float32)           # (B*L, 288)
        src2 = transform_seq(src_seq)                                   # (b, 6, 48)
        src2_x = src2.reshape(n2, src2.shape[2]).astype(jnp.float32)

        # get_pad_mask_img: keys are valid where src_seq[..., 0] != 0.
        # (B*L, B*L) additive bias: 0 for same-batch & valid key, -1e9 otherwise
        # (cross-batch -1e9 makes per-batch attention exact inside one big softmax);
        # tiled along rows for the head-row-stacked score matrix.
        key_keep = (src_seq[:, :, 0] != 0).reshape(bl)
        batch_ids = jnp.repeat(jnp.arange(batch), SEQLEN)
        same_batch = batch_ids[:, None] == batch_ids[None, :]
        attn_bias = jnp.where(same_batch & key_keep[None, :], 0.0, -1e9).astype(jnp.float32)
        bias_rows = jnp.tile(attn_bias, (N_HEADS, 1))                   # (H*B*L, B*L)

        # per-call data pack (one DMA): bias rows + transformed sequence
        dpack = jnp.zeros((rows_d, DPACK_W), jnp.float32)
        dpack = dpack.at[0:hr, 0:bl].set(bias_rows)
        dpack = dpack.at[hr:hr + n2, 0:ENC2_IN].set(src2_x)

        inputs = (src_x, dpack, wa_in, wb_in)
        out = pl.pallas_call(
            kernel,
            out_shape=jax.ShapeDtypeStruct((bl, PRJ_PAD), jnp.float32),
            grid=(1,),
            in_specs=[full_spec(a.shape) for a in inputs],
            out_specs=pl.BlockSpec((bl, PRJ_PAD), lambda i: (0, 0)),
            compiler_params=pltpu.CompilerParams(
                dimension_semantics=("arbitrary",),
                vmem_limit_bytes=32 * 1024 * 1024),
        )(*inputs)
        return out[:, :N_TRG_VOCAB].reshape(batch, SEQLEN, N_TRG_VOCAB)

    return forward, wa_pack, wb_pack


# ============================ parameter init ============================

def init_params(key):
    keys = iter(jax.random.split(key, 64))

    def xavier(shape):
        fan_in, fan_out = shape[-2], shape[-1]
        lim = math.sqrt(6.0 / (fan_in + fan_out))
        return jax.random.uniform(next(keys), shape, jnp.float32, -lim, lim)

    def ln(n):      # stacked [gamma; beta] -> (2, n)
        return jnp.stack([jnp.ones((n,), jnp.float32), jnp.zeros((n,), jnp.float32)])

    wq, wk, wv, fc, attn_ln, w1, b1, w2, b2, ffn_ln = ([] for _ in range(10))
    for _ in range(N_LAYERS):
        wq.append(xavier((D_MODEL, N_HEADS * D_K)))
        wk.append(xavier((D_MODEL, N_HEADS * D_K)))
        wv.append(xavier((D_MODEL, N_HEADS * D_V)))
        fc.append(xavier((N_HEADS * D_V, D_MODEL)))
        attn_ln.append(ln(D_MODEL))
        w1.append(xavier((D_MODEL, D_HIDDEN)))
        b1.append(jnp.zeros((1, D_HIDDEN), jnp.float32))
        w2.append(xavier((D_HIDDEN, D_MODEL)))
        b2.append(jnp.zeros((1, D_MODEL), jnp.float32))
        ffn_ln.append(ln(D_MODEL))

    params = {
        "pos_table": jnp.asarray(sinusoid_table(N_POSITION, D_WORD_VEC)),
        # src_word_emb = Linear(n_src_vocab, d_word_vec) + ReLU + LayerNorm
        "emb_w": xavier((N_SRC_VOCAB, D_WORD_VEC)),
        "emb_b": jnp.zeros((1, D_WORD_VEC), jnp.float32),
        "emb_ln": ln(D_WORD_VEC),
        # Encoder top-level LayerNorm
        "enc_ln": ln(D_MODEL),
        # encoder layers (stacked along a leading layer axis)
        "wq": jnp.stack(wq), "wk": jnp.stack(wk), "wv": jnp.stack(wv),
        "fc": jnp.stack(fc), "attn_ln": jnp.stack(attn_ln),
        "w1": jnp.stack(w1), "b1": jnp.stack(b1),
        "w2": jnp.stack(w2), "b2": jnp.stack(b2), "ffn_ln": jnp.stack(ffn_ln),
        # encoder2 = Linear(seqlen*dim_in//(dim_in//6), d_model) + LeakyReLU + LN
        "enc2_w": xavier((ENC2_IN, D_MODEL)),
        "enc2_b": jnp.zeros((1, D_MODEL), jnp.float32),
        "enc2_ln": ln(D_MODEL),
        # reshape = Conv1d(dim_in//(dim_in//6) -> seqlen, k=1) + LN(d_model)
        # TODO(synk): in the PyTorch forward this Conv1d is re-initialized every call;
        # here it is treated as a fixed parameter set.
        "conv_w": xavier((SEQLEN, NCONV_IN)),
        "conv_b": jnp.zeros((SEQLEN,), jnp.float32),
        "conv_ln": ln(D_MODEL),
        # last_prj2 = Linear(2*d_model, n_trg_vocab, bias=False)
        "prj2_w": xavier((2 * D_MODEL, N_TRG_VOCAB)),
    }
    return params


if __name__ == "__main__":
    key = jax.random.PRNGKey(0)
    pkey, dkey1, dkey2 = jax.random.split(key, 3)
    params = init_params(pkey)

    BATCH = 2
    src_seq = jax.random.normal(dkey1, (BATCH, SEQLEN, N_SRC_VOCAB), jnp.float32)  # (2, 8, 288)
    trg_seq = jax.random.normal(dkey2, (BATCH, SEQLEN, N_TRG_VOCAB), jnp.float32)  # unused by forward

    fwd, wa_pack, wb_pack = make_forward(params, BATCH)

    out = jax.block_until_ready(fwd(wa_pack, wb_pack, src_seq, trg_seq))
    assert out.shape == (BATCH, SEQLEN, N_TRG_VOCAB), out.shape
    assert bool(jnp.all(jnp.isfinite(out)))

    # also exercise the key-padding mask path with genuinely zero-padded timesteps
    src_pad = src_seq.at[:, -2:, :].set(0.0)
    out_pad = jax.block_until_ready(fwd(wa_pack, wb_pack, src_pad, trg_seq))
    assert out_pad.shape == (BATCH, SEQLEN, N_TRG_VOCAB)
    assert bool(jnp.all(jnp.isfinite(out_pad)))

    print("KERNEL_OK")
</pallas_src>

<mosaic_0001>
module attributes {stable_mosaic.version = 11 : i64} {
  func.func @_fused_forward_kernel(%arg0: i32, %arg1: memref<16x288xf32, #tpu.memory_space<vmem>>, %arg2: memref<80x64xf32, #tpu.memory_space<vmem>>, %arg3: memref<928x32xf32, #tpu.memory_space<vmem>>, %arg4: memref<144x128xf32, #tpu.memory_space<vmem>>, %arg5: memref<16x128xf32, #tpu.memory_space<vmem>>) attributes {dimension_semantics = [#tpu.dimension_semantics<arbitrary>], iteration_bounds = array<i64: 1>, scalar_prefetch = 0 : i64, scratch_operands = 0 : i64, tpu.core_type = #tpu.core_type<tc>, window_params = [{pipeline_mode = #tpu.pipeline_mode<synchronous>, transform_indices = @transform_0, window_bounds = array<i64: 16, 288>}, {pipeline_mode = #tpu.pipeline_mode<synchronous>, transform_indices = @transform_1, window_bounds = array<i64: 80, 64>}, {pipeline_mode = #tpu.pipeline_mode<synchronous>, transform_indices = @transform_2, window_bounds = array<i64: 928, 32>}, {pipeline_mode = #tpu.pipeline_mode<synchronous>, transform_indices = @transform_3, window_bounds = array<i64: 144, 128>}, {pipeline_mode = #tpu.pipeline_mode<synchronous>, transform_indices = @transform_4, window_bounds = array<i64: 16, 128>}]} {
    %c0 = arith.constant 0 : index
    %c0_0 = arith.constant 0 : index
    %0 = vector.load %arg1[%c0, %c0_0] : memref<16x288xf32, #tpu.memory_space<vmem>>, vector<16x288xf32>
    %c0_1 = arith.constant 0 : index
    %c0_2 = arith.constant 0 : index
    %1 = vector.load %arg3[%c0_1, %c0_2] : memref<928x32xf32, #tpu.memory_space<vmem>>, vector<288x32xf32>
    %cst = arith.constant dense<0.000000e+00> : vector<16x32xf32>
    %2 = tpu.matmul %0, %1, %cst {dimension_numbers = #tpu.dot_dimension_numbers<[1], [0], [0], [1], [0, 0, 1, 1], [], []>} : vector<16x288xf32>, vector<288x32xf32>, vector<16x32xf32> -> vector<16x32xf32>
    %c288 = arith.constant 288 : index
    %c0_3 = arith.constant 0 : index
    %3 = vector.load %arg3[%c288, %c0_3] : memref<928x32xf32, #tpu.memory_space<vmem>>, vector<1x32xf32>
    %4 = vector.broadcast %3 : vector<1x32xf32> to vector<16x32xf32>
    %5 = arith.addf %2, %4 : vector<16x32xf32>
    %cst_4 = arith.constant 0.000000e+00 : f32
    %6 = vector.broadcast %cst_4 : f32 to vector<16x32xf32>
    %7 = arith.maximumf %5, %6 : vector<16x32xf32>
    %c296 = arith.constant 296 : index
    %c0_5 = arith.constant 0 : index
    %8 = vector.load %arg3[%c296, %c0_5] : memref<928x32xf32, #tpu.memory_space<vmem>>, vector<2x32xf32>
    %cst_6 = arith.constant dense<0.000000e+00> : vector<16xf32>
    %9 = vector.multi_reduction <add>, %7, %cst_6 [1] : vector<16x32xf32> to vector<16xf32>
    %10 = vector.shape_cast %9 : vector<16xf32> to vector<16x1xf32>
    %cst_7 = arith.constant 3.200000e+01 : f32
    %11 = vector.broadcast %cst_7 : f32 to vector<16x1xf32>
    %12 = arith.divf %10, %11 : vector<16x1xf32>
    %13 = vector.broadcast %12 : vector<16x1xf32> to vector<16x32xf32>
    %14 = arith.subf %7, %13 : vector<16x32xf32>
    %15 = arith.mulf %14, %14 : vector<16x32xf32>
    %cst_8 = arith.constant dense<0.000000e+00> : vector<16xf32>
    %16 = vector.multi_reduction <add>, %15, %cst_8 [1] : vector<16x32xf32> to vector<16xf32>
    %17 = vector.shape_cast %16 : vector<16xf32> to vector<16x1xf32>
    %cst_9 = arith.constant 3.200000e+01 : f32
    %18 = vector.broadcast %cst_9 : f32 to vector<16x1xf32>
    %19 = arith.divf %17, %18 : vector<16x1xf32>
    %20 = vector.broadcast %12 : vector<16x1xf32> to vector<16x32xf32>
    %21 = arith.subf %7, %20 : vector<16x32xf32>
    %cst_10 = arith.constant 9.99999997E-7 : f32
    %22 = vector.broadcast %cst_10 : f32 to vector<16x1xf32>
    %23 = arith.addf %19, %22 : vector<16x1xf32>
    %24 = math.rsqrt %23 : vector<16x1xf32>
    %25 = vector.broadcast %24 : vector<16x1xf32> to vector<16x32xf32>
    %26 = arith.mulf %21, %25 : vector<16x32xf32>
    %27 = vector.extract_strided_slice %8 {offsets = [0, 0], sizes = [1, 32], strides = [1, 1]} : vector<2x32xf32> to vector<1x32xf32>
    %28 = vector.broadcast %27 : vector<1x32xf32> to vector<16x32xf32>
    %29 = arith.mulf %26, %28 : vector<16x32xf32>
    %30 = vector.extract_strided_slice %8 {offsets = [1, 0], sizes = [1, 32], strides = [1, 1]} : vector<2x32xf32> to vector<1x32xf32>
    %31 = vector.broadcast %30 : vector<1x32xf32> to vector<16x32xf32>
    %32 = arith.addf %29, %31 : vector<16x32xf32>
    %c312 = arith.constant 312 : index
    %c0_11 = arith.constant 0 : index
    %33 = vector.load %arg3[%c312, %c0_11] : memref<928x32xf32, #tpu.memory_space<vmem>>, vector<16x32xf32>
    %34 = arith.addf %32, %33 : vector<16x32xf32>
    %c304 = arith.constant 304 : index
    %c0_12 = arith.constant 0 : index
    %35 = vector.load %arg3[%c304, %c0_12] : memref<928x32xf32, #tpu.memory_space<vmem>>, vector<2x32xf32>
    %cst_13 = arith.constant dense<0.000000e+00> : vector<16xf32>
    %36 = vector.multi_reduction <add>, %34, %cst_13 [1] : vector<16x32xf32> to vector<16xf32>
    %37 = vector.shape_cast %36 : vector<16xf32> to vector<16x1xf32>
    %cst_14 = arith.constant 3.200000e+01 : f32
    %38 = vector.broadcast %cst_14 : f32 to vector<16x1xf32>
    %39 = arith.divf %37, %38 : vector<16x1xf32>
    %40 = vector.broadcast %39 : vector<16x1xf32> to vector<16x32xf32>
    %41 = arith.subf %34, %40 : vector<16x32xf32>
    %42 = arith.mulf %41, %41 : vector<16x32xf32>
    %cst_15 = arith.constant dense<0.000000e+00> : vector<16xf32>
    %43 = vector.multi_reduction <add>, %42, %cst_15 [1] : vector<16x32xf32> to vector<16xf32>
    %44 = vector.shape_cast %43 : vector<16xf32> to vector<16x1xf32>
    %cst_16 = arith.constant 3.200000e+01 : f32
    %45 = vector.broadcast %cst_16 : f32 to vector<16x1xf32>
    %46 = arith.divf %44, %45 : vector<16x1xf32>
    %47 = vector.broadcast %39 : vector<16x1xf32> to vector<16x32xf32>
    %48 = arith.subf %34, %47 : vector<16x32xf32>
    %cst_17 = arith.constant 9.99999997E-7 : f32
    %49 = vector.broadcast %cst_17 : f32 to vector<16x1xf32>
    %50 = arith.addf %46, %49 : vector<16x1xf32>
    %51 = math.rsqrt %50 : vector<16x1xf32>
    %52 = vector.broadcast %51 : vector<16x1xf32> to vector<16x32xf32>
    %53 = arith.mulf %48, %52 : vector<16x32xf32>
    %54 = vector.extract_strided_slice %35 {offsets = [0, 0], sizes = [1, 32], strides = [1, 1]} : vector<2x32xf32> to vector<1x32xf32>
    %55 = vector.broadcast %54 : vector<1x32xf32> to vector<16x32xf32>
    %56 = arith.mulf %53, %55 : vector<16x32xf32>
    %57 = vector.extract_strided_slice %35 {offsets = [1, 0], sizes = [1, 32], strides = [1, 1]} : vector<2x32xf32> to vector<1x32xf32>
    %58 = vector.broadcast %57 : vector<1x32xf32> to vector<16x32xf32>
    %59 = arith.addf %56, %58 : vector<16x32xf32>
    %c328 = arith.constant 328 : index
    %c0_18 = arith.constant 0 : index
    %60 = vector.load %arg3[%c328, %c0_18] : memref<928x32xf32, #tpu.memory_space<vmem>>, vector<64x32xf32>
    %c0_19 = arith.constant 0 : index
    %c0_20 = arith.constant 0 : index
    %61 = vector.load %arg2[%c0_19, %c0_20] : memref<80x64xf32, #tpu.memory_space<vmem>>, vector<64x16xf32>
    %c392 = arith.constant 392 : index
    %c0_21 = arith.constant 0 : index
    %62 = vector.load %arg3[%c392, %c0_21] : memref<928x32xf32, #tpu.memory_space<vmem>>, vector<32x32xf32>
    %cst_22 = arith.constant dense<0.000000e+00> : vector<16x32xf32>
    %63 = tpu.matmul %59, %62, %cst_22 {dimension_numbers = #tpu.dot_dimension_numbers<[1], [0], [0], [1], [0, 0, 1, 1], [], []>} : vector<16x32xf32>, vector<32x32xf32>, vector<16x32xf32> -> vector<16x32xf32>
    %c424 = arith.constant 424 : index
    %c0_23 = arith.constant 0 : index
    %64 = vector.load %arg3[%c424, %c0_23] : memref<928x32xf32, #tpu.memory_space<vmem>>, vector<32x32xf32>
    %cst_24 = arith.constant dense<0.000000e+00> : vector<16x32xf32>
    %65 = tpu.matmul %59, %64, %cst_24 {dimension_numbers = #tpu.dot_dimension_numbers<[1], [0], [0], [1], [0, 0, 1, 1], [], []>} : vector<16x32xf32>, vector<32x32xf32>, vector<16x32xf32> -> vector<16x32xf32>
    %c456 = arith.constant 456 : index
    %c0_25 = arith.constant 0 : index
    %66 = vector.load %arg3[%c456, %c0_25] : memref<928x32xf32, #tpu.memory_space<vmem>>, vector<32x32xf32>
    %cst_26 = arith.constant dense<0.000000e+00> : vector<16x32xf32>
    %67 = tpu.matmul %59, %66, %cst_26 {dimension_numbers = #tpu.dot_dimension_numbers<[1], [0], [0], [1], [0, 0, 1, 1], [], []>} : vector<16x32xf32>, vector<32x32xf32>, vector<16x32xf32> -> vector<16x32xf32>
    %68 = tpu.concatenate %63, %63, %63, %63 in 0 : vector<16x32xf32>, vector<16x32xf32>, vector<16x32xf32>, vector<16x32xf32> -> vector<64x32xf32>
    %69 = arith.mulf %68, %60 : vector<64x32xf32>
    %cst_27 = arith.constant dense<0.000000e+00> : vector<64x16xf32>
    %70 = tpu.matmul %69, %65, %cst_27 {dimension_numbers = #tpu.dot_dimension_numbers<[1], [1], [0], [0], [0, 0, 1, 0], [], []>} : vector<64x32xf32>, vector<16x32xf32>, vector<64x16xf32> -> vector<64x16xf32>
    %71 = arith.addf %70, %61 : vector<64x16xf32>
    %cst_28 = arith.constant dense<0xFF800000> : vector<64xf32>
    %72 = vector.multi_reduction <maximumf>, %71, %cst_28 [1] : vector<64x16xf32> to vector<64xf32>
    %73 = vector.shape_cast %72 : vector<64xf32> to vector<64x1xf32>
    %74 = vector.broadcast %73 : vector<64x1xf32> to vector<64x16xf32>
    %75 = arith.subf %71, %74 : vector<64x16xf32>
    %76 = math.exp %75 : vector<64x16xf32>
    %cst_29 = arith.constant dense<0.000000e+00> : vector<64xf32>
    %77 = vector.multi_reduction <add>, %76, %cst_29 [1] : vector<64x16xf32> to vector<64xf32>
    %78 = vector.shape_cast %77 : vector<64xf32> to vector<64x1xf32>
    %79 = tpu.reciprocal %78 {approx = true} : vector<64x1xf32> -> vector<64x1xf32>
    %80 = vector.broadcast %79 : vector<64x1xf32> to vector<64x16xf32>
    %81 = arith.mulf %76, %80 : vector<64x16xf32>
    %cst_30 = arith.constant dense<0.000000e+00> : vector<64x32xf32>
    %82 = tpu.matmul %81, %67, %cst_30 {dimension_numbers = #tpu.dot_dimension_numbers<[1], [0], [0], [1], [0, 0, 1, 1], [], []>} : vector<64x16xf32>, vector<16x32xf32>, vector<64x32xf32> -> vector<64x32xf32>
    %83 = arith.mulf %82, %60 : vector<64x32xf32>
    %c488 = arith.constant 488 : index
    %c0_31 = arith.constant 0 : index
    %84 = vector.load %arg3[%c488, %c0_31] : memref<928x32xf32, #tpu.memory_space<vmem>>, vector<32x32xf32>
    %cst_32 = arith.constant dense<0.000000e+00> : vector<64x32xf32>
    %85 = tpu.matmul %83, %84, %cst_32 {dimension_numbers = #tpu.dot_dimension_numbers<[1], [0], [0], [1], [0, 0, 1, 1], [], []>} : vector<64x32xf32>, vector<32x32xf32>, vector<64x32xf32> -> vector<64x32xf32>
    %86 = vector.extract_strided_slice %85 {offsets = [0, 0], sizes = [16, 32], strides = [1, 1]} : vector<64x32xf32> to vector<16x32xf32>
    %87 = vector.extract_strided_slice %85 {offsets = [16, 0], sizes = [16, 32], strides = [1, 1]} : vector<64x32xf32> to vector<16x32xf32>
    %88 = arith.addf %86, %87 : vector<16x32xf32>
    %89 = vector.extract_strided_slice %85 {offsets = [32, 0], sizes = [16, 32], strides = [1, 1]} : vector<64x32xf32> to vector<16x32xf32>
    %90 = arith.addf %88, %89 : vector<16x32xf32>
    %91 = vector.extract_strided_slice %85 {offsets = [48, 0], sizes = [16, 32], strides = [1, 1]} : vector<64x32xf32> to vector<16x32xf32>
    %92 = arith.addf %90, %91 : vector<16x32xf32>
    %93 = arith.addf %92, %59 : vector<16x32xf32>
    %c520 = arith.constant 520 : index
    %c0_33 = arith.constant 0 : index
    %94 = vector.load %arg3[%c520, %c0_33] : memref<928x32xf32, #tpu.memory_space<vmem>>, vector<2x32xf32>
    %cst_34 = arith.constant dense<0.000000e+00> : vector<16xf32>
    %95 = vector.multi_reduction <add>, %93, %cst_34 [1] : vector<16x32xf32> to vector<16xf32>
    %96 = vector.shape_cast %95 : vector<16xf32> to vector<16x1xf32>
    %cst_35 = arith.constant 3.200000e+01 : f32
    %97 = vector.broadcast %cst_35 : f32 to vector<16x1xf32>
    %98 = arith.divf %96, %97 : vector<16x1xf32>
    %99 = vector.broadcast %98 : vector<16x1xf32> to vector<16x32xf32>
    %100 = arith.subf %93, %99 : vector<16x32xf32>
    %101 = arith.mulf %100, %100 : vector<16x32xf32>
    %cst_36 = arith.constant dense<0.000000e+00> : vector<16xf32>
    %102 = vector.multi_reduction <add>, %101, %cst_36 [1] : vector<16x32xf32> to vector<16xf32>
    %103 = vector.shape_cast %102 : vector<16xf32> to vector<16x1xf32>
    %cst_37 = arith.constant 3.200000e+01 : f32
    %104 = vector.broadcast %cst_37 : f32 to vector<16x1xf32>
    %105 = arith.divf %103, %104 : vector<16x1xf32>
    %106 = vector.broadcast %98 : vector<16x1xf32> to vector<16x32xf32>
    %107 = arith.subf %93, %106 : vector<16x32xf32>
    %cst_38 = arith.constant 9.99999997E-7 : f32
    %108 = vector.broadcast %cst_38 : f32 to vector<16x1xf32>
    %109 = arith.addf %105, %108 : vector<16x1xf32>
    %110 = math.rsqrt %109 : vector<16x1xf32>
    %111 = vector.broadcast %110 : vector<16x1xf32> to vector<16x32xf32>
    %112 = arith.mulf %107, %111 : vector<16x32xf32>
    %113 = vector.extract_strided_slice %94 {offsets = [0, 0], sizes = [1, 32], strides = [1, 1]} : vector<2x32xf32> to vector<1x32xf32>
    %114 = vector.broadcast %113 : vector<1x32xf32> to vector<16x32xf32>
    %115 = arith.mulf %112, %114 : vector<16x32xf32>
    %116 = vector.extract_strided_slice %94 {offsets = [1, 0], sizes = [1, 32], strides = [1, 1]} : vector<2x32xf32> to vector<1x32xf32>
    %117 = vector.broadcast %116 : vector<1x32xf32> to vector<16x32xf32>
    %118 = arith.addf %115, %117 : vector<16x32xf32>
    %c0_39 = arith.constant 0 : index
    %c0_40 = arith.constant 0 : index
    %119 = vector.load %arg4[%c0_39, %c0_40] : memref<144x128xf32, #tpu.memory_space<vmem>>, vector<32x64xf32>
    %cst_41 = arith.constant dense<0.000000e+00> : vector<16x64xf32>
    %120 = tpu.matmul %118, %119, %cst_41 {dimension_numbers = #tpu.dot_dimension_numbers<[1], [0], [0], [1], [0, 0, 1, 1], [], []>} : vector<16x32xf32>, vector<32x64xf32>, vector<16x64xf32> -> vector<16x64xf32>
    %c32 = arith.constant 32 : index
    %c0_42 = arith.constant 0 : index
    %121 = vector.load %arg4[%c32, %c0_42] : memref<144x128xf32, #tpu.memory_space<vmem>>, vector<1x64xf32>
    %122 = vector.broadcast %121 : vector<1x64xf32> to vector<16x64xf32>
    %123 = arith.addf %120, %122 : vector<16x64xf32>
    %cst_43 = arith.constant 0.000000e+00 : f32
    %124 = vector.broadcast %cst_43 : f32 to vector<16x64xf32>
    %125 = arith.maximumf %123, %124 : vector<16x64xf32>
    %c528 = arith.constant 528 : index
    %c0_44 = arith.constant 0 : index
    %126 = vector.load %arg3[%c528, %c0_44] : memref<928x32xf32, #tpu.memory_space<vmem>>, vector<64x32xf32>
    %cst_45 = arith.constant dense<0.000000e+00> : vector<16x32xf32>
    %127 = tpu.matmul %125, %126, %cst_45 {dimension_numbers = #tpu.dot_dimension_numbers<[1], [0], [0], [1], [0, 0, 1, 1], [], []>} : vector<16x64xf32>, vector<64x32xf32>, vector<16x32xf32> -> vector<16x32xf32>
    %c592 = arith.constant 592 : index
    %c0_46 = arith.constant 0 : index
    %128 = vector.load %arg3[%c592, %c0_46] : memref<928x32xf32, #tpu.memory_space<vmem>>, vector<1x32xf32>
    %129 = vector.broadcast %128 : vector<1x32xf32> to vector<16x32xf32>
    %130 = arith.addf %127, %129 : vector<16x32xf32>
    %131 = arith.addf %130, %118 : vector<16x32xf32>
    %c600 = arith.constant 600 : index
    %c0_47 = arith.constant 0 : index
    %132 = vector.load %arg3[%c600, %c0_47] : memref<928x32xf32, #tpu.memory_space<vmem>>, vector<2x32xf32>
    %cst_48 = arith.constant dense<0.000000e+00> : vector<16xf32>
    %133 = vector.multi_reduction <add>, %131, %cst_48 [1] : vector<16x32xf32> to vector<16xf32>
    %134 = vector.shape_cast %133 : vector<16xf32> to vector<16x1xf32>
    %cst_49 = arith.constant 3.200000e+01 : f32
    %135 = vector.broadcast %cst_49 : f32 to vector<16x1xf32>
    %136 = arith.divf %134, %135 : vector<16x1xf32>
    %137 = vector.broadcast %136 : vector<16x1xf32> to vector<16x32xf32>
    %138 = arith.subf %131, %137 : vector<16x32xf32>
    %139 = arith.mulf %138, %138 : vector<16x32xf32>
    %cst_50 = arith.constant dense<0.000000e+00> : vector<16xf32>
    %140 = vector.multi_reduction <add>, %139, %cst_50 [1] : vector<16x32xf32> to vector<16xf32>
    %141 = vector.shape_cast %140 : vector<16xf32> to vector<16x1xf32>
    %cst_51 = arith.constant 3.200000e+01 : f32
    %142 = vector.broadcast %cst_51 : f32 to vector<16x1xf32>
    %143 = arith.divf %141, %142 : vector<16x1xf32>
    %144 = vector.broadcast %136 : vector<16x1xf32> to vector<16x32xf32>
    %145 = arith.subf %131, %144 : vector<16x32xf32>
    %cst_52 = arith.constant 9.99999997E-7 : f32
    %146 = vector.broadcast %cst_52 : f32 to vector<16x1xf32>
    %147 = arith.addf %143, %146 : vector<16x1xf32>
    %148 = math.rsqrt %147 : vector<16x1xf32>
    %149 = vector.broadcast %148 : vector<16x1xf32> to vector<16x32xf32>
    %150 = arith.mulf %145, %149 : vector<16x32xf32>
    %151 = vector.extract_strided_slice %132 {offsets = [0, 0], sizes = [1, 32], strides = [1, 1]} : vector<2x32xf32> to vector<1x32xf32>
    %152 = vector.broadcast %151 : vector<1x32xf32> to vector<16x32xf32>
    %153 = arith.mulf %150, %152 : vector<16x32xf32>
    %154 = vector.extract_strided_slice %132 {offsets = [1, 0], sizes = [1, 32], strides = [1, 1]} : vector<2x32xf32> to vector<1x32xf32>
    %155 = vector.broadcast %154 : vector<1x32xf32> to vector<16x32xf32>
    %156 = arith.addf %153, %155 : vector<16x32xf32>
    %c608 = arith.constant 608 : index
    %c0_53 = arith.constant 0 : index
    %157 = vector.load %arg3[%c608, %c0_53] : memref<928x32xf32, #tpu.memory_space<vmem>>, vector<32x32xf32>
    %cst_54 = arith.constant dense<0.000000e+00> : vector<16x32xf32>
    %158 = tpu.matmul %156, %157, %cst_54 {dimension_numbers = #tpu.dot_dimension_numbers<[1], [0], [0], [1], [0, 0, 1, 1], [], []>} : vector<16x32xf32>, vector<32x32xf32>, vector<16x32xf32> -> vector<16x32xf32>
    %c640 = arith.constant 640 : index
    %c0_55 = arith.constant 0 : index
    %159 = vector.load %arg3[%c640, %c0_55] : memref<928x32xf32, #tpu.memory_space<vmem>>, vector<32x32xf32>
    %cst_56 = arith.constant dense<0.000000e+00> : vector<16x32xf32>
    %160 = tpu.matmul %156, %159, %cst_56 {dimension_numbers = #tpu.dot_dimension_numbers<[1], [0], [0], [1], [0, 0, 1, 1], [], []>} : vector<16x32xf32>, vector<32x32xf32>, vector<16x32xf32> -> vector<16x32xf32>
    %c672 = arith.constant 672 : index
    %c0_57 = arith.constant 0 : index
    %161 = vector.load %arg3[%c672, %c0_57] : memref<928x32xf32, #tpu.memory_space<vmem>>, vector<32x32xf32>
    %cst_58 = arith.constant dense<0.000000e+00> : vector<16x32xf32>
    %162 = tpu.matmul %156, %161, %cst_58 {dimension_numbers = #tpu.dot_dimension_numbers<[1], [0], [0], [1], [0, 0, 1, 1], [], []>} : vector<16x32xf32>, vector<32x32xf32>, vector<16x32xf32> -> vector<16x32xf32>
    %163 = tpu.concatenate %158, %158, %158, %158 in 0 : vector<16x32xf32>, vector<16x32xf32>, vector<16x32xf32>, vector<16x32xf32> -> vector<64x32xf32>
    %164 = arith.mulf %163, %60 : vector<64x32xf32>
    %cst_59 = arith.constant dense<0.000000e+00> : vector<64x16xf32>
    %165 = tpu.matmul %164, %160, %cst_59 {dimension_numbers = #tpu.dot_dimension_numbers<[1], [1], [0], [0], [0, 0, 1, 0], [], []>} : vector<64x32xf32>, vector<16x32xf32>, vector<64x16xf32> -> vector<64x16xf32>
    %166 = arith.addf %165, %61 : vector<64x16xf32>
    %cst_60 = arith.constant dense<0xFF800000> : vector<64xf32>
    %167 = vector.multi_reduction <maximumf>, %166, %cst_60 [1] : vector<64x16xf32> to vector<64xf32>
    %168 = vector.shape_cast %167 : vector<64xf32> to vector<64x1xf32>
    %169 = vector.broadcast %168 : vector<64x1xf32> to vector<64x16xf32>
    %170 = arith.subf %166, %169 : vector<64x16xf32>
    %171 = math.exp %170 : vector<64x16xf32>
    %cst_61 = arith.constant dense<0.000000e+00> : vector<64xf32>
    %172 = vector.multi_reduction <add>, %171, %cst_61 [1] : vector<64x16xf32> to vector<64xf32>
    %173 = vector.shape_cast %172 : vector<64xf32> to vector<64x1xf32>
    %174 = tpu.reciprocal %173 {approx = true} : vector<64x1xf32> -> vector<64x1xf32>
    %175 = vector.broadcast %174 : vector<64x1xf32> to vector<64x16xf32>
    %176 = arith.mulf %171, %175 : vector<64x16xf32>
    %cst_62 = arith.constant dense<0.000000e+00> : vector<64x32xf32>
    %177 = tpu.matmul %176, %162, %cst_62 {dimension_numbers = #tpu.dot_dimension_numbers<[1], [0], [0], [1], [0, 0, 1, 1], [], []>} : vector<64x16xf32>, vector<16x32xf32>, vector<64x32xf32> -> vector<64x32xf32>
    %178 = arith.mulf %177, %60 : vector<64x32xf32>
    %c704 = arith.constant 704 : index
    %c0_63 = arith.constant 0 : index
    %179 = vector.load %arg3[%c704, %c0_63] : memref<928x32xf32, #tpu.memory_space<vmem>>, vector<32x32xf32>
    %cst_64 = arith.constant dense<0.000000e+00> : vector<64x32xf32>
    %180 = tpu.matmul %178, %179, %cst_64 {dimension_numbers = #tpu.dot_dimension_numbers<[1], [0], [0], [1], [0, 0, 1, 1], [], []>} : vector<64x32xf32>, vector<32x32xf32>, vector<64x32xf32> -> vector<64x32xf32>
    %181 = vector.extract_strided_slice %180 {offsets = [0, 0], sizes = [16, 32], strides = [1, 1]} : vector<64x32xf32> to vector<16x32xf32>
    %182 = vector.extract_strided_slice %180 {offsets = [16, 0], sizes = [16, 32], strides = [1, 1]} : vector<64x32xf32> to vector<16x32xf32>
    %183 = arith.addf %181, %182 : vector<16x32xf32>
    %184 = vector.extract_strided_slice %180 {offsets = [32, 0], sizes = [16, 32], strides = [1, 1]} : vector<64x32xf32> to vector<16x32xf32>
    %185 = arith.addf %183, %184 : vector<16x32xf32>
    %186 = vector.extract_strided_slice %180 {offsets = [48, 0], sizes = [16, 32], strides = [1, 1]} : vector<64x32xf32> to vector<16x32xf32>
    %187 = arith.addf %185, %186 : vector<16x32xf32>
    %188 = arith.addf %187, %156 : vector<16x32xf32>
    %c736 = arith.constant 736 : index
    %c0_65 = arith.constant 0 : index
    %189 = vector.load %arg3[%c736, %c0_65] : memref<928x32xf32, #tpu.memory_space<vmem>>, vector<2x32xf32>
    %cst_66 = arith.constant dense<0.000000e+00> : vector<16xf32>
    %190 = vector.multi_reduction <add>, %188, %cst_66 [1] : vector<16x32xf32> to vector<16xf32>
    %191 = vector.shape_cast %190 : vector<16xf32> to vector<16x1xf32>
    %cst_67 = arith.constant 3.200000e+01 : f32
    %192 = vector.broadcast %cst_67 : f32 to vector<16x1xf32>
    %193 = arith.divf %191, %192 : vector<16x1xf32>
    %194 = vector.broadcast %193 : vector<16x1xf32> to vector<16x32xf32>
    %195 = arith.subf %188, %194 : vector<16x32xf32>
    %196 = arith.mulf %195, %195 : vector<16x32xf32>
    %cst_68 = arith.constant dense<0.000000e+00> : vector<16xf32>
    %197 = vector.multi_reduction <add>, %196, %cst_68 [1] : vector<16x32xf32> to vector<16xf32>
    %198 = vector.shape_cast %197 : vector<16xf32> to vector<16x1xf32>
    %cst_69 = arith.constant 3.200000e+01 : f32
    %199 = vector.broadcast %cst_69 : f32 to vector<16x1xf32>
    %200 = arith.divf %198, %199 : vector<16x1xf32>
    %201 = vector.broadcast %193 : vector<16x1xf32> to vector<16x32xf32>
    %202 = arith.subf %188, %201 : vector<16x32xf32>
    %cst_70 = arith.constant 9.99999997E-7 : f32
    %203 = vector.broadcast %cst_70 : f32 to vector<16x1xf32>
    %204 = arith.addf %200, %203 : vector<16x1xf32>
    %205 = math.rsqrt %204 : vector<16x1xf32>
    %206 = vector.broadcast %205 : vector<16x1xf32> to vector<16x32xf32>
    %207 = arith.mulf %202, %206 : vector<16x32xf32>
    %208 = vector.extract_strided_slice %189 {offsets = [0, 0], sizes = [1, 32], strides = [1, 1]} : vector<2x32xf32> to vector<1x32xf32>
    %209 = vector.broadcast %208 : vector<1x32xf32> to vector<16x32xf32>
    %210 = arith.mulf %207, %209 : vector<16x32xf32>
    %211 = vector.extract_strided_slice %189 {offsets = [1, 0], sizes = [1, 32], strides = [1, 1]} : vector<2x32xf32> to vector<1x32xf32>
    %212 = vector.broadcast %211 : vector<1x32xf32> to vector<16x32xf32>
    %213 = arith.addf %210, %212 : vector<16x32xf32>
    %c40 = arith.constant 40 : index
    %c0_71 = arith.constant 0 : index
    %214 = vector.load %arg4[%c40, %c0_71] : memref<144x128xf32, #tpu.memory_space<vmem>>, vector<32x64xf32>
    %cst_72 = arith.constant dense<0.000000e+00> : vector<16x64xf32>
    %215 = tpu.matmul %213, %214, %cst_72 {dimension_numbers = #tpu.dot_dimension_numbers<[1], [0], [0], [1], [0, 0, 1, 1], [], []>} : vector<16x32xf32>, vector<32x64xf32>, vector<16x64xf32> -> vector<16x64xf32>
    %c72 = arith.constant 72 : index
    %c0_73 = arith.constant 0 : index
    %216 = vector.load %arg4[%c72, %c0_73] : memref<144x128xf32, #tpu.memory_space<vmem>>, vector<1x64xf32>
    %217 = vector.broadcast %216 : vector<1x64xf32> to vector<16x64xf32>
    %218 = arith.addf %215, %217 : vector<16x64xf32>
    %cst_74 = arith.constant 0.000000e+00 : f32
    %219 = vector.broadcast %cst_74 : f32 to vector<16x64xf32>
    %220 = arith.maximumf %218, %219 : vector<16x64xf32>
    %c744 = arith.constant 744 : index
    %c0_75 = arith.constant 0 : index
    %221 = vector.load %arg3[%c744, %c0_75] : memref<928x32xf32, #tpu.memory_space<vmem>>, vector<64x32xf32>
    %cst_76 = arith.constant dense<0.000000e+00> : vector<16x32xf32>
    %222 = tpu.matmul %220, %221, %cst_76 {dimension_numbers = #tpu.dot_dimension_numbers<[1], [0], [0], [1], [0, 0, 1, 1], [], []>} : vector<16x64xf32>, vector<64x32xf32>, vector<16x32xf32> -> vector<16x32xf32>
    %c808 = arith.constant 808 : index
    %c0_77 = arith.constant 0 : index
    %223 = vector.load %arg3[%c808, %c0_77] : memref<928x32xf32, #tpu.memory_space<vmem>>, vector<1x32xf32>
    %224 = vector.broadcast %223 : vector<1x32xf32> to vector<16x32xf32>
    %225 = arith.addf %222, %224 : vector<16x32xf32>
    %226 = arith.addf %225, %213 : vector<16x32xf32>
    %c816 = arith.constant 816 : index
    %c0_78 = arith.constant 0 : index
    %227 = vector.load %arg3[%c816, %c0_78] : memref<928x32xf32, #tpu.memory_space<vmem>>, vector<2x32xf32>
    %cst_79 = arith.constant dense<0.000000e+00> : vector<16xf32>
    %228 = vector.multi_reduction <add>, %226, %cst_79 [1] : vector<16x32xf32> to vector<16xf32>
    %229 = vector.shape_cast %228 : vector<16xf32> to vector<16x1xf32>
    %cst_80 = arith.constant 3.200000e+01 : f32
    %230 = vector.broadcast %cst_80 : f32 to vector<16x1xf32>
    %231 = arith.divf %229, %230 : vector<16x1xf32>
    %232 = vector.broadcast %231 : vector<16x1xf32> to vector<16x32xf32>
    %233 = arith.subf %226, %232 : vector<16x32xf32>
    %234 = arith.mulf %233, %233 : vector<16x32xf32>
    %cst_81 = arith.constant dense<0.000000e+00> : vector<16xf32>
    %235 = vector.multi_reduction <add>, %234, %cst_81 [1] : vector<16x32xf32> to vector<16xf32>
    %236 = vector.shape_cast %235 : vector<16xf32> to vector<16x1xf32>
    %cst_82 = arith.constant 3.200000e+01 : f32
    %237 = vector.broadcast %cst_82 : f32 to vector<16x1xf32>
    %238 = arith.divf %236, %237 : vector<16x1xf32>
    %239 = vector.broadcast %231 : vector<16x1xf32> to vector<16x32xf32>
    %240 = arith.subf %226, %239 : vector<16x32xf32>
    %cst_83 = arith.constant 9.99999997E-7 : f32
    %241 = vector.broadcast %cst_83 : f32 to vector<16x1xf32>
    %242 = arith.addf %238, %241 : vector<16x1xf32>
    %243 = math.rsqrt %242 : vector<16x1xf32>
    %244 = vector.broadcast %243 : vector<16x1xf32> to vector<16x32xf32>
    %245 = arith.mulf %240, %244 : vector<16x32xf32>
    %246 = vector.extract_strided_slice %227 {offsets = [0, 0], sizes = [1, 32], strides = [1, 1]} : vector<2x32xf32> to vector<1x32xf32>
    %247 = vector.broadcast %246 : vector<1x32xf32> to vector<16x32xf32>
    %248 = arith.mulf %245, %247 : vector<16x32xf32>
    %249 = vector.extract_strided_slice %227 {offsets = [1, 0], sizes = [1, 32], strides = [1, 1]} : vector<2x32xf32> to vector<1x32xf32>
    %250 = vector.broadcast %249 : vector<1x32xf32> to vector<16x32xf32>
    %251 = arith.addf %248, %250 : vector<16x32xf32>
    %c64 = arith.constant 64 : index
    %c0_84 = arith.constant 0 : index
    %252 = vector.load %arg2[%c64, %c0_84] : memref<80x64xf32, #tpu.memory_space<vmem>>, vector<12x48xf32>
    %c824 = arith.constant 824 : index
    %c0_85 = arith.constant 0 : index
    %253 = vector.load %arg3[%c824, %c0_85] : memref<928x32xf32, #tpu.memory_space<vmem>>, vector<48x32xf32>
    %cst_86 = arith.constant dense<0.000000e+00> : vector<12x32xf32>
    %254 = tpu.matmul %252, %253, %cst_86 {dimension_numbers = #tpu.dot_dimension_numbers<[1], [0], [0], [1], [0, 0, 1, 1], [], []>} : vector<12x48xf32>, vector<48x32xf32>, vector<12x32xf32> -> vector<12x32xf32>
    %c872 = arith.constant 872 : index
    %c0_87 = arith.constant 0 : index
    %255 = vector.load %arg3[%c872, %c0_87] : memref<928x32xf32, #tpu.memory_space<vmem>>, vector<1x32xf32>
    %256 = vector.broadcast %255 : vector<1x32xf32> to vector<12x32xf32>
    %257 = arith.addf %254, %256 : vector<12x32xf32>
    %cst_88 = arith.constant 0.000000e+00 : f32
    %258 = vector.broadcast %cst_88 : f32 to vector<12x32xf32>
    %259 = arith.cmpf oge, %257, %258 : vector<12x32xf32>
    %cst_89 = arith.constant 0.00999999977 : f32
    %260 = vector.broadcast %cst_89 : f32 to vector<12x32xf32>
    %261 = arith.mulf %260, %257 : vector<12x32xf32>
    %262 = arith.select %259, %257, %261 : vector<12x32xi1>, vector<12x32xf32>
    %c880 = arith.constant 880 : index
    %c0_90 = arith.constant 0 : index
    %263 = vector.load %arg3[%c880, %c0_90] : memref<928x32xf32, #tpu.memory_space<vmem>>, vector<2x32xf32>
    %cst_91 = arith.constant dense<0.000000e+00> : vector<12xf32>
    %264 = vector.multi_reduction <add>, %262, %cst_91 [1] : vector<12x32xf32> to vector<12xf32>
    %265 = vector.shape_cast %264 : vector<12xf32> to vector<12x1xf32>
    %cst_92 = arith.constant 3.200000e+01 : f32
    %266 = vector.broadcast %cst_92 : f32 to vector<12x1xf32>
    %267 = arith.divf %265, %266 : vector<12x1xf32>
    %268 = vector.broadcast %267 : vector<12x1xf32> to vector<12x32xf32>
    %269 = arith.subf %262, %268 : vector<12x32xf32>
    %270 = arith.mulf %269, %269 : vector<12x32xf32>
    %cst_93 = arith.constant dense<0.000000e+00> : vector<12xf32>
    %271 = vector.multi_reduction <add>, %270, %cst_93 [1] : vector<12x32xf32> to vector<12xf32>
    %272 = vector.shape_cast %271 : vector<12xf32> to vector<12x1xf32>
    %cst_94 = arith.constant 3.200000e+01 : f32
    %273 = vector.broadcast %cst_94 : f32 to vector<12x1xf32>
    %274 = arith.divf %272, %273 : vector<12x1xf32>
    %275 = vector.broadcast %267 : vector<12x1xf32> to vector<12x32xf32>
    %276 = arith.subf %262, %275 : vector<12x32xf32>
    %cst_95 = arith.constant 9.99999997E-7 : f32
    %277 = vector.broadcast %cst_95 : f32 to vector<12x1xf32>
    %278 = arith.addf %274, %277 : vector<12x1xf32>
    %279 = math.rsqrt %278 : vector<12x1xf32>
    %280 = vector.broadcast %279 : vector<12x1xf32> to vector<12x32xf32>
    %281 = arith.mulf %276, %280 : vector<12x32xf32>
    %282 = vector.extract_strided_slice %263 {offsets = [0, 0], sizes = [1, 32], strides = [1, 1]} : vector<2x32xf32> to vector<1x32xf32>
    %283 = vector.broadcast %282 : vector<1x32xf32> to vector<12x32xf32>
    %284 = arith.mulf %281, %283 : vector<12x32xf32>
    %285 = vector.extract_strided_slice %263 {offsets = [1, 0], sizes = [1, 32], strides = [1, 1]} : vector<2x32xf32> to vector<1x32xf32>
    %286 = vector.broadcast %285 : vector<1x32xf32> to vector<12x32xf32>
    %287 = arith.addf %284, %286 : vector<12x32xf32>
    %c888 = arith.constant 888 : index
    %c0_96 = arith.constant 0 : index
    %288 = vector.load %arg3[%c888, %c0_96] : memref<928x32xf32, #tpu.memory_space<vmem>>, vector<16x12xf32>
    %c904 = arith.constant 904 : index
    %c0_97 = arith.constant 0 : index
    %289 = vector.load %arg3[%c904, %c0_97] : memref<928x32xf32, #tpu.memory_space<vmem>>, vector<16x1xf32>
    %cst_98 = arith.constant dense<0.000000e+00> : vector<16x32xf32>
    %290 = tpu.matmul %288, %287, %cst_98 {dimension_numbers = #tpu.dot_dimension_numbers<[1], [0], [0], [1], [0, 0, 1, 1], [], []>} : vector<16x12xf32>, vector<12x32xf32>, vector<16x32xf32> -> vector<16x32xf32>
    %291 = vector.broadcast %289 : vector<16x1xf32> to vector<16x32xf32>
    %292 = arith.addf %290, %291 : vector<16x32xf32>
    %c920 = arith.constant 920 : index
    %c0_99 = arith.constant 0 : index
    %293 = vector.load %arg3[%c920, %c0_99] : memref<928x32xf32, #tpu.memory_space<vmem>>, vector<2x32xf32>
    %cst_100 = arith.constant dense<0.000000e+00> : vector<16xf32>
    %294 = vector.multi_reduction <add>, %292, %cst_100 [1] : vector<16x32xf32> to vector<16xf32>
    %295 = vector.shape_cast %294 : vector<16xf32> to vector<16x1xf32>
    %cst_101 = arith.constant 3.200000e+01 : f32
    %296 = vector.broadcast %cst_101 : f32 to vector<16x1xf32>
    %297 = arith.divf %295, %296 : vector<16x1xf32>
    %298 = vector.broadcast %297 : vector<16x1xf32> to vector<16x32xf32>
    %299 = arith.subf %292, %298 : vector<16x32xf32>
    %300 = arith.mulf %299, %299 : vector<16x32xf32>
    %cst_102 = arith.constant dense<0.000000e+00> : vector<16xf32>
    %301 = vector.multi_reduction <add>, %300, %cst_102 [1] : vector<16x32xf32> to vector<16xf32>
    %302 = vector.shape_cast %301 : vector<16xf32> to vector<16x1xf32>
    %cst_103 = arith.constant 3.200000e+01 : f32
    %303 = vector.broadcast %cst_103 : f32 to vector<16x1xf32>
    %304 = arith.divf %302, %303 : vector<16x1xf32>
    %305 = vector.broadcast %297 : vector<16x1xf32> to vector<16x32xf32>
    %306 = arith.subf %292, %305 : vector<16x32xf32>
    %cst_104 = arith.constant 9.99999997E-7 : f32
    %307 = vector.broadcast %cst_104 : f32 to vector<16x1xf32>
    %308 = arith.addf %304, %307 : vector<16x1xf32>
    %309 = math.rsqrt %308 : vector<16x1xf32>
    %310 = vector.broadcast %309 : vector<16x1xf32> to vector<16x32xf32>
    %311 = arith.mulf %306, %310 : vector<16x32xf32>
    %312 = vector.extract_strided_slice %293 {offsets = [0, 0], sizes = [1, 32], strides = [1, 1]} : vector<2x32xf32> to vector<1x32xf32>
    %313 = vector.broadcast %312 : vector<1x32xf32> to vector<16x32xf32>
    %314 = arith.mulf %311, %313 : vector<16x32xf32>
    %315 = vector.extract_strided_slice %293 {offsets = [1, 0], sizes = [1, 32], strides = [1, 1]} : vector<2x32xf32> to vector<1x32xf32>
    %316 = vector.broadcast %315 : vector<1x32xf32> to vector<16x32xf32>
    %317 = arith.addf %314, %316 : vector<16x32xf32>
    %c80 = arith.constant 80 : index
    %c0_105 = arith.constant 0 : index
    %318 = vector.load %arg4[%c80, %c0_105] : memref<144x128xf32, #tpu.memory_space<vmem>>, vector<32x128xf32>
    %cst_106 = arith.constant dense<0.000000e+00> : vector<16x128xf32>
    %319 = tpu.matmul %251, %318, %cst_106 {dimension_numbers = #tpu.dot_dimension_numbers<[1], [0], [0], [1], [0, 0, 1, 1], [], []>} : vector<16x32xf32>, vector<32x128xf32>, vector<16x128xf32> -> vector<16x128xf32>
    %c112 = arith.constant 112 : index
    %c0_107 = arith.constant 0 : index
    %320 = vector.load %arg4[%c112, %c0_107] : memref<144x128xf32, #tpu.memory_space<vmem>>, vector<32x128xf32>
    %cst_108 = arith.constant dense<0.000000e+00> : vector<16x128xf32>
    %321 = tpu.matmul %317, %320, %cst_108 {dimension_numbers = #tpu.dot_dimension_numbers<[1], [0], [0], [1], [0, 0, 1, 1], [], []>} : vector<16x32xf32>, vector<32x128xf32>, vector<16x128xf32> -> vector<16x128xf32>
    %322 = arith.addf %319, %321 : vector<16x128xf32>
    %c0_109 = arith.constant 0 : index
    %c0_110 = arith.constant 0 : index
    %323 = vector.load %arg5[%c0_109, %c0_110] : memref<16x128xf32, #tpu.memory_space<vmem>>, vector<16x128xf32>
    tpu.vector_store %arg5[%c0_109, %c0_110], %322 {strides = array<i32>} : memref<16x128xf32, #tpu.memory_space<vmem>>, vector<16x128xf32>,
    return
  }
  func.func @transform_0(%arg0: i32) -> (i32, i32) {
    %c0_i32 = arith.constant 0 : i32
    %c0_i32_0 = arith.constant 0 : i32
    %c0_i32_1 = arith.constant 0 : i32
    return %c0_i32, %c0_i32_0 : i32, i32
  }
  func.func @transform_1(%arg0: i32) -> (i32, i32) {
    %c0_i32 = arith.constant 0 : i32
    %c0_i32_0 = arith.constant 0 : i32
    %c0_i32_1 = arith.constant 0 : i32
    return %c0_i32, %c0_i32_0 : i32, i32
  }
  func.func @transform_2(%arg0: i32) -> (i32, i32) {
    %c0_i32 = arith.constant 0 : i32
    %c0_i32_0 = arith.constant 0 : i32
    %c0_i32_1 = arith.constant 0 : i32
    return %c0_i32, %c0_i32_0 : i32, i32
  }
  func.func @transform_3(%arg0: i32) -> (i32, i32) {
    %c0_i32 = arith.constant 0 : i32
    %c0_i32_0 = arith.constant 0 : i32
    %c0_i32_1 = arith.constant 0 : i32
    return %c0_i32, %c0_i32_0 : i32, i32
  }
  func.func @transform_4(%arg0: i32) -> (i32, i32) {
    %c0_i32 = arith.constant 0 : i32
    %c0_i32_0 = arith.constant 0 : i32
    %c0_i32_1 = arith.constant 0 : i32
    return %c0_i32, %c0_i32_0 : i32, i32
  }
}

</mosaic_0001>

<llo_original>
// kernel: forward.1
$region0: #{forward.1}
  #allocation0 [shape = 'u32[]', space=smem, size = 0x4, offset = 0x4, fixed_abs, tag = 'smem constant byte address 0x4 - core index']
  #allocation1 [shape = 'u32[144,128]{1,0:T(1,128)}', space=vmem, size = 0x12000, scoped, tag = 'internal scratch']
  %s0 = inlined_call_operand.vmem [shape: f32[16,288], index: 0, kind: input, shape index: {}]
  %s1 = inlined_call_operand.vmem [shape: f32[80,64], index: 1, kind: input, shape index: {}]
  %s2 = inlined_call_operand.vmem [shape: f32[928,32], index: 2, kind: input, shape index: {}]
  %s3 = inlined_call_operand.vmem [shape: f32[144,128], index: 3, kind: input, shape index: {}]
  %s4 = inlined_call_operand.vmem [shape: f32[16,128], index: 4, kind: output, shape index: {}]
  %s5 = sld [smem:[#allocation0]]
  $region26: #{forward.1} parent=0
    _
  %s7 = ssub.s32 1, %s5
  %s8 = scalar_select 0, %s7, %s5
  // Predicated region
  $region2: #{forward.1} parent=0 // pred_check
    _
  $region3: #{forward.1} parent=0 // pred_check_branch
    %10 = sbr.rel (0) target = $region5
  $region4: #{forward.1} parent=0 // pred_region
    _
  $region5: #{forward.1} parent=0 // pred_fallthru
    _
  // Predicated region
  $region6: #{forward.1} parent=0 // pred_check
    _
  $region7: #{forward.1} parent=0 // pred_check_branch
    %12 = sbr.rel (0) target = $region9
  $region8: #{forward.1} parent=0 // pred_region
    _
  $region9: #{forward.1} parent=0 // pred_fallthru
    _
  // Predicated region
  $region10: #{forward.1} parent=0 // pred_check
    _
  $region11: #{forward.1} parent=0 // pred_check_branch
    %14 = sbr.rel (0) target = $region13
  $region12: #{forward.1} parent=0 // pred_region
    _
  $region13: #{forward.1} parent=0 // pred_fallthru
    _
  // Predicated region
  $region14: #{forward.1} parent=0 // pred_check
    _
  $region15: #{forward.1} parent=0 // pred_check_branch
    %16 = sbr.rel (0) target = $region17
  $region16: #{forward.1} parent=0 // pred_region
    _
  $region17: #{forward.1} parent=0 // pred_fallthru
    _
  %v17 = vld [vmem:[%s0] sm:$0xff]
  %v18 = vld [vmem:[%s0 + $0x8] sm:$0xff]
  %v19 = vld [vmem:[%s0 + $0x10] sm:$0xff]
  %v20 = vld [vmem:[%s0 + $0x18] sm:$0xff]
  %v21 = vld [vmem:[%s0 + $0x20] sm:$0xff]
  %v22 = vld [vmem:[%s0 + $0x28] sm:$0xff]
  %v23 = vld [vmem:[%s2] sm:$0xff]
  %v24 = vld [vmem:[%s2 + $0x8] sm:$0xff]
  %v25 = vld [vmem:[%s2 + $0x10] sm:$0xff]
  %v26 = vld [vmem:[%s2 + $0x18] sm:$0xff]
  %v27 = vld [vmem:[%s2 + $0x20] sm:$0xff]
  %v28 = vld [vmem:[%s2 + $0x28] sm:$0xff]
  %v29 = vld [vmem:[%s2 + $0x30] sm:$0xff]
  %v30 = vld [vmem:[%s2 + $0x38] sm:$0xff]
  %v31 = vld [vmem:[%s2 + $0x40] sm:$0xff]
  %v32 = vld [vmem:[%s2 + $0x48] sm:$0xff]
  %v33 = vld [vmem:[%s2 + $0x50] sm:$0xff]
  %v34 = vld [vmem:[%s2 + $0x58] sm:$0xff]
  %v35 = vld [vmem:[%s2 + $0x60] sm:$0xff]
  %v36 = vld [vmem:[%s2 + $0x68] sm:$0xff]
  %v37 = vld [vmem:[%s2 + $0x70] sm:$0xff]
  %v38 = vld [vmem:[%s2 + $0x78] sm:$0xff]
  %v39 = vld [vmem:[%s2 + $0x80] sm:$0xff]
  %v40 = vld [vmem:[%s2 + $0x88] sm:$0xff]
  %v41 = vld [vmem:[%s2 + $0x90] sm:$0xff]
  %v42 = vld [vmem:[%s2 + $0x98] sm:$0xff]
  %v43 = vld [vmem:[%s2 + $0xa0] sm:$0xff]
  %v44 = vld [vmem:[%s2 + $0xa8] sm:$0xff]
  %v45 = vld [vmem:[%s2 + $0xb0] sm:$0xff]
  %v46 = vld [vmem:[%s2 + $0xb8] sm:$0xff]
  %v47 = vld [vmem:[%s2 + $0xc0] sm:$0xff]
  %v48 = vld [vmem:[%s2 + $0xc8] sm:$0xff]
  %v49 = vld [vmem:[%s2 + $0xd0] sm:$0xff]
  %v50 = vld [vmem:[%s2 + $0xd8] sm:$0xff]
  %v51 = vld [vmem:[%s2 + $0xe0] sm:$0xff]
  %v52 = vld [vmem:[%s2 + $0xe8] sm:$0xff]
  %v53 = vld [vmem:[%s2 + $0xf0] sm:$0xff]
  %v54 = vld [vmem:[%s2 + $0xf8] sm:$0xff]
  %v55 = vld [vmem:[%s2 + $0x100] sm:$0xff]
  %v56 = vld [vmem:[%s2 + $0x108] sm:$0xff]
  %v57 = vld [vmem:[%s2 + $0x110] sm:$0xff]
  %v58 = vld [vmem:[%s2 + $0x118] sm:$0xff]
  %v59 = vld [vmem:[%s2 + $0x120] sm:$0x1]
  %v60 = vlaneseq
  %v61 = vshrl.u32 %v60, 7
  %v62 = vsub.s32 0, %v61
  %v63 = vrot.slane %v59, %v62
  %vm64 = vcmask 261120
  %v66 = vsel %vm64, %v19, 0
  %v69 = vsel %vm64, %v22, 0
  %71 = vmatprep.subr.mxu0 0.0
  %72 = vmatpush1.msra.mxu0 %v23
  %73 = vmatprep.subr.mxu0 0.0
  %74 = vmatpush1.msra.mxu0 %v24
  %75 = vmatprep.subr.mxu0 0.0
  %76 = vmatpush1.msra.mxu0 %v25
  %77 = vmatprep.subr.mxu0 0.0
  %78 = vmatpush1.msra.mxu0 %v26
  %79 = vmatprep.subr.mxu0 0.0
  %80 = vmatpush1.msra.mxu0 %v27
  %81 = vmatprep.subr.mxu0 0.0
  %82 = vmatpush1.msra.mxu0 %v28
  %83 = vmatprep.subr.mxu0 0.0
  %84 = vmatpush1.msra.mxu0 %v29
  %85 = vmatprep.subr.mxu0 0.0
  %86 = vmatpush1.msra.mxu0 %v30
  %87 = vmatprep.subr.mxu0 0.0
  %88 = vmatpush1.msra.mxu0 %v31
  %89 = vmatprep.subr.mxu0 0.0
  %90 = vmatpush1.msra.mxu0 %v32
  %91 = vmatprep.subr.mxu0 0.0
  %92 = vmatpush1.msra.mxu0 %v33
  %93 = vmatprep.subr.mxu0 0.0
  %94 = vmatpush1.msra.mxu0 %v34
  %95 = vmatprep.subr.mxu0 0.0
  %96 = vmatpush1.msra.mxu0 %v35
  %97 = vmatprep.subr.mxu0 0.0
  %98 = vmatpush1.msra.mxu0 %v36
  %99 = vmatprep.subr.mxu0 0.0
  %100 = vmatpush1.msra.mxu0 %v37
  %101 = vmatprep.subr.mxu0 0.0
  %102 = vmatpush1.msra.mxu0 %v38
  %103 = vmatprep.subr.mxu0 0.0
  %104 = vmatpush1.msra.mxu0 %v39
  %105 = vmatprep.subr.mxu0 0.0
  %106 = vmatpush1.msra.mxu0 %v40
  %107 = vmatprep.subr.mxu0 0.0
  %108 = vmatpush1.msra.mxu0 %v41
  %109 = vmatprep.subr.mxu0 0.0
  %110 = vmatpush1.msra.mxu0 %v42
  %111 = vmatprep.subr.mxu0 0.0
  %112 = vmatpush1.msra.mxu0 %v43
  %113 = vmatprep.subr.mxu0 0.0
  %114 = vmatpush1.msra.mxu0 %v44
  %115 = vmatprep.subr.mxu0 0.0
  %116 = vmatpush1.msra.mxu0 %v45
  %117 = vmatprep.subr.mxu0 0.0
  %118 = vmatpush1.msra.mxu0 %v46
  %119 = vmatprep.subr.mxu0 0.0
  %120 = vmatpush1.msra.mxu0 %v47
  %121 = vmatprep.subr.mxu0 0.0
  %122 = vmatpush1.msra.mxu0 %v48
  %123 = vmatprep.subr.mxu0 0.0
  %124 = vmatpush1.msra.mxu0 %v49
  %125 = vmatprep.subr.mxu0 0.0
  %126 = vmatpush1.msra.mxu0 %v50
  %127 = vmatprep.subr.mxu0 0.0
  %128 = vmatpush1.msra.mxu0 %v51
  %129 = vmatprep.subr.mxu0 0.0
  %130 = vmatpush1.msra.mxu0 %v52
  %131 = vmatprep.subr.mxu0 0.0
  %132 = vmatpush1.msra.mxu0 %v53
  %133 = vmatprep.subr.mxu0 0.0
  %134 = vmatpush1.msra.mxu0 %v54
  %135 = vmatprep.mubr.f32.mxu0 %v18
  %136 = vmatmul.mubr.f32.gmra.mrb[0].mxu0 %v17
  %v137 = vpop.f32.mrb[0].mxu0
  %v138 = vadd.f32 %v63, %v137
  %v139 = vpop.f32.mrb[0].mxu0
  %140 = vmatprep.mubr.f32.mxu0 %v21
  %141 = vmatmul.mubr.f32.gmra.mrb[0].mxu0 %v20
  %v142 = vpop.f32.mrb[0].mxu0
  %v143 = vadd.f32 %v63, %v142
  %v144 = vpop.f32.mrb[0].mxu0
  %145 = vdwg.mxu0
  %146 = vmatprep.subr.mxu0 0.0
  %147 = vmatpush1.msra.mxu0 %v55
  %148 = vmatprep.subr.mxu0 0.0
  %149 = vmatpush1.msra.mxu0 %v56
  %150 = vmatprep.subr.mxu0 0.0
  %151 = vmatpush1.msra.mxu0 %v57
  %152 = vmatprep.subr.mxu0 0.0
  %153 = vmatpush1.msra.mxu0 %v58
  %154 = vmatprep.subr.mxu0 0.0
  %155 = vmatpush1.msra.mxu0 0.0
  %156 = vmatprep.subr.mxu0 0.0
  %157 = vmatpush1.msra.mxu0 0.0
  %158 = vmatprep.subr.mxu0 0.0
  %159 = vmatpush1.msra.mxu0 0.0
  %160 = vmatprep.subr.mxu0 0.0
  %161 = vmatpush1.msra.mxu0 0.0
  %162 = vmatprep.subr.mxu0 0.0
  %163 = vmatpush1.msra.mxu0 0.0
  %164 = vmatprep.subr.mxu0 0.0
  %165 = vmatpush1.msra.mxu0 0.0
  %166 = vmatprep.subr.mxu0 0.0
  %167 = vmatpush1.msra.mxu0 0.0
  %168 = vmatprep.subr.mxu0 0.0
  %169 = vmatpush1.msra.mxu0 0.0
  %170 = vmatprep.subr.mxu0 0.0
  %171 = vmatpush1.msra.mxu0 0.0
  %172 = vmatprep.subr.mxu0 0.0
  %173 = vmatpush1.msra.mxu0 0.0
  %174 = vmatprep.subr.mxu0 0.0
  %175 = vmatpush1.msra.mxu0 0.0
  %176 = vmatprep.subr.mxu0 0.0
  %177 = vmatpush1.msra.mxu0 0.0
  %178 = vmatprep.subr.mxu0 0.0
  %179 = vmatpush1.msra.mxu0 0.0
  %180 = vmatprep.subr.mxu0 0.0
  %181 = vmatpush1.msra.mxu0 0.0
  %182 = vmatprep.subr.mxu0 0.0
  %183 = vmatpush1.msra.mxu0 0.0
  %184 = vmatprep.subr.mxu0 0.0
  %185 = vmatpush1.msra.mxu0 0.0
  %186 = vmatprep.subr.mxu0 0.0
  %187 = vmatpush1.msra.mxu0 0.0
  %188 = vmatprep.subr.mxu0 0.0
  %189 = vmatpush1.msra.mxu0 0.0
  %190 = vmatprep.subr.mxu0 0.0
  %191 = vmatpush1.msra.mxu0 0.0
  %192 = vmatprep.subr.mxu0 0.0
  %193 = vmatpush1.msra.mxu0 0.0
  %194 = vmatprep.subr.mxu0 0.0
  %195 = vmatpush1.msra.mxu0 0.0
  %196 = vmatprep.subr.mxu0 0.0
  %197 = vmatpush1.msra.mxu0 0.0
  %198 = vmatprep.subr.mxu0 0.0
  %199 = vmatpush1.msra.mxu0 0.0
  %200 = vmatprep.subr.mxu0 0.0
  %201 = vmatpush1.msra.mxu0 0.0
  %202 = vmatprep.subr.mxu0 0.0
  %203 = vmatpush1.msra.mxu0 0.0
  %204 = vmatprep.subr.mxu0 0.0
  %205 = vmatpush1.msra.mxu0 0.0
  %206 = vmatprep.subr.mxu0 0.0
  %207 = vmatpush1.msra.mxu0 0.0
  %208 = vmatprep.subr.mxu0 0.0
  %209 = vmatpush1.msra.mxu0 0.0
  %210 = vmatprep.mubr.f32.mxu0 0.0
  %211 = vmatmul.mubr.f32.gmra.mrb[0].mxu0 %v66
  %v212 = vpop.f32.mrb[0].mxu0
  %v213 = vadd.f32 %v138, %v212
  %v214 = vpop.f32.mrb[0].mxu0
  %215 = vmatprep.mubr.f32.mxu0 0.0
  %216 = vmatmul.mubr.f32.gmra.mrb[0].mxu0 %v69
  %v217 = vpop.f32.mrb[0].mxu0
  %v218 = vadd.f32 %v143, %v217
  %v219 = vpop.f32.mrb[0].mxu0
  %220 = vdwg.mxu0
  %v221 = vmax.f32 %v213, 0.0
  %v222 = vmax.f32 %v218, 0.0
  %v223 = vld [vmem:[%s2 + $0x128] sm:$0x3]
  %v224 = vsel %vm64, %v221, 0.0
  %225 = vadd.xlane.f32.xlu0 %v224
  %v226 = vpop.xlane.xlu0 %225
  %v227 = vsel %vm64, %v222, 0.0
  %228 = vadd.xlane.f32.xlu0 %v227
  %v229 = vpop.xlane.xlu0 %228
  %v230 = vrcp.pop 32.0
  %v231 = vmul.f32 %v226, %v230
  %v232 = vmul.f32 %v229, %v230
  %v233 = vsub.f32 %v221, %v231
  %v234 = vsub.f32 %v222, %v232
  %v235 = vmul.f32 %v233, %v233
  %v236 = vmul.f32 %v234, %v234
  %v237 = vsel %vm64, %v235, 0.0
  %238 = vadd.xlane.f32.xlu0 %v237
  %v239 = vpop.xlane.xlu0 %238
  %v240 = vsel %vm64, %v236, 0.0
  %241 = vadd.xlane.f32.xlu0 %v240
  %v242 = vpop.xlane.xlu0 %241
  %v243 = vmul.f32 %v239, %v230
  %v244 = vmul.f32 %v242, %v230
  %v245 = vadd.f32 %v243, 1e-06
  %v246 = vadd.f32 %v244, 1e-06
  %v247 = vrsqrt.pop %v245
  %v248 = vrsqrt.pop %v246
  %v249 = vmul.f32 %v233, %v247
  %v250 = vmul.f32 %v234, %v248
  %v251 = vlaneseq
  %v252 = vshrl.u32 %v251, 7
  %v253 = vsub.s32 0, %v252
  %v254 = vrot.slane %v223, %v253
  %v255 = vmul.f32 %v249, %v254
  %v256 = vmul.f32 %v250, %v254
  %v257 = vlaneseq
  %v258 = vshrl.u32 %v257, 7
  %v259 = vsub.s32 1, %v258
  %v260 = vrot.slane %v223, %v259
  %v261 = vadd.f32 %v255, %v260
  %v262 = vadd.f32 %v256, %v260
  %v263 = vld [vmem:[%s2 + $0x138] sm:$0xff]
  %v264 = vld [vmem:[%s2 + $0x140] sm:$0xff]
  %v265 = vadd.f32 %v261, %v263
  %v266 = vadd.f32 %v262, %v264
  %v267 = vld [vmem:[%s2 + $0x130] sm:$0x3]
  %v268 = vsel %vm64, %v265, 0.0
  %269 = vadd.xlane.f32.xlu0 %v268
  %v270 = vpop.xlane.xlu0 %269
  %v271 = vsel %vm64, %v266, 0.0
  %272 = vadd.xlane.f32.xlu0 %v271
  %v273 = vpop.xlane.xlu0 %272
  %v274 = vmul.f32 %v270, %v230
  %v275 = vmul.f32 %v273, %v230
  %v276 = vsub.f32 %v265, %v274
  %v277 = vsub.f32 %v266, %v275
  %v278 = vmul.f32 %v276, %v276
  %v279 = vmul.f32 %v277, %v277
  %v280 = vsel %vm64, %v278, 0.0
  %281 = vadd.xlane.f32.xlu0 %v280
  %v282 = vpop.xlane.xlu0 %281
  %v283 = vsel %vm64, %v279, 0.0
  %284 = vadd.xlane.f32.xlu0 %v283
  %v285 = vpop.xlane.xlu0 %284
  %v286 = vmul.f32 %v282, %v230
  %v287 = vmul.f32 %v285, %v230
  %v288 = vadd.f32 %v286, 1e-06
  %v289 = vadd.f32 %v287, 1e-06
  %v290 = vrsqrt.pop %v288
  %v291 = vrsqrt.pop %v289
  %v292 = vmul.f32 %v276, %v290
  %v293 = vmul.f32 %v277, %v291
  %v294 = vlaneseq
  %v295 = vshrl.u32 %v294, 7
  %v296 = vsub.s32 0, %v295
  %v297 = vrot.slane %v267, %v296
  %v298 = vmul.f32 %v292, %v297
  %v299 = vmul.f32 %v293, %v297
  %v300 = vlaneseq
  %v301 = vshrl.u32 %v300, 7
  %v302 = vsub.s32 1, %v301
  %v303 = vrot.slane %v267, %v302
  %v304 = vadd.f32 %v298, %v303
  %v305 = vadd.f32 %v299, %v303
  %v306 = vld [vmem:[%s2 + $0x148] sm:$0xff]
  %v307 = vld [vmem:[%s2 + $0x150] sm:$0xff]
  %v308 = vld [vmem:[%s2 + $0x158] sm:$0xff]
  %v309 = vld [vmem:[%s2 + $0x160] sm:$0xff]
  %v310 = vld [vmem:[%s2 + $0x168] sm:$0xff]
  %v311 = vld [vmem:[%s2 + $0x170] sm:$0xff]
  %v312 = vld [vmem:[%s2 + $0x178] sm:$0xff]
  %v313 = vld [vmem:[%s2 + $0x180] sm:$0xff]
  %v314 = vld [vmem:[%s1] sm:$0xff]
  %v315 = vld [vmem:[%s1 + $0x8] sm:$0xff]
  %v316 = vld [vmem:[%s1 + $0x10] sm:$0xff]
  %v317 = vld [vmem:[%s1 + $0x18] sm:$0xff]
  %v318 = vld [vmem:[%s1 + $0x20] sm:$0xff]
  %v319 = vld [vmem:[%s1 + $0x28] sm:$0xff]
  %v320 = vld [vmem:[%s1 + $0x30] sm:$0xff]
  %v321 = vld [vmem:[%s1 + $0x38] sm:$0xff]
  %v322 = vld [vmem:[%s2 + $0x188] sm:$0xff]
  %v323 = vld [vmem:[%s2 + $0x190] sm:$0xff]
  %v324 = vld [vmem:[%s2 + $0x198] sm:$0xff]
  %v325 = vld [vmem:[%s2 + $0x1a0] sm:$0xff]
  %v327 = vsel %vm64, %v304, 0
  %v330 = vsel %vm64, %v305, 0
  %332 = vmatprep.subr.mxu0 0.0
  %333 = vmatpush1.msra.mxu0 %v322
  %334 = vmatprep.subr.mxu0 0.0
  %335 = vmatpush1.msra.mxu0 %v323
  %336 = vmatprep.subr.mxu0 0.0
  %337 = vmatpush1.msra.mxu0 %v324
  %338 = vmatprep.subr.mxu0 0.0
  %339 = vmatpush1.msra.mxu0 %v325
  %340 = vmatprep.subr.mxu0 0.0
  %341 = vmatpush1.msra.mxu0 0.0
  %342 = vmatprep.subr.mxu0 0.0
  %343 = vmatpush1.msra.mxu0 0.0
  %344 = vmatprep.subr.mxu0 0.0
  %345 = vmatpush1.msra.mxu0 0.0
  %346 = vmatprep.subr.mxu0 0.0
  %347 = vmatpush1.msra.mxu0 0.0
  %348 = vmatprep.subr.mxu0 0.0
  %349 = vmatpush1.msra.mxu0 0.0
  %350 = vmatprep.subr.mxu0 0.0
  %351 = vmatpush1.msra.mxu0 0.0
  %352 = vmatprep.subr.mxu0 0.0
  %353 = vmatpush1.msra.mxu0 0.0
  %354 = vmatprep.subr.mxu0 0.0
  %355 = vmatpush1.msra.mxu0 0.0
  %356 = vmatprep.subr.mxu0 0.0
  %357 = vmatpush1.msra.mxu0 0.0
  %358 = vmatprep.subr.mxu0 0.0
  %359 = vmatpush1.msra.mxu0 0.0
  %360 = vmatprep.subr.mxu0 0.0
  %361 = vmatpush1.msra.mxu0 0.0
  %362 = vmatprep.subr.mxu0 0.0
  %363 = vmatpush1.msra.mxu0 0.0
  %364 = vmatprep.subr.mxu0 0.0
  %365 = vmatpush1.msra.mxu0 0.0
  %366 = vmatprep.subr.mxu0 0.0
  %367 = vmatpush1.msra.mxu0 0.0
  %368 = vmatprep.subr.mxu0 0.0
  %369 = vmatpush1.msra.mxu0 0.0
  %370 = vmatprep.subr.mxu0 0.0
  %371 = vmatpush1.msra.mxu0 0.0
  %372 = vmatprep.subr.mxu0 0.0
  %373 = vmatpush1.msra.mxu0 0.0
  %374 = vmatprep.subr.mxu0 0.0
  %375 = vmatpush1.msra.mxu0 0.0
  %376 = vmatprep.subr.mxu0 0.0
  %377 = vmatpush1.msra.mxu0 0.0
  %378 = vmatprep.subr.mxu0 0.0
  %379 = vmatpush1.msra.mxu0 0.0
  %380 = vmatprep.subr.mxu0 0.0
  %381 = vmatpush1.msra.mxu0 0.0
  %382 = vmatprep.subr.mxu0 0.0
  %383 = vmatpush1.msra.mxu0 0.0
  %384 = vmatprep.subr.mxu0 0.0
  %385 = vmatpush1.msra.mxu0 0.0
  %386 = vmatprep.subr.mxu0 0.0
  %387 = vmatpush1.msra.mxu0 0.0
  %388 = vmatprep.subr.mxu0 0.0
  %389 = vmatpush1.msra.mxu0 0.0
  %390 = vmatprep.subr.mxu0 0.0
  %391 = vmatpush1.msra.mxu0 0.0
  %392 = vmatprep.subr.mxu0 0.0
  %393 = vmatpush1.msra.mxu0 0.0
  %394 = vmatprep.subr.mxu0 0.0
  %395 = vmatpush1.msra.mxu0 0.0
  %396 = vmatprep.mubr.f32.mxu0 0.0
  %397 = vmatmul.mubr.f32.gmra.mrb[0].mxu0 %v327
  %v398 = vpop.f32.mrb[0].mxu0
  %v399 = vadd.f32 0.0, %v398
  %v400 = vpop.f32.mrb[0].mxu0
  %401 = vmatprep.mubr.f32.mxu0 0.0
  %402 = vmatmul.mubr.f32.gmra.mrb[0].mxu0 %v330
  %v403 = vpop.f32.mrb[0].mxu0
  %v404 = vadd.f32 0.0, %v403
  %v405 = vpop.f32.mrb[0].mxu0
  %406 = vdwg.mxu0
  %v407 = vld [vmem:[%s2 + $0x1a8] sm:$0xff]
  %v408 = vld [vmem:[%s2 + $0x1b0] sm:$0xff]
  %v409 = vld [vmem:[%s2 + $0x1b8] sm:$0xff]
  %v410 = vld [vmem:[%s2 + $0x1c0] sm:$0xff]
  %411 = vmatprep.subr.mxu0 0.0
  %412 = vmatpush1.msra.mxu0 %v407
  %413 = vmatprep.subr.mxu0 0.0
  %414 = vmatpush1.msra.mxu0 %v408
  %415 = vmatprep.subr.mxu0 0.0
  %416 = vmatpush1.msra.mxu0 %v409
  %417 = vmatprep.subr.mxu0 0.0
  %418 = vmatpush1.msra.mxu0 %v410
  %419 = vmatprep.subr.mxu0 0.0
  %420 = vmatpush1.msra.mxu0 0.0
  %421 = vmatprep.subr.mxu0 0.0
  %422 = vmatpush1.msra.mxu0 0.0
  %423 = vmatprep.subr.mxu0 0.0
  %424 = vmatpush1.msra.mxu0 0.0
  %425 = vmatprep.subr.mxu0 0.0
  %426 = vmatpush1.msra.mxu0 0.0
  %427 = vmatprep.subr.mxu0 0.0
  %428 = vmatpush1.msra.mxu0 0.0
  %429 = vmatprep.subr.mxu0 0.0
  %430 = vmatpush1.msra.mxu0 0.0
  %431 = vmatprep.subr.mxu0 0.0
  %432 = vmatpush1.msra.mxu0 0.0
  %433 = vmatprep.subr.mxu0 0.0
  %434 = vmatpush1.msra.mxu0 0.0
  %435 = vmatprep.subr.mxu0 0.0
  %436 = vmatpush1.msra.mxu0 0.0
  %437 = vmatprep.subr.mxu0 0.0
  %438 = vmatpush1.msra.mxu0 0.0
  %439 = vmatprep.subr.mxu0 0.0
  %440 = vmatpush1.msra.mxu0 0.0
  %441 = vmatprep.subr.mxu0 0.0
  %442 = vmatpush1.msra.mxu0 0.0
  %443 = vmatprep.subr.mxu0 0.0
  %444 = vmatpush1.msra.mxu0 0.0
  %445 = vmatprep.subr.mxu0 0.0
  %446 = vmatpush1.msra.mxu0 0.0
  %447 = vmatprep.subr.mxu0 0.0
  %448 = vmatpush1.msra.mxu0 0.0
  %449 = vmatprep.subr.mxu0 0.0
  %450 = vmatpush1.msra.mxu0 0.0
  %451 = vmatprep.subr.mxu0 0.0
  %452 = vmatpush1.msra.mxu0 0.0
  %453 = vmatprep.subr.mxu0 0.0
  %454 = vmatpush1.msra.mxu0 0.0
  %455 = vmatprep.subr.mxu0 0.0
  %456 = vmatpush1.msra.mxu0 0.0
  %457 = vmatprep.subr.mxu0 0.0
  %458 = vmatpush1.msra.mxu0 0.0
  %459 = vmatprep.subr.mxu0 0.0
  %460 = vmatpush1.msra.mxu0 0.0
  %461 = vmatprep.subr.mxu0 0.0
  %462 = vmatpush1.msra.mxu0 0.0
  %463 = vmatprep.subr.mxu0 0.0
  %464 = vmatpush1.msra.mxu0 0.0
  %465 = vmatprep.subr.mxu0 0.0
  %466 = vmatpush1.msra.mxu0 0.0
  %467 = vmatprep.subr.mxu0 0.0
  %468 = vmatpush1.msra.mxu0 0.0
  %469 = vmatprep.subr.mxu0 0.0
  %470 = vmatpush1.msra.mxu0 0.0
  %471 = vmatprep.subr.mxu0 0.0
  %472 = vmatpush1.msra.mxu0 0.0
  %473 = vmatprep.subr.mxu0 0.0
  %474 = vmatpush1.msra.mxu0 0.0
  %475 = vmatprep.mubr.f32.mxu0 0.0
  %476 = vmatmul.mubr.f32.gmra.mrb[0].mxu0 %v327
  %v477 = vpop.f32.mrb[0].mxu0
  %v478 = vadd.f32 0.0, %v477
  %v479 = vpop.f32.mrb[0].mxu0
  %480 = vmatprep.mubr.f32.mxu0 0.0
  %481 = vmatmul.mubr.f32.gmra.mrb[0].mxu0 %v330
  %v482 = vpop.f32.mrb[0].mxu0
  %v483 = vadd.f32 0.0, %v482
  %v484 = vpop.f32.mrb[0].mxu0
  %485 = vdwg.mxu0
  %v486 = vld [vmem:[%s2 + $0x1c8] sm:$0xff]
  %v487 = vld [vmem:[%s2 + $0x1d0] sm:$0xff]
  %v488 = vld [vmem:[%s2 + $0x1d8] sm:$0xff]
  %v489 = vld [vmem:[%s2 + $0x1e0] sm:$0xff]
  %490 = vmatprep.subr.mxu0 0.0
  %491 = vmatpush1.msra.mxu0 %v486
  %492 = vmatprep.subr.mxu0 0.0
  %493 = vmatpush1.msra.mxu0 %v487
  %494 = vmatprep.subr.mxu0 0.0
  %495 = vmatpush1.msra.mxu0 %v488
  %496 = vmatprep.subr.mxu0 0.0
  %497 = vmatpush1.msra.mxu0 %v489
  %498 = vmatprep.subr.mxu0 0.0
  %499 = vmatpush1.msra.mxu0 0.0
  %500 = vmatprep.subr.mxu0 0.0
  %501 = vmatpush1.msra.mxu0 0.0
  %502 = vmatprep.subr.mxu0 0.0
  %503 = vmatpush1.msra.mxu0 0.0
  %504 = vmatprep.subr.mxu0 0.0
  %505 = vmatpush1.msra.mxu0 0.0
  %506 = vmatprep.subr.mxu0 0.0
  %507 = vmatpush1.msra.mxu0 0.0
  %508 = vmatprep.subr.mxu0 0.0
  %509 = vmatpush1.msra.mxu0 0.0
  %510 = vmatprep.subr.mxu0 0.0
  %511 = vmatpush1.msra.mxu0 0.0
  %512 = vmatprep.subr.mxu0 0.0
  %513 = vmatpush1.msra.mxu0 0.0
  %514 = vmatprep.subr.mxu0 0.0
  %515 = vmatpush1.msra.mxu0 0.0
  %516 = vmatprep.subr.mxu0 0.0
  %517 = vmatpush1.msra.mxu0 0.0
  %518 = vmatprep.subr.mxu0 0.0
  %519 = vmatpush1.msra.mxu0 0.0
  %520 = vmatprep.subr.mxu0 0.0
  %521 = vmatpush1.msra.mxu0 0.0
  %522 = vmatprep.subr.mxu0 0.0
  %523 = vmatpush1.msra.mxu0 0.0
  %524 = vmatprep.subr.mxu0 0.0
  %525 = vmatpush1.msra.mxu0 0.0
  %526 = vmatprep.subr.mxu0 0.0
  %527 = vmatpush1.msra.mxu0 0.0
  %528 = vmatprep.subr.mxu0 0.0
  %529 = vmatpush1.msra.mxu0 0.0
  %530 = vmatprep.subr.mxu0 0.0
  %531 = vmatpush1.msra.mxu0 0.0
  %532 = vmatprep.subr.mxu0 0.0
  %533 = vmatpush1.msra.mxu0 0.0
  %534 = vmatprep.subr.mxu0 0.0
  %535 = vmatpush1.msra.mxu0 0.0
  %536 = vmatprep.subr.mxu0 0.0
  %537 = vmatpush1.msra.mxu0 0.0
  %538 = vmatprep.subr.mxu0 0.0
  %539 = vmatpush1.msra.mxu0 0.0
  %540 = vmatprep.subr.mxu0 0.0
  %541 = vmatpush1.msra.mxu0 0.0
  %542 = vmatprep.subr.mxu0 0.0
  %543 = vmatpush1.msra.mxu0 0.0
  %544 = vmatprep.subr.mxu0 0.0
  %545 = vmatpush1.msra.mxu0 0.0
  %546 = vmatprep.subr.mxu0 0.0
  %547 = vmatpush1.msra.mxu0 0.0
  %548 = vmatprep.subr.mxu0 0.0
  %549 = vmatpush1.msra.mxu0 0.0
  %550 = vmatprep.subr.mxu0 0.0
  %551 = vmatpush1.msra.mxu0 0.0
  %552 = vmatprep.subr.mxu0 0.0
  %553 = vmatpush1.msra.mxu0 0.0
  %554 = vmatprep.mubr.f32.mxu0 0.0
  %555 = vmatmul.mubr.f32.gmra.mrb[0].mxu0 %v327
  %v556 = vpop.f32.mrb[0].mxu0
  %v557 = vadd.f32 0.0, %v556
  %v558 = vpop.f32.mrb[0].mxu0
  %559 = vmatprep.mubr.f32.mxu0 0.0
  %560 = vmatmul.mubr.f32.gmra.mrb[0].mxu0 %v330
  %v561 = vpop.f32.mrb[0].mxu0
  %v562 = vadd.f32 0.0, %v561
  %v563 = vpop.f32.mrb[0].mxu0
  %564 = vdwg.mxu0
  %v565 = vmul.f32 %v399, %v306
  %v566 = vmul.f32 %v404, %v307
  %v567 = vmul.f32 %v399, %v308
  %v568 = vmul.f32 %v404, %v309
  %v569 = vmul.f32 %v399, %v310
  %v570 = vmul.f32 %v404, %v311
  %v571 = vmul.f32 %v399, %v312
  %v572 = vmul.f32 %v404, %v313
  %v574 = vsel %vm64, %v565, 0
  %v577 = vsel %vm64, %v566, 0
  %v580 = vsel %vm64, %v567, 0
  %v583 = vsel %vm64, %v568, 0
  %v586 = vsel %vm64, %v569, 0
  %v589 = vsel %vm64, %v570, 0
  %v592 = vsel %vm64, %v571, 0
  %v595 = vsel %vm64, %v572, 0
  %v598 = vsel %vm64, %v478, 0
  %v601 = vsel %vm64, %v483, 0
  %603 = vmatprep.subr.mxu0 0.0
  %604 = vmatpush1.xpose.msra.mxu0 %v598
  %605 = vmatprep.subr.mxu0 0.0
  %606 = vmatpush1.xpose.msra.mxu0 %v601
  %607 = vmatprep.subr.mxu0 0.0
  %608 = vmatpush1.xpose.msra.mxu0 0.0
  %609 = vmatprep.subr.mxu0 0.0
  %610 = vmatpush1.xpose.msra.mxu0 0.0
  %611 = vmatprep.subr.mxu0 0.0
  %612 = vmatpush1.xpose.msra.mxu0 0.0
  %613 = vmatprep.subr.mxu0 0.0
  %614 = vmatpush1.xpose.msra.mxu0 0.0
  %615 = vmatprep.subr.mxu0 0.0
  %616 = vmatpush1.xpose.msra.mxu0 0.0
  %617 = vmatprep.subr.mxu0 0.0
  %618 = vmatpush1.xpose.msra.mxu0 0.0
  %619 = vmatprep.subr.mxu0 0.0
  %620 = vmatpush1.xpose.msra.mxu0 0.0
  %621 = vmatprep.subr.mxu0 0.0
  %622 = vmatpush1.xpose.msra.mxu0 0.0
  %623 = vmatprep.subr.mxu0 0.0
  %624 = vmatpush1.xpose.msra.mxu0 0.0
  %625 = vmatprep.subr.mxu0 0.0
  %626 = vmatpush1.xpose.msra.mxu0 0.0
  %627 = vmatprep.subr.mxu0 0.0
  %628 = vmatpush1.xpose.msra.mxu0 0.0
  %629 = vmatprep.subr.mxu0 0.0
  %630 = vmatpush1.xpose.msra.mxu0 0.0
  %631 = vmatprep.subr.mxu0 0.0
  %632 = vmatpush1.xpose.msra.mxu0 0.0
  %633 = vmatprep.subr.mxu0 0.0
  %634 = vmatpush1.xpose.msra.mxu0 0.0
  %635 = vmatprep.subr.mxu0 0.0
  %636 = vmatpush1.xpose.msra.mxu0 0.0
  %637 = vmatprep.subr.mxu0 0.0
  %638 = vmatpush1.xpose.msra.mxu0 0.0
  %639 = vmatprep.subr.mxu0 0.0
  %640 = vmatpush1.xpose.msra.mxu0 0.0
  %641 = vmatprep.subr.mxu0 0.0
  %642 = vmatpush1.xpose.msra.mxu0 0.0
  %643 = vmatprep.subr.mxu0 0.0
  %644 = vmatpush1.xpose.msra.mxu0 0.0
  %645 = vmatprep.subr.mxu0 0.0
  %646 = vmatpush1.xpose.msra.mxu0 0.0
  %647 = vmatprep.subr.mxu0 0.0
  %648 = vmatpush1.xpose.msra.mxu0 0.0
  %649 = vmatprep.subr.mxu0 0.0
  %650 = vmatpush1.xpose.msra.mxu0 0.0
  %651 = vmatprep.subr.mxu0 0.0
  %652 = vmatpush1.xpose.msra.mxu0 0.0
  %653 = vmatprep.subr.mxu0 0.0
  %654 = vmatpush1.xpose.msra.mxu0 0.0
  %655 = vmatprep.subr.mxu0 0.0
  %656 = vmatpush1.xpose.msra.mxu0 0.0
  %657 = vmatprep.subr.mxu0 0.0
  %658 = vmatpush1.xpose.msra.mxu0 0.0
  %659 = vmatprep.subr.mxu0 0.0
  %660 = vmatpush1.xpose.msra.mxu0 0.0
  %661 = vmatprep.subr.mxu0 0.0
  %662 = vmatpush1.xpose.msra.mxu0 0.0
  %663 = vmatprep.subr.mxu0 0.0
  %664 = vmatpush1.xpose.msra.mxu0 0.0
  %665 = vmatprep.subr.mxu0 0.0
  %666 = vmatpush1.xpose.msra.mxu0 0.0
  %667 = vmatprep.mubr.f32.mxu0 0.0
  %668 = vmatmul.mubr.f32.gmra.mrb[0].mxu0 %v574
  %v669 = vpop.f32.mrb[0].mxu0
  %v670 = vadd.f32 %v314, %v669
  %v671 = vpop.f32.mrb[0].mxu0
  %672 = vmatprep.mubr.f32.mxu0 0.0
  %673 = vmatmul.mubr.f32.gmra.mrb[0].mxu0 %v577
  %v674 = vpop.f32.mrb[0].mxu0
  %v675 = vadd.f32 %v315, %v674
  %v676 = vpop.f32.mrb[0].mxu0
  %677 = vmatprep.mubr.f32.mxu0 0.0
  %678 = vmatmul.mubr.f32.gmra.mrb[0].mxu0 %v580
  %v679 = vpop.f32.mrb[0].mxu0
  %v680 = vadd.f32 %v316, %v679
  %v681 = vpop.f32.mrb[0].mxu0
  %682 = vmatprep.mubr.f32.mxu0 0.0
  %683 = vmatmul.mubr.f32.gmra.mrb[0].mxu0 %v583
  %v684 = vpop.f32.mrb[0].mxu0
  %v685 = vadd.f32 %v317, %v684
  %v686 = vpop.f32.mrb[0].mxu0
  %687 = vmatprep.mubr.f32.mxu0 0.0
  %688 = vmatmul.mubr.f32.gmra.mrb[0].mxu0 %v586
  %v689 = vpop.f32.mrb[0].mxu0
  %v690 = vadd.f32 %v318, %v689
  %v691 = vpop.f32.mrb[0].mxu0
  %692 = vmatprep.mubr.f32.mxu0 0.0
  %693 = vmatmul.mubr.f32.gmra.mrb[0].mxu0 %v589
  %v694 = vpop.f32.mrb[0].mxu0
  %v695 = vadd.f32 %v319, %v694
  %v696 = vpop.f32.mrb[0].mxu0
  %697 = vmatprep.mubr.f32.mxu0 0.0
  %698 = vmatmul.mubr.f32.gmra.mrb[0].mxu0 %v592
  %v699 = vpop.f32.mrb[0].mxu0
  %v700 = vadd.f32 %v320, %v699
  %v701 = vpop.f32.mrb[0].mxu0
  %702 = vmatprep.mubr.f32.mxu0 0.0
  %703 = vmatmul.mubr.f32.gmra.mrb[0].mxu0 %v595
  %v704 = vpop.f32.mrb[0].mxu0
  %v705 = vadd.f32 %v321, %v704
  %v706 = vpop.f32.mrb[0].mxu0
  %707 = vdwg.mxu0
  %vm708 = vcmask 130048
  %v709 = vsel %vm708, %v670, -inf
  %710 = vmax.xlane.f32.xlu0 %v709
  %v711 = vpop.xlane.xlu0 %710
  %v712 = vsel %vm708, %v675, -inf
  %713 = vmax.xlane.f32.xlu0 %v712
  %v714 = vpop.xlane.xlu0 %713
  %v715 = vsel %vm708, %v680, -inf
  %716 = vmax.xlane.f32.xlu0 %v715
  %v717 = vpop.xlane.xlu0 %716
  %v718 = vsel %vm708, %v685, -inf
  %719 = vmax.xlane.f32.xlu0 %v718
  %v720 = vpop.xlane.xlu0 %719
  %v721 = vsel %vm708, %v690, -inf
  %722 = vmax.xlane.f32.xlu0 %v721
  %v723 = vpop.xlane.xlu0 %722
  %v724 = vsel %vm708, %v695, -inf
  %725 = vmax.xlane.f32.xlu0 %v724
  %v726 = vpop.xlane.xlu0 %725
  %v727 = vsel %vm708, %v700, -inf
  %728 = vmax.xlane.f32.xlu0 %v727
  %v729 = vpop.xlane.xlu0 %728
  %v730 = vsel %vm708, %v705, -inf
  %731 = vmax.xlane.f32.xlu0 %v730
  %v732 = vpop.xlane.xlu0 %731
  %v733 = vsub.f32 %v670, %v711
  %v734 = vsub.f32 %v675, %v714
  %v735 = vsub.f32 %v680, %v717
  %v736 = vsub.f32 %v685, %v720
  %v737 = vsub.f32 %v690, %v723
  %v738 = vsub.f32 %v695, %v726
  %v739 = vsub.f32 %v700, %v729
  %v740 = vsub.f32 %v705, %v732
  %v741 = vmul.f32 %v733, 1.442695
  %v742 = vpow.pop %v741
  %v743 = vmul.f32 %v734, 1.442695
  %v744 = vpow.pop %v743
  %v745 = vmul.f32 %v735, 1.442695
  %v746 = vpow.pop %v745
  %v747 = vmul.f32 %v736, 1.442695
  %v748 = vpow.pop %v747
  %v749 = vmul.f32 %v737, 1.442695
  %v750 = vpow.pop %v749
  %v751 = vmul.f32 %v738, 1.442695
  %v752 = vpow.pop %v751
  %v753 = vmul.f32 %v739, 1.442695
  %v754 = vpow.pop %v753
  %v755 = vmul.f32 %v740, 1.442695
  %v756 = vpow.pop %v755
  %v757 = vsel %vm708, %v742, 0.0
  %758 = vadd.xlane.f32.xlu0 %v757
  %v759 = vpop.xlane.xlu0 %758
  %v760 = vsel %vm708, %v744, 0.0
  %761 = vadd.xlane.f32.xlu0 %v760
  %v762 = vpop.xlane.xlu0 %761
  %v763 = vsel %vm708, %v746, 0.0
  %764 = vadd.xlane.f32.xlu0 %v763
  %v765 = vpop.xlane.xlu0 %764
  %v766 = vsel %vm708, %v748, 0.0
  %767 = vadd.xlane.f32.xlu0 %v766
  %v768 = vpop.xlane.xlu0 %767
  %v769 = vsel %vm708, %v750, 0.0
  %770 = vadd.xlane.f32.xlu0 %v769
  %v771 = vpop.xlane.xlu0 %770
  %v772 = vsel %vm708, %v752, 0.0
  %773 = vadd.xlane.f32.xlu0 %v772
  %v774 = vpop.xlane.xlu0 %773
  %v775 = vsel %vm708, %v754, 0.0
  %776 = vadd.xlane.f32.xlu0 %v775
  %v777 = vpop.xlane.xlu0 %776
  %v778 = vsel %vm708, %v756, 0.0
  %779 = vadd.xlane.f32.xlu0 %v778
  %v780 = vpop.xlane.xlu0 %779
  %v781 = vrcp.pop %v759
  %v782 = vrcp.pop %v762
  %v783 = vrcp.pop %v765
  %v784 = vrcp.pop %v768
  %v785 = vrcp.pop %v771
  %v786 = vrcp.pop %v774
  %v787 = vrcp.pop %v777
  %v788 = vrcp.pop %v780
  %v789 = vmul.f32 %v742, %v781
  %v790 = vmul.f32 %v744, %v782
  %v791 = vmul.f32 %v746, %v783
  %v792 = vmul.f32 %v748, %v784
  %v793 = vmul.f32 %v750, %v785
  %v794 = vmul.f32 %v752, %v786
  %v795 = vmul.f32 %v754, %v787
  %v796 = vmul.f32 %v756, %v788
  %v798 = vsel %vm708, %v789, 0
  %v801 = vsel %vm708, %v790, 0
  %v804 = vsel %vm708, %v791, 0
  %v807 = vsel %vm708, %v792, 0
  %v810 = vsel %vm708, %v793, 0
  %v813 = vsel %vm708, %v794, 0
  %v816 = vsel %vm708, %v795, 0
  %v819 = vsel %vm708, %v796, 0
  %821 = vmatprep.subr.mxu0 0.0
  %822 = vmatpush1.msra.mxu0 %v557
  %823 = vmatprep.subr.mxu0 0.0
  %824 = vmatpush1.msra.mxu0 %v562
  %825 = vmatprep.subr.mxu0 0.0
  %826 = vmatpush1.msra.mxu0 0.0
  %827 = vmatprep.subr.mxu0 0.0
  %828 = vmatpush1.msra.mxu0 0.0
  %829 = vmatprep.subr.mxu0 0.0
  %830 = vmatpush1.msra.mxu0 0.0
  %831 = vmatprep.subr.mxu0 0.0
  %832 = vmatpush1.msra.mxu0 0.0
  %833 = vmatprep.subr.mxu0 0.0
  %834 = vmatpush1.msra.mxu0 0.0
  %835 = vmatprep.subr.mxu0 0.0
  %836 = vmatpush1.msra.mxu0 0.0
  %837 = vmatprep.subr.mxu0 0.0
  %838 = vmatpush1.msra.mxu0 0.0
  %839 = vmatprep.subr.mxu0 0.0
  %840 = vmatpush1.msra.mxu0 0.0
  %841 = vmatprep.subr.mxu0 0.0
  %842 = vmatpush1.msra.mxu0 0.0
  %843 = vmatprep.subr.mxu0 0.0
  %844 = vmatpush1.msra.mxu0 0.0
  %845 = vmatprep.subr.mxu0 0.0
  %846 = vmatpush1.msra.mxu0 0.0
  %847 = vmatprep.subr.mxu0 0.0
  %848 = vmatpush1.msra.mxu0 0.0
  %849 = vmatprep.subr.mxu0 0.0
  %850 = vmatpush1.msra.mxu0 0.0
  %851 = vmatprep.subr.mxu0 0.0
  %852 = vmatpush1.msra.mxu0 0.0
  %853 = vmatprep.subr.mxu0 0.0
  %854 = vmatpush1.msra.mxu0 0.0
  %855 = vmatprep.subr.mxu0 0.0
  %856 = vmatpush1.msra.mxu0 0.0
  %857 = vmatprep.subr.mxu0 0.0
  %858 = vmatpush1.msra.mxu0 0.0
  %859 = vmatprep.subr.mxu0 0.0
  %860 = vmatpush1.msra.mxu0 0.0
  %861 = vmatprep.subr.mxu0 0.0
  %862 = vmatpush1.msra.mxu0 0.0
  %863 = vmatprep.subr.mxu0 0.0
  %864 = vmatpush1.msra.mxu0 0.0
  %865 = vmatprep.subr.mxu0 0.0
  %866 = vmatpush1.msra.mxu0 0.0
  %867 = vmatprep.subr.mxu0 0.0
  %868 = vmatpush1.msra.mxu0 0.0
  %869 = vmatprep.subr.mxu0 0.0
  %870 = vmatpush1.msra.mxu0 0.0
  %871 = vmatprep.subr.mxu0 0.0
  %872 = vmatpush1.msra.mxu0 0.0
  %873 = vmatprep.subr.mxu0 0.0
  %874 = vmatpush1.msra.mxu0 0.0
  %875 = vmatprep.subr.mxu0 0.0
  %876 = vmatpush1.msra.mxu0 0.0
  %877 = vmatprep.subr.mxu0 0.0
  %878 = vmatpush1.msra.mxu0 0.0
  %879 = vmatprep.subr.mxu0 0.0
  %880 = vmatpush1.msra.mxu0 0.0
  %881 = vmatprep.subr.mxu0 0.0
  %882 = vmatpush1.msra.mxu0 0.0
  %883 = vmatprep.subr.mxu0 0.0
  %884 = vmatpush1.msra.mxu0 0.0
  %885 = vmatprep.mubr.f32.mxu0 0.0
  %886 = vmatmul.mubr.f32.gmra.mrb[0].mxu0 %v798
  %v887 = vpop.f32.mrb[0].mxu0
  %v888 = vadd.f32 0.0, %v887
  %v889 = vpop.f32.mrb[0].mxu0
  %890 = vmatprep.mubr.f32.mxu0 0.0
  %891 = vmatmul.mubr.f32.gmra.mrb[0].mxu0 %v801
  %v892 = vpop.f32.mrb[0].mxu0
  %v893 = vadd.f32 0.0, %v892
  %v894 = vpop.f32.mrb[0].mxu0
  %895 = vmatprep.mubr.f32.mxu0 0.0
  %896 = vmatmul.mubr.f32.gmra.mrb[0].mxu0 %v804
  %v897 = vpop.f32.mrb[0].mxu0
  %v898 = vadd.f32 0.0, %v897
  %v899 = vpop.f32.mrb[0].mxu0
  %900 = vmatprep.mubr.f32.mxu0 0.0
  %901 = vmatmul.mubr.f32.gmra.mrb[0].mxu0 %v807
  %v902 = vpop.f32.mrb[0].mxu0
  %v903 = vadd.f32 0.0, %v902
  %v904 = vpop.f32.mrb[0].mxu0
  %905 = vmatprep.mubr.f32.mxu0 0.0
  %906 = vmatmul.mubr.f32.gmra.mrb[0].mxu0 %v810
  %v907 = vpop.f32.mrb[0].mxu0
  %v908 = vadd.f32 0.0, %v907
  %v909 = vpop.f32.mrb[0].mxu0
  %910 = vmatprep.mubr.f32.mxu0 0.0
  %911 = vmatmul.mubr.f32.gmra.mrb[0].mxu0 %v813
  %v912 = vpop.f32.mrb[0].mxu0
  %v913 = vadd.f32 0.0, %v912
  %v914 = vpop.f32.mrb[0].mxu0
  %915 = vmatprep.mubr.f32.mxu0 0.0
  %916 = vmatmul.mubr.f32.gmra.mrb[0].mxu0 %v816
  %v917 = vpop.f32.mrb[0].mxu0
  %v918 = vadd.f32 0.0, %v917
  %v919 = vpop.f32.mrb[0].mxu0
  %920 = vmatprep.mubr.f32.mxu0 0.0
  %921 = vmatmul.mubr.f32.gmra.mrb[0].mxu0 %v819
  %v922 = vpop.f32.mrb[0].mxu0
  %v923 = vadd.f32 0.0, %v922
  %v924 = vpop.f32.mrb[0].mxu0
  %925 = vdwg.mxu0
  %v926 = vmul.f32 %v888, %v306
  %v927 = vmul.f32 %v893, %v307
  %v928 = vmul.f32 %v898, %v308
  %v929 = vmul.f32 %v903, %v309
  %v930 = vmul.f32 %v908, %v310
  %v931 = vmul.f32 %v913, %v311
  %v932 = vmul.f32 %v918, %v312
  %v933 = vmul.f32 %v923, %v313
  %v934 = vld [vmem:[%s2 + $0x1e8] sm:$0xff]
  %v935 = vld [vmem:[%s2 + $0x1f0] sm:$0xff]
  %v936 = vld [vmem:[%s2 + $0x1f8] sm:$0xff]
  %v937 = vld [vmem:[%s2 + $0x200] sm:$0xff]
  %v939 = vsel %vm64, %v926, 0
  %v942 = vsel %vm64, %v927, 0
  %v945 = vsel %vm64, %v928, 0
  %v948 = vsel %vm64, %v929, 0
  %v951 = vsel %vm64, %v930, 0
  %v954 = vsel %vm64, %v931, 0
  %v957 = vsel %vm64, %v932, 0
  %v960 = vsel %vm64, %v933, 0
  %962 = vmatprep.subr.mxu0 0.0
  %963 = vmatpush1.msra.mxu0 %v934
  %964 = vmatprep.subr.mxu0 0.0
  %965 = vmatpush1.msra.mxu0 %v935
  %966 = vmatprep.subr.mxu0 0.0
  %967 = vmatpush1.msra.mxu0 %v936
  %968 = vmatprep.subr.mxu0 0.0
  %969 = vmatpush1.msra.mxu0 %v937
  %970 = vmatprep.subr.mxu0 0.0
  %971 = vmatpush1.msra.mxu0 0.0
  %972 = vmatprep.subr.mxu0 0.0
  %973 = vmatpush1.msra.mxu0 0.0
  %974 = vmatprep.subr.mxu0 0.0
  %975 = vmatpush1.msra.mxu0 0.0
  %976 = vmatprep.subr.mxu0 0.0
  %977 = vmatpush1.msra.mxu0 0.0
  %978 = vmatprep.subr.mxu0 0.0
  %979 = vmatpush1.msra.mxu0 0.0
  %980 = vmatprep.subr.mxu0 0.0
  %981 = vmatpush1.msra.mxu0 0.0
  %982 = vmatprep.subr.mxu0 0.0
  %983 = vmatpush1.msra.mxu0 0.0
  %984 = vmatprep.subr.mxu0 0.0
  %985 = vmatpush1.msra.mxu0 0.0
  %986 = vmatprep.subr.mxu0 0.0
  %987 = vmatpush1.msra.mxu0 0.0
  %988 = vmatprep.subr.mxu0 0.0
  %989 = vmatpush1.msra.mxu0 0.0
  %990 = vmatprep.subr.mxu0 0.0
  %991 = vmatpush1.msra.mxu0 0.0
  %992 = vmatprep.subr.mxu0 0.0
  %993 = vmatpush1.msra.mxu0 0.0
  %994 = vmatprep.subr.mxu0 0.0
  %995 = vmatpush1.msra.mxu0 0.0
  %996 = vmatprep.subr.mxu0 0.0
  %997 = vmatpush1.msra.mxu0 0.0
  %998 = vmatprep.subr.mxu0 0.0
  %999 = vmatpush1.msra.mxu0 0.0
  %1000 = vmatprep.subr.mxu0 0.0
  %1001 = vmatpush1.msra.mxu0 0.0
  %1002 = vmatprep.subr.mxu0 0.0
  %1003 = vmatpush1.msra.mxu0 0.0
  %1004 = vmatprep.subr.mxu0 0.0
  %1005 = vmatpush1.msra.mxu0 0.0
  %1006 = vmatprep.subr.mxu0 0.0
  %1007 = vmatpush1.msra.mxu0 0.0
  %1008 = vmatprep.subr.mxu0 0.0
  %1009 = vmatpush1.msra.mxu0 0.0
  %1010 = vmatprep.subr.mxu0 0.0
  %1011 = vmatpush1.msra.mxu0 0.0
  %1012 = vmatprep.subr.mxu0 0.0
  %1013 = vmatpush1.msra.mxu0 0.0
  %1014 = vmatprep.subr.mxu0 0.0
  %1015 = vmatpush1.msra.mxu0 0.0
  %1016 = vmatprep.subr.mxu0 0.0
  %1017 = vmatpush1.msra.mxu0 0.0
  %1018 = vmatprep.subr.mxu0 0.0
  %1019 = vmatpush1.msra.mxu0 0.0
  %1020 = vmatprep.subr.mxu0 0.0
  %1021 = vmatpush1.msra.mxu0 0.0
  %1022 = vmatprep.subr.mxu0 0.0
  %1023 = vmatpush1.msra.mxu0 0.0
  %1024 = vmatprep.subr.mxu0 0.0
  %1025 = vmatpush1.msra.mxu0 0.0
  %1026 = vmatprep.mubr.f32.mxu0 0.0
  %1027 = vmatmul.mubr.f32.gmra.mrb[0].mxu0 %v939
  %v1028 = vpop.f32.mrb[0].mxu0
  %v1029 = vadd.f32 0.0, %v1028
  %v1030 = vpop.f32.mrb[0].mxu0
  %1031 = vmatprep.mubr.f32.mxu0 0.0
  %1032 = vmatmul.mubr.f32.gmra.mrb[0].mxu0 %v942
  %v1033 = vpop.f32.mrb[0].mxu0
  %v1034 = vadd.f32 0.0, %v1033
  %v1035 = vpop.f32.mrb[0].mxu0
  %1036 = vmatprep.mubr.f32.mxu0 0.0
  %1037 = vmatmul.mubr.f32.gmra.mrb[0].mxu0 %v945
  %v1038 = vpop.f32.mrb[0].mxu0
  %v1039 = vadd.f32 0.0, %v1038
  %v1040 = vpop.f32.mrb[0].mxu0
  %1041 = vmatprep.mubr.f32.mxu0 0.0
  %1042 = vmatmul.mubr.f32.gmra.mrb[0].mxu0 %v948
  %v1043 = vpop.f32.mrb[0].mxu0
  %v1044 = vadd.f32 0.0, %v1043
  %v1045 = vpop.f32.mrb[0].mxu0
  %1046 = vmatprep.mubr.f32.mxu0 0.0
  %1047 = vmatmul.mubr.f32.gmra.mrb[0].mxu0 %v951
  %v1048 = vpop.f32.mrb[0].mxu0
  %v1049 = vadd.f32 0.0, %v1048
  %v1050 = vpop.f32.mrb[0].mxu0
  %1051 = vmatprep.mubr.f32.mxu0 0.0
  %1052 = vmatmul.mubr.f32.gmra.mrb[0].mxu0 %v954
  %v1053 = vpop.f32.mrb[0].mxu0
  %v1054 = vadd.f32 0.0, %v1053
  %v1055 = vpop.f32.mrb[0].mxu0
  %1056 = vmatprep.mubr.f32.mxu0 0.0
  %1057 = vmatmul.mubr.f32.gmra.mrb[0].mxu0 %v957
  %v1058 = vpop.f32.mrb[0].mxu0
  %v1059 = vadd.f32 0.0, %v1058
  %v1060 = vpop.f32.mrb[0].mxu0
  %1061 = vmatprep.mubr.f32.mxu0 0.0
  %1062 = vmatmul.mubr.f32.gmra.mrb[0].mxu0 %v960
  %v1063 = vpop.f32.mrb[0].mxu0
  %v1064 = vadd.f32 0.0, %v1063
  %v1065 = vpop.f32.mrb[0].mxu0
  %1066 = vdwg.mxu0
  %v1067 = vadd.f32 %v1029, %v1039
  %v1068 = vadd.f32 %v1034, %v1044
  %v1069 = vadd.f32 %v1067, %v1049
  %v1070 = vadd.f32 %v1068, %v1054
  %v1071 = vadd.f32 %v1069, %v1059
  %v1072 = vadd.f32 %v1070, %v1064
  %v1073 = vadd.f32 %v1071, %v304
  %v1074 = vadd.f32 %v1072, %v305
  %v1075 = vld [vmem:[%s2 + $0x208] sm:$0x3]
  %v1076 = vsel %vm64, %v1073, 0.0
  %1077 = vadd.xlane.f32.xlu0 %v1076
  %v1078 = vpop.xlane.xlu0 %1077
  %v1079 = vsel %vm64, %v1074, 0.0
  %1080 = vadd.xlane.f32.xlu0 %v1079
  %v1081 = vpop.xlane.xlu0 %1080
  %v1082 = vmul.f32 %v1078, %v230
  %v1083 = vmul.f32 %v1081, %v230
  %v1084 = vsub.f32 %v1073, %v1082
  %v1085 = vsub.f32 %v1074, %v1083
  %v1086 = vmul.f32 %v1084, %v1084
  %v1087 = vmul.f32 %v1085, %v1085
  %v1088 = vsel %vm64, %v1086, 0.0
  %1089 = vadd.xlane.f32.xlu0 %v1088
  %v1090 = vpop.xlane.xlu0 %1089
  %v1091 = vsel %vm64, %v1087, 0.0
  %1092 = vadd.xlane.f32.xlu0 %v1091
  %v1093 = vpop.xlane.xlu0 %1092
  %v1094 = vmul.f32 %v1090, %v230
  %v1095 = vmul.f32 %v1093, %v230
  %v1096 = vadd.f32 %v1094, 1e-06
  %v1097 = vadd.f32 %v1095, 1e-06
  %v1098 = vrsqrt.pop %v1096
  %v1099 = vrsqrt.pop %v1097
  %v1100 = vmul.f32 %v1084, %v1098
  %v1101 = vmul.f32 %v1085, %v1099
  %v1102 = vlaneseq
  %v1103 = vshrl.u32 %v1102, 7
  %v1104 = vsub.s32 0, %v1103
  %v1105 = vrot.slane %v1075, %v1104
  %v1106 = vmul.f32 %v1100, %v1105
  %v1107 = vmul.f32 %v1101, %v1105
  %v1108 = vlaneseq
  %v1109 = vshrl.u32 %v1108, 7
  %v1110 = vsub.s32 1, %v1109
  %v1111 = vrot.slane %v1075, %v1110
  %v1112 = vadd.f32 %v1106, %v1111
  %v1113 = vadd.f32 %v1107, %v1111
  %v1114 = vld [vmem:[%s3] sm:$0xff]
  %v1115 = vld [vmem:[%s3 + $0x8] sm:$0xff]
  %v1116 = vld [vmem:[%s3 + $0x10] sm:$0xff]
  %v1117 = vld [vmem:[%s3 + $0x18] sm:$0xff]
  %v1118 = vld [vmem:[%s3 + $0x20] sm:$0x1]
  %v1119 = vlaneseq
  %v1120 = vshrl.u32 %v1119, 7
  %v1121 = vsub.s32 0, %v1120
  %v1122 = vrot.slane %v1118, %v1121
  %v1124 = vsel %vm64, %v1112, 0
  %v1127 = vsel %vm64, %v1113, 0
  %1129 = vmatprep.subr.mxu0 0.0
  %1130 = vmatpush1.msra.mxu0 %v1114
  %1131 = vmatprep.subr.mxu0 0.0
  %1132 = vmatpush1.msra.mxu0 %v1115
  %1133 = vmatprep.subr.mxu0 0.0
  %1134 = vmatpush1.msra.mxu0 %v1116
  %1135 = vmatprep.subr.mxu0 0.0
  %1136 = vmatpush1.msra.mxu0 %v1117
  %1137 = vmatprep.subr.mxu0 0.0
  %1138 = vmatpush1.msra.mxu0 0.0
  %1139 = vmatprep.subr.mxu0 0.0
  %1140 = vmatpush1.msra.mxu0 0.0
  %1141 = vmatprep.subr.mxu0 0.0
  %1142 = vmatpush1.msra.mxu0 0.0
  %1143 = vmatprep.subr.mxu0 0.0
  %1144 = vmatpush1.msra.mxu0 0.0
  %1145 = vmatprep.subr.mxu0 0.0
  %1146 = vmatpush1.msra.mxu0 0.0
  %1147 = vmatprep.subr.mxu0 0.0
  %1148 = vmatpush1.msra.mxu0 0.0
  %1149 = vmatprep.subr.mxu0 0.0
  %1150 = vmatpush1.msra.mxu0 0.0
  %1151 = vmatprep.subr.mxu0 0.0
  %1152 = vmatpush1.msra.mxu0 0.0
  %1153 = vmatprep.subr.mxu0 0.0
  %1154 = vmatpush1.msra.mxu0 0.0
  %1155 = vmatprep.subr.mxu0 0.0
  %1156 = vmatpush1.msra.mxu0 0.0
  %1157 = vmatprep.subr.mxu0 0.0
  %1158 = vmatpush1.msra.mxu0 0.0
  %1159 = vmatprep.subr.mxu0 0.0
  %1160 = vmatpush1.msra.mxu0 0.0
  %1161 = vmatprep.subr.mxu0 0.0
  %1162 = vmatpush1.msra.mxu0 0.0
  %1163 = vmatprep.subr.mxu0 0.0
  %1164 = vmatpush1.msra.mxu0 0.0
  %1165 = vmatprep.subr.mxu0 0.0
  %1166 = vmatpush1.msra.mxu0 0.0
  %1167 = vmatprep.subr.mxu0 0.0
  %1168 = vmatpush1.msra.mxu0 0.0
  %1169 = vmatprep.subr.mxu0 0.0
  %1170 = vmatpush1.msra.mxu0 0.0
  %1171 = vmatprep.subr.mxu0 0.0
  %1172 = vmatpush1.msra.mxu0 0.0
  %1173 = vmatprep.subr.mxu0 0.0
  %1174 = vmatpush1.msra.mxu0 0.0
  %1175 = vmatprep.subr.mxu0 0.0
  %1176 = vmatpush1.msra.mxu0 0.0
  %1177 = vmatprep.subr.mxu0 0.0
  %1178 = vmatpush1.msra.mxu0 0.0
  %1179 = vmatprep.subr.mxu0 0.0
  %1180 = vmatpush1.msra.mxu0 0.0
  %1181 = vmatprep.subr.mxu0 0.0
  %1182 = vmatpush1.msra.mxu0 0.0
  %1183 = vmatprep.subr.mxu0 0.0
  %1184 = vmatpush1.msra.mxu0 0.0
  %1185 = vmatprep.subr.mxu0 0.0
  %1186 = vmatpush1.msra.mxu0 0.0
  %1187 = vmatprep.subr.mxu0 0.0
  %1188 = vmatpush1.msra.mxu0 0.0
  %1189 = vmatprep.subr.mxu0 0.0
  %1190 = vmatpush1.msra.mxu0 0.0
  %1191 = vmatprep.subr.mxu0 0.0
  %1192 = vmatpush1.msra.mxu0 0.0
  %1193 = vmatprep.mubr.f32.mxu0 0.0
  %1194 = vmatmul.mubr.f32.gmra.mrb[0].mxu0 %v1124
  %v1195 = vpop.f32.mrb[0].mxu0
  %v1196 = vadd.f32 %v1122, %v1195
  %v1197 = vpop.f32.mrb[0].mxu0
  %1198 = vmatprep.mubr.f32.mxu0 0.0
  %1199 = vmatmul.mubr.f32.gmra.mrb[0].mxu0 %v1127
  %v1200 = vpop.f32.mrb[0].mxu0
  %v1201 = vadd.f32 %v1122, %v1200
  %v1202 = vpop.f32.mrb[0].mxu0
  %1203 = vdwg.mxu0
  %v1204 = vmax.f32 %v1196, 0.0
  %v1205 = vmax.f32 %v1201, 0.0
  %v1206 = vld [vmem:[%s2 + $0x210] sm:$0xff]
  %v1207 = vld [vmem:[%s2 + $0x218] sm:$0xff]
  %v1208 = vld [vmem:[%s2 + $0x220] sm:$0xff]
  %v1209 = vld [vmem:[%s2 + $0x228] sm:$0xff]
  %v1210 = vld [vmem:[%s2 + $0x230] sm:$0xff]
  %v1211 = vld [vmem:[%s2 + $0x238] sm:$0xff]
  %v1212 = vld [vmem:[%s2 + $0x240] sm:$0xff]
  %v1213 = vld [vmem:[%s2 + $0x248] sm:$0xff]
  %v1214 = vld [vmem:[%s2 + $0x250] sm:$0x1]
  %v1215 = vlaneseq
  %v1216 = vshrl.u32 %v1215, 7
  %v1217 = vsub.s32 0, %v1216
  %v1218 = vrot.slane %v1214, %v1217
  %vm1219 = vcmask 523264
  %v1221 = vsel %vm1219, %v1204, 0
  %v1224 = vsel %vm1219, %v1205, 0
  %1226 = vmatprep.subr.mxu0 0.0
  %1227 = vmatpush1.msra.mxu0 %v1206
  %1228 = vmatprep.subr.mxu0 0.0
  %1229 = vmatpush1.msra.mxu0 %v1207
  %1230 = vmatprep.subr.mxu0 0.0
  %1231 = vmatpush1.msra.mxu0 %v1208
  %1232 = vmatprep.subr.mxu0 0.0
  %1233 = vmatpush1.msra.mxu0 %v1209
  %1234 = vmatprep.subr.mxu0 0.0
  %1235 = vmatpush1.msra.mxu0 %v1210
  %1236 = vmatprep.subr.mxu0 0.0
  %1237 = vmatpush1.msra.mxu0 %v1211
  %1238 = vmatprep.subr.mxu0 0.0
  %1239 = vmatpush1.msra.mxu0 %v1212
  %1240 = vmatprep.subr.mxu0 0.0
  %1241 = vmatpush1.msra.mxu0 %v1213
  %1242 = vmatprep.subr.mxu0 0.0
  %1243 = vmatpush1.msra.mxu0 0.0
  %1244 = vmatprep.subr.mxu0 0.0
  %1245 = vmatpush1.msra.mxu0 0.0
  %1246 = vmatprep.subr.mxu0 0.0
  %1247 = vmatpush1.msra.mxu0 0.0
  %1248 = vmatprep.subr.mxu0 0.0
  %1249 = vmatpush1.msra.mxu0 0.0
  %1250 = vmatprep.subr.mxu0 0.0
  %1251 = vmatpush1.msra.mxu0 0.0
  %1252 = vmatprep.subr.mxu0 0.0
  %1253 = vmatpush1.msra.mxu0 0.0
  %1254 = vmatprep.subr.mxu0 0.0
  %1255 = vmatpush1.msra.mxu0 0.0
  %1256 = vmatprep.subr.mxu0 0.0
  %1257 = vmatpush1.msra.mxu0 0.0
  %1258 = vmatprep.subr.mxu0 0.0
  %1259 = vmatpush1.msra.mxu0 0.0
  %1260 = vmatprep.subr.mxu0 0.0
  %1261 = vmatpush1.msra.mxu0 0.0
  %1262 = vmatprep.subr.mxu0 0.0
  %1263 = vmatpush1.msra.mxu0 0.0
  %1264 = vmatprep.subr.mxu0 0.0
  %1265 = vmatpush1.msra.mxu0 0.0
  %1266 = vmatprep.subr.mxu0 0.0
  %1267 = vmatpush1.msra.mxu0 0.0
  %1268 = vmatprep.subr.mxu0 0.0
  %1269 = vmatpush1.msra.mxu0 0.0
  %1270 = vmatprep.subr.mxu0 0.0
  %1271 = vmatpush1.msra.mxu0 0.0
  %1272 = vmatprep.subr.mxu0 0.0
  %1273 = vmatpush1.msra.mxu0 0.0
  %1274 = vmatprep.subr.mxu0 0.0
  %1275 = vmatpush1.msra.mxu0 0.0
  %1276 = vmatprep.subr.mxu0 0.0
  %1277 = vmatpush1.msra.mxu0 0.0
  %1278 = vmatprep.subr.mxu0 0.0
  %1279 = vmatpush1.msra.mxu0 0.0
  %1280 = vmatprep.subr.mxu0 0.0
  %1281 = vmatpush1.msra.mxu0 0.0
  %1282 = vmatprep.subr.mxu0 0.0
  %1283 = vmatpush1.msra.mxu0 0.0
  %1284 = vmatprep.subr.mxu0 0.0
  %1285 = vmatpush1.msra.mxu0 0.0
  %1286 = vmatprep.subr.mxu0 0.0
  %1287 = vmatpush1.msra.mxu0 0.0
  %1288 = vmatprep.subr.mxu0 0.0
  %1289 = vmatpush1.msra.mxu0 0.0
  %1290 = vmatprep.mubr.f32.mxu0 0.0
  %1291 = vmatmul.mubr.f32.gmra.mrb[0].mxu0 %v1221
  %v1292 = vpop.f32.mrb[0].mxu0
  %v1293 = vadd.f32 %v1218, %v1292
  %v1294 = vpop.f32.mrb[0].mxu0
  %1295 = vmatprep.mubr.f32.mxu0 0.0
  %1296 = vmatmul.mubr.f32.gmra.mrb[0].mxu0 %v1224
  %v1297 = vpop.f32.mrb[0].mxu0
  %v1298 = vadd.f32 %v1218, %v1297
  %v1299 = vpop.f32.mrb[0].mxu0
  %1300 = vdwg.mxu0
  %v1301 = vadd.f32 %v1293, %v1112
  %v1302 = vadd.f32 %v1298, %v1113
  %v1303 = vld [vmem:[%s2 + $0x258] sm:$0x3]
  %v1304 = vsel %vm64, %v1301, 0.0
  %1305 = vadd.xlane.f32.xlu0 %v1304
  %v1306 = vpop.xlane.xlu0 %1305
  %v1307 = vsel %vm64, %v1302, 0.0
  %1308 = vadd.xlane.f32.xlu0 %v1307
  %v1309 = vpop.xlane.xlu0 %1308
  %v1310 = vmul.f32 %v1306, %v230
  %v1311 = vmul.f32 %v1309, %v230
  %v1312 = vsub.f32 %v1301, %v1310
  %v1313 = vsub.f32 %v1302, %v1311
  %v1314 = vmul.f32 %v1312, %v1312
  %v1315 = vmul.f32 %v1313, %v1313
  %v1316 = vsel %vm64, %v1314, 0.0
  %1317 = vadd.xlane.f32.xlu0 %v1316
  %v1318 = vpop.xlane.xlu0 %1317
  %v1319 = vsel %vm64, %v1315, 0.0
  %1320 = vadd.xlane.f32.xlu0 %v1319
  %v1321 = vpop.xlane.xlu0 %1320
  %v1322 = vmul.f32 %v1318, %v230
  %v1323 = vmul.f32 %v1321, %v230
  %v1324 = vadd.f32 %v1322, 1e-06
  %v1325 = vadd.f32 %v1323, 1e-06
  %v1326 = vrsqrt.pop %v1324
  %v1327 = vrsqrt.pop %v1325
  %v1328 = vmul.f32 %v1312, %v1326
  %v1329 = vmul.f32 %v1313, %v1327
  %v1330 = vlaneseq
  %v1331 = vshrl.u32 %v1330, 7
  %v1332 = vsub.s32 0, %v1331
  %v1333 = vrot.slane %v1303, %v1332
  %v1334 = vmul.f32 %v1328, %v1333
  %v1335 = vmul.f32 %v1329, %v1333
  %v1336 = vlaneseq
  %v1337 = vshrl.u32 %v1336, 7
  %v1338 = vsub.s32 1, %v1337
  %v1339 = vrot.slane %v1303, %v1338
  %v1340 = vadd.f32 %v1334, %v1339
  %v1341 = vadd.f32 %v1335, %v1339
  %v1342 = vld [vmem:[%s2 + $0x260] sm:$0xff]
  %v1343 = vld [vmem:[%s2 + $0x268] sm:$0xff]
  %v1344 = vld [vmem:[%s2 + $0x270] sm:$0xff]
  %v1345 = vld [vmem:[%s2 + $0x278] sm:$0xff]
  %v1347 = vsel %vm64, %v1340, 0
  %v1350 = vsel %vm64, %v1341, 0
  %1352 = vmatprep.subr.mxu0 0.0
  %1353 = vmatpush1.msra.mxu0 %v1342
  %1354 = vmatprep.subr.mxu0 0.0
  %1355 = vmatpush1.msra.mxu0 %v1343
  %1356 = vmatprep.subr.mxu0 0.0
  %1357 = vmatpush1.msra.mxu0 %v1344
  %1358 = vmatprep.subr.mxu0 0.0
  %1359 = vmatpush1.msra.mxu0 %v1345
  %1360 = vmatprep.subr.mxu0 0.0
  %1361 = vmatpush1.msra.mxu0 0.0
  %1362 = vmatprep.subr.mxu0 0.0
  %1363 = vmatpush1.msra.mxu0 0.0
  %1364 = vmatprep.subr.mxu0 0.0
  %1365 = vmatpush1.msra.mxu0 0.0
  %1366 = vmatprep.subr.mxu0 0.0
  %1367 = vmatpush1.msra.mxu0 0.0
  %1368 = vmatprep.subr.mxu0 0.0
  %1369 = vmatpush1.msra.mxu0 0.0
  %1370 = vmatprep.subr.mxu0 0.0
  %1371 = vmatpush1.msra.mxu0 0.0
  %1372 = vmatprep.subr.mxu0 0.0
  %1373 = vmatpush1.msra.mxu0 0.0
  %1374 = vmatprep.subr.mxu0 0.0
  %1375 = vmatpush1.msra.mxu0 0.0
  %1376 = vmatprep.subr.mxu0 0.0
  %1377 = vmatpush1.msra.mxu0 0.0
  %1378 = vmatprep.subr.mxu0 0.0
  %1379 = vmatpush1.msra.mxu0 0.0
  %1380 = vmatprep.subr.mxu0 0.0
  %1381 = vmatpush1.msra.mxu0 0.0
  %1382 = vmatprep.subr.mxu0 0.0
  %1383 = vmatpush1.msra.mxu0 0.0
  %1384 = vmatprep.subr.mxu0 0.0
  %1385 = vmatpush1.msra.mxu0 0.0
  %1386 = vmatprep.subr.mxu0 0.0
  %1387 = vmatpush1.msra.mxu0 0.0
  %1388 = vmatprep.subr.mxu0 0.0
  %1389 = vmatpush1.msra.mxu0 0.0
  %1390 = vmatprep.subr.mxu0 0.0
  %1391 = vmatpush1.msra.mxu0 0.0
  %1392 = vmatprep.subr.mxu0 0.0
  %1393 = vmatpush1.msra.mxu0 0.0
  %1394 = vmatprep.subr.mxu0 0.0
  %1395 = vmatpush1.msra.mxu0 0.0
  %1396 = vmatprep.subr.mxu0 0.0
  %1397 = vmatpush1.msra.mxu0 0.0
  %1398 = vmatprep.subr.mxu0 0.0
  %1399 = vmatpush1.msra.mxu0 0.0
  %1400 = vmatprep.subr.mxu0 0.0
  %1401 = vmatpush1.msra.mxu0 0.0
  %1402 = vmatprep.subr.mxu0 0.0
  %1403 = vmatpush1.msra.mxu0 0.0
  %1404 = vmatprep.subr.mxu0 0.0
  %1405 = vmatpush1.msra.mxu0 0.0
  %1406 = vmatprep.subr.mxu0 0.0
  %1407 = vmatpush1.msra.mxu0 0.0
  %1408 = vmatprep.subr.mxu0 0.0
  %1409 = vmatpush1.msra.mxu0 0.0
  %1410 = vmatprep.subr.mxu0 0.0
  %1411 = vmatpush1.msra.mxu0 0.0
  %1412 = vmatprep.subr.mxu0 0.0
  %1413 = vmatpush1.msra.mxu0 0.0
  %1414 = vmatprep.subr.mxu0 0.0
  %1415 = vmatpush1.msra.mxu0 0.0
  %1416 = vmatprep.mubr.f32.mxu0 0.0
  %1417 = vmatmul.mubr.f32.gmra.mrb[0].mxu0 %v1347
  %v1418 = vpop.f32.mrb[0].mxu0
  %v1419 = vadd.f32 0.0, %v1418
  %v1420 = vpop.f32.mrb[0].mxu0
  %1421 = vmatprep.mubr.f32.mxu0 0.0
  %1422 = vmatmul.mubr.f32.gmra.mrb[0].mxu0 %v1350
  %v1423 = vpop.f32.mrb[0].mxu0
  %v1424 = vadd.f32 0.0, %v1423
  %v1425 = vpop.f32.mrb[0].mxu0
  %1426 = vdwg.mxu0
  %v1427 = vld [vmem:[%s2 + $0x280] sm:$0xff]
  %v1428 = vld [vmem:[%s2 + $0x288] sm:$0xff]
  %v1429 = vld [vmem:[%s2 + $0x290] sm:$0xff]
  %v1430 = vld [vmem:[%s2 + $0x298] sm:$0xff]
  %1431 = vmatprep.subr.mxu0 0.0
  %1432 = vmatpush1.msra.mxu0 %v1427
  %1433 = vmatprep.subr.mxu0 0.0
  %1434 = vmatpush1.msra.mxu0 %v1428
  %1435 = vmatprep.subr.mxu0 0.0
  %1436 = vmatpush1.msra.mxu0 %v1429
  %1437 = vmatprep.subr.mxu0 0.0
  %1438 = vmatpush1.msra.mxu0 %v1430
  %1439 = vmatprep.subr.mxu0 0.0
  %1440 = vmatpush1.msra.mxu0 0.0
  %1441 = vmatprep.subr.mxu0 0.0
  %1442 = vmatpush1.msra.mxu0 0.0
  %1443 = vmatprep.subr.mxu0 0.0
  %1444 = vmatpush1.msra.mxu0 0.0
  %1445 = vmatprep.subr.mxu0 0.0
  %1446 = vmatpush1.msra.mxu0 0.0
  %1447 = vmatprep.subr.mxu0 0.0
  %1448 = vmatpush1.msra.mxu0 0.0
  %1449 = vmatprep.subr.mxu0 0.0
  %1450 = vmatpush1.msra.mxu0 0.0
  %1451 = vmatprep.subr.mxu0 0.0
  %1452 = vmatpush1.msra.mxu0 0.0
  %1453 = vmatprep.subr.mxu0 0.0
  %1454 = vmatpush1.msra.mxu0 0.0
  %1455 = vmatprep.subr.mxu0 0.0
  %1456 = vmatpush1.msra.mxu0 0.0
  %1457 = vmatprep.subr.mxu0 0.0
  %1458 = vmatpush1.msra.mxu0 0.0
  %1459 = vmatprep.subr.mxu0 0.0
  %1460 = vmatpush1.msra.mxu0 0.0
  %1461 = vmatprep.subr.mxu0 0.0
  %1462 = vmatpush1.msra.mxu0 0.0
  %1463 = vmatprep.subr.mxu0 0.0
  %1464 = vmatpush1.msra.mxu0 0.0
  %1465 = vmatprep.subr.mxu0 0.0
  %1466 = vmatpush1.msra.mxu0 0.0
  %1467 = vmatprep.subr.mxu0 0.0
  %1468 = vmatpush1.msra.mxu0 0.0
  %1469 = vmatprep.subr.mxu0 0.0
  %1470 = vmatpush1.msra.mxu0 0.0
  %1471 = vmatprep.subr.mxu0 0.0
  %1472 = vmatpush1.msra.mxu0 0.0
  %1473 = vmatprep.subr.mxu0 0.0
  %1474 = vmatpush1.msra.mxu0 0.0
  %1475 = vmatprep.subr.mxu0 0.0
  %1476 = vmatpush1.msra.mxu0 0.0
  %1477 = vmatprep.subr.mxu0 0.0
  %1478 = vmatpush1.msra.mxu0 0.0
  %1479 = vmatprep.subr.mxu0 0.0
  %1480 = vmatpush1.msra.mxu0 0.0
  %1481 = vmatprep.subr.mxu0 0.0
  %1482 = vmatpush1.msra.mxu0 0.0
  %1483 = vmatprep.subr.mxu0 0.0
  %1484 = vmatpush1.msra.mxu0 0.0
  %1485 = vmatprep.subr.mxu0 0.0
  %1486 = vmatpush1.msra.mxu0 0.0
  %1487 = vmatprep.subr.mxu0 0.0
  %1488 = vmatpush1.msra.mxu0 0.0
  %1489 = vmatprep.subr.mxu0 0.0
  %1490 = vmatpush1.msra.mxu0 0.0
  %1491 = vmatprep.subr.mxu0 0.0
  %1492 = vmatpush1.msra.mxu0 0.0
  %1493 = vmatprep.subr.mxu0 0.0
  %1494 = vmatpush1.msra.mxu0 0.0
  %1495 = vmatprep.mubr.f32.mxu0 0.0
  %1496 = vmatmul.mubr.f32.gmra.mrb[0].mxu0 %v1347
  %v1497 = vpop.f32.mrb[0].mxu0
  %v1498 = vadd.f32 0.0, %v1497
  %v1499 = vpop.f32.mrb[0].mxu0
  %1500 = vmatprep.mubr.f32.mxu0 0.0
  %1501 = vmatmul.mubr.f32.gmra.mrb[0].mxu0 %v1350
  %v1502 = vpop.f32.mrb[0].mxu0
  %v1503 = vadd.f32 0.0, %v1502
  %v1504 = vpop.f32.mrb[0].mxu0
  %1505 = vdwg.mxu0
  %v1506 = vld [vmem:[%s2 + $0x2a0] sm:$0xff]
  %v1507 = vld [vmem:[%s2 + $0x2a8] sm:$0xff]
  %v1508 = vld [vmem:[%s2 + $0x2b0] sm:$0xff]
  %v1509 = vld [vmem:[%s2 + $0x2b8] sm:$0xff]
  %1510 = vmatprep.subr.mxu0 0.0
  %1511 = vmatpush1.msra.mxu0 %v1506
  %1512 = vmatprep.subr.mxu0 0.0
  %1513 = vmatpush1.msra.mxu0 %v1507
  %1514 = vmatprep.subr.mxu0 0.0
  %1515 = vmatpush1.msra.mxu0 %v1508
  %1516 = vmatprep.subr.mxu0 0.0
  %1517 = vmatpush1.msra.mxu0 %v1509
  %1518 = vmatprep.subr.mxu0 0.0
  %1519 = vmatpush1.msra.mxu0 0.0
  %1520 = vmatprep.subr.mxu0 0.0
  %1521 = vmatpush1.msra.mxu0 0.0
  %1522 = vmatprep.subr.mxu0 0.0
  %1523 = vmatpush1.msra.mxu0 0.0
  %1524 = vmatprep.subr.mxu0 0.0
  %1525 = vmatpush1.msra.mxu0 0.0
  %1526 = vmatprep.subr.mxu0 0.0
  %1527 = vmatpush1.msra.mxu0 0.0
  %1528 = vmatprep.subr.mxu0 0.0
  %1529 = vmatpush1.msra.mxu0 0.0
  %1530 = vmatprep.subr.mxu0 0.0
  %1531 = vmatpush1.msra.mxu0 0.0
  %1532 = vmatprep.subr.mxu0 0.0
  %1533 = vmatpush1.msra.mxu0 0.0
  %1534 = vmatprep.subr.mxu0 0.0
  %1535 = vmatpush1.msra.mxu0 0.0
  %1536 = vmatprep.subr.mxu0 0.0
  %1537 = vmatpush1.msra.mxu0 0.0
  %1538 = vmatprep.subr.mxu0 0.0
  %1539 = vmatpush1.msra.mxu0 0.0
  %1540 = vmatprep.subr.mxu0 0.0
  %1541 = vmatpush1.msra.mxu0 0.0
  %1542 = vmatprep.subr.mxu0 0.0
  %1543 = vmatpush1.msra.mxu0 0.0
  %1544 = vmatprep.subr.mxu0 0.0
  %1545 = vmatpush1.msra.mxu0 0.0
  %1546 = vmatprep.subr.mxu0 0.0
  %1547 = vmatpush1.msra.mxu0 0.0
  %1548 = vmatprep.subr.mxu0 0.0
  %1549 = vmatpush1.msra.mxu0 0.0
  %1550 = vmatprep.subr.mxu0 0.0
  %1551 = vmatpush1.msra.mxu0 0.0
  %1552 = vmatprep.subr.mxu0 0.0
  %1553 = vmatpush1.msra.mxu0 0.0
  %1554 = vmatprep.subr.mxu0 0.0
  %1555 = vmatpush1.msra.mxu0 0.0
  %1556 = vmatprep.subr.mxu0 0.0
  %1557 = vmatpush1.msra.mxu0 0.0
  %1558 = vmatprep.subr.mxu0 0.0
  %1559 = vmatpush1.msra.mxu0 0.0
  %1560 = vmatprep.subr.mxu0 0.0
  %1561 = vmatpush1.msra.mxu0 0.0
  %1562 = vmatprep.subr.mxu0 0.0
  %1563 = vmatpush1.msra.mxu0 0.0
  %1564 = vmatprep.subr.mxu0 0.0
  %1565 = vmatpush1.msra.mxu0 0.0
  %1566 = vmatprep.subr.mxu0 0.0
  %1567 = vmatpush1.msra.mxu0 0.0
  %1568 = vmatprep.subr.mxu0 0.0
  %1569 = vmatpush1.msra.mxu0 0.0
  %1570 = vmatprep.subr.mxu0 0.0
  %1571 = vmatpush1.msra.mxu0 0.0
  %1572 = vmatprep.subr.mxu0 0.0
  %1573 = vmatpush1.msra.mxu0 0.0
  %1574 = vmatprep.mubr.f32.mxu0 0.0
  %1575 = vmatmul.mubr.f32.gmra.mrb[0].mxu0 %v1347
  %v1576 = vpop.f32.mrb[0].mxu0
  %v1577 = vadd.f32 0.0, %v1576
  %v1578 = vpop.f32.mrb[0].mxu0
  %1579 = vmatprep.mubr.f32.mxu0 0.0
  %1580 = vmatmul.mubr.f32.gmra.mrb[0].mxu0 %v1350
  %v1581 = vpop.f32.mrb[0].mxu0
  %v1582 = vadd.f32 0.0, %v1581
  %v1583 = vpop.f32.mrb[0].mxu0
  %1584 = vdwg.mxu0
  %v1585 = vmul.f32 %v1419, %v306
  %v1586 = vmul.f32 %v1424, %v307
  %v1587 = vmul.f32 %v1419, %v308
  %v1588 = vmul.f32 %v1424, %v309
  %v1589 = vmul.f32 %v1419, %v310
  %v1590 = vmul.f32 %v1424, %v311
  %v1591 = vmul.f32 %v1419, %v312
  %v1592 = vmul.f32 %v1424, %v313
  %v1594 = vsel %vm64, %v1585, 0
  %v1597 = vsel %vm64, %v1586, 0
  %v1600 = vsel %vm64, %v1587, 0
  %v1603 = vsel %vm64, %v1588, 0
  %v1606 = vsel %vm64, %v1589, 0
  %v1609 = vsel %vm64, %v1590, 0
  %v1612 = vsel %vm64, %v1591, 0
  %v1615 = vsel %vm64, %v1592, 0
  %v1618 = vsel %vm64, %v1498, 0
  %v1621 = vsel %vm64, %v1503, 0
  %1623 = vmatprep.subr.mxu0 0.0
  %1624 = vmatpush1.xpose.msra.mxu0 %v1618
  %1625 = vmatprep.subr.mxu0 0.0
  %1626 = vmatpush1.xpose.msra.mxu0 %v1621
  %1627 = vmatprep.subr.mxu0 0.0
  %1628 = vmatpush1.xpose.msra.mxu0 0.0
  %1629 = vmatprep.subr.mxu0 0.0
  %1630 = vmatpush1.xpose.msra.mxu0 0.0
  %1631 = vmatprep.subr.mxu0 0.0
  %1632 = vmatpush1.xpose.msra.mxu0 0.0
  %1633 = vmatprep.subr.mxu0 0.0
  %1634 = vmatpush1.xpose.msra.mxu0 0.0
  %1635 = vmatprep.subr.mxu0 0.0
  %1636 = vmatpush1.xpose.msra.mxu0 0.0
  %1637 = vmatprep.subr.mxu0 0.0
  %1638 = vmatpush1.xpose.msra.mxu0 0.0
  %1639 = vmatprep.subr.mxu0 0.0
  %1640 = vmatpush1.xpose.msra.mxu0 0.0
  %1641 = vmatprep.subr.mxu0 0.0
  %1642 = vmatpush1.xpose.msra.mxu0 0.0
  %1643 = vmatprep.subr.mxu0 0.0
  %1644 = vmatpush1.xpose.msra.mxu0 0.0
  %1645 = vmatprep.subr.mxu0 0.0
  %1646 = vmatpush1.xpose.msra.mxu0 0.0
  %1647 = vmatprep.subr.mxu0 0.0
  %1648 = vmatpush1.xpose.msra.mxu0 0.0
  %1649 = vmatprep.subr.mxu0 0.0
  %1650 = vmatpush1.xpose.msra.mxu0 0.0
  %1651 = vmatprep.subr.mxu0 0.0
  %1652 = vmatpush1.xpose.msra.mxu0 0.0
  %1653 = vmatprep.subr.mxu0 0.0
  %1654 = vmatpush1.xpose.msra.mxu0 0.0
  %1655 = vmatprep.subr.mxu0 0.0
  %1656 = vmatpush1.xpose.msra.mxu0 0.0
  %1657 = vmatprep.subr.mxu0 0.0
  %1658 = vmatpush1.xpose.msra.mxu0 0.0
  %1659 = vmatprep.subr.mxu0 0.0
  %1660 = vmatpush1.xpose.msra.mxu0 0.0
  %1661 = vmatprep.subr.mxu0 0.0
  %1662 = vmatpush1.xpose.msra.mxu0 0.0
  %1663 = vmatprep.subr.mxu0 0.0
  %1664 = vmatpush1.xpose.msra.mxu0 0.0
  %1665 = vmatprep.subr.mxu0 0.0
  %1666 = vmatpush1.xpose.msra.mxu0 0.0
  %1667 = vmatprep.subr.mxu0 0.0
  %1668 = vmatpush1.xpose.msra.mxu0 0.0
  %1669 = vmatprep.subr.mxu0 0.0
  %1670 = vmatpush1.xpose.msra.mxu0 0.0
  %1671 = vmatprep.subr.mxu0 0.0
  %1672 = vmatpush1.xpose.msra.mxu0 0.0
  %1673 = vmatprep.subr.mxu0 0.0
  %1674 = vmatpush1.xpose.msra.mxu0 0.0
  %1675 = vmatprep.subr.mxu0 0.0
  %1676 = vmatpush1.xpose.msra.mxu0 0.0
  %1677 = vmatprep.subr.mxu0 0.0
  %1678 = vmatpush1.xpose.msra.mxu0 0.0
  %1679 = vmatprep.subr.mxu0 0.0
  %1680 = vmatpush1.xpose.msra.mxu0 0.0
  %1681 = vmatprep.subr.mxu0 0.0
  %1682 = vmatpush1.xpose.msra.mxu0 0.0
  %1683 = vmatprep.subr.mxu0 0.0
  %1684 = vmatpush1.xpose.msra.mxu0 0.0
  %1685 = vmatprep.subr.mxu0 0.0
  %1686 = vmatpush1.xpose.msra.mxu0 0.0
  %1687 = vmatprep.mubr.f32.mxu0 0.0
  %1688 = vmatmul.mubr.f32.gmra.mrb[0].mxu0 %v1594
  %v1689 = vpop.f32.mrb[0].mxu0
  %v1690 = vadd.f32 %v314, %v1689
  %v1691 = vpop.f32.mrb[0].mxu0
  %1692 = vmatprep.mubr.f32.mxu0 0.0
  %1693 = vmatmul.mubr.f32.gmra.mrb[0].mxu0 %v1597
  %v1694 = vpop.f32.mrb[0].mxu0
  %v1695 = vadd.f32 %v315, %v1694
  %v1696 = vpop.f32.mrb[0].mxu0
  %1697 = vmatprep.mubr.f32.mxu0 0.0
  %1698 = vmatmul.mubr.f32.gmra.mrb[0].mxu0 %v1600
  %v1699 = vpop.f32.mrb[0].mxu0
  %v1700 = vadd.f32 %v316, %v1699
  %v1701 = vpop.f32.mrb[0].mxu0
  %1702 = vmatprep.mubr.f32.mxu0 0.0
  %1703 = vmatmul.mubr.f32.gmra.mrb[0].mxu0 %v1603
  %v1704 = vpop.f32.mrb[0].mxu0
  %v1705 = vadd.f32 %v317, %v1704
  %v1706 = vpop.f32.mrb[0].mxu0
  %1707 = vmatprep.mubr.f32.mxu0 0.0
  %1708 = vmatmul.mubr.f32.gmra.mrb[0].mxu0 %v1606
  %v1709 = vpop.f32.mrb[0].mxu0
  %v1710 = vadd.f32 %v318, %v1709
  %v1711 = vpop.f32.mrb[0].mxu0
  %1712 = vmatprep.mubr.f32.mxu0 0.0
  %1713 = vmatmul.mubr.f32.gmra.mrb[0].mxu0 %v1609
  %v1714 = vpop.f32.mrb[0].mxu0
  %v1715 = vadd.f32 %v319, %v1714
  %v1716 = vpop.f32.mrb[0].mxu0
  %1717 = vmatprep.mubr.f32.mxu0 0.0
  %1718 = vmatmul.mubr.f32.gmra.mrb[0].mxu0 %v1612
  %v1719 = vpop.f32.mrb[0].mxu0
  %v1720 = vadd.f32 %v320, %v1719
  %v1721 = vpop.f32.mrb[0].mxu0
  %1722 = vmatprep.mubr.f32.mxu0 0.0
  %1723 = vmatmul.mubr.f32.gmra.mrb[0].mxu0 %v1615
  %v1724 = vpop.f32.mrb[0].mxu0
  %v1725 = vadd.f32 %v321, %v1724
  %v1726 = vpop.f32.mrb[0].mxu0
  %1727 = vdwg.mxu0
  %v1728 = vsel %vm708, %v1690, -inf
  %1729 = vmax.xlane.f32.xlu0 %v1728
  %v1730 = vpop.xlane.xlu0 %1729
  %v1731 = vsel %vm708, %v1695, -inf
  %1732 = vmax.xlane.f32.xlu0 %v1731
  %v1733 = vpop.xlane.xlu0 %1732
  %v1734 = vsel %vm708, %v1700, -inf
  %1735 = vmax.xlane.f32.xlu0 %v1734
  %v1736 = vpop.xlane.xlu0 %1735
  %v1737 = vsel %vm708, %v1705, -inf
  %1738 = vmax.xlane.f32.xlu0 %v1737
  %v1739 = vpop.xlane.xlu0 %1738
  %v1740 = vsel %vm708, %v1710, -inf
  %1741 = vmax.xlane.f32.xlu0 %v1740
  %v1742 = vpop.xlane.xlu0 %1741
  %v1743 = vsel %vm708, %v1715, -inf
  %1744 = vmax.xlane.f32.xlu0 %v1743
  %v1745 = vpop.xlane.xlu0 %1744
  %v1746 = vsel %vm708, %v1720, -inf
  %1747 = vmax.xlane.f32.xlu0 %v1746
  %v1748 = vpop.xlane.xlu0 %1747
  %v1749 = vsel %vm708, %v1725, -inf
  %1750 = vmax.xlane.f32.xlu0 %v1749
  %v1751 = vpop.xlane.xlu0 %1750
  %v1752 = vsub.f32 %v1690, %v1730
  %v1753 = vsub.f32 %v1695, %v1733
  %v1754 = vsub.f32 %v1700, %v1736
  %v1755 = vsub.f32 %v1705, %v1739
  %v1756 = vsub.f32 %v1710, %v1742
  %v1757 = vsub.f32 %v1715, %v1745
  %v1758 = vsub.f32 %v1720, %v1748
  %v1759 = vsub.f32 %v1725, %v1751
  %v1760 = vmul.f32 %v1752, 1.442695
  %v1761 = vpow.pop %v1760
  %v1762 = vmul.f32 %v1753, 1.442695
  %v1763 = vpow.pop %v1762
  %v1764 = vmul.f32 %v1754, 1.442695
  %v1765 = vpow.pop %v1764
  %v1766 = vmul.f32 %v1755, 1.442695
  %v1767 = vpow.pop %v1766
  %v1768 = vmul.f32 %v1756, 1.442695
  %v1769 = vpow.pop %v1768
  %v1770 = vmul.f32 %v1757, 1.442695
  %v1771 = vpow.pop %v1770
  %v1772 = vmul.f32 %v1758, 1.442695
  %v1773 = vpow.pop %v1772
  %v1774 = vmul.f32 %v1759, 1.442695
  %v1775 = vpow.pop %v1774
  %v1776 = vsel %vm708, %v1761, 0.0
  %1777 = vadd.xlane.f32.xlu0 %v1776
  %v1778 = vpop.xlane.xlu0 %1777
  %v1779 = vsel %vm708, %v1763, 0.0
  %1780 = vadd.xlane.f32.xlu0 %v1779
  %v1781 = vpop.xlane.xlu0 %1780
  %v1782 = vsel %vm708, %v1765, 0.0
  %1783 = vadd.xlane.f32.xlu0 %v1782
  %v1784 = vpop.xlane.xlu0 %1783
  %v1785 = vsel %vm708, %v1767, 0.0
  %1786 = vadd.xlane.f32.xlu0 %v1785
  %v1787 = vpop.xlane.xlu0 %1786
  %v1788 = vsel %vm708, %v1769, 0.0
  %1789 = vadd.xlane.f32.xlu0 %v1788
  %v1790 = vpop.xlane.xlu0 %1789
  %v1791 = vsel %vm708, %v1771, 0.0
  %1792 = vadd.xlane.f32.xlu0 %v1791
  %v1793 = vpop.xlane.xlu0 %1792
  %v1794 = vsel %vm708, %v1773, 0.0
  %1795 = vadd.xlane.f32.xlu0 %v1794
  %v1796 = vpop.xlane.xlu0 %1795
  %v1797 = vsel %vm708, %v1775, 0.0
  %1798 = vadd.xlane.f32.xlu0 %v1797
  %v1799 = vpop.xlane.xlu0 %1798
  %v1800 = vrcp.pop %v1778
  %v1801 = vrcp.pop %v1781
  %v1802 = vrcp.pop %v1784
  %v1803 = vrcp.pop %v1787
  %v1804 = vrcp.pop %v1790
  %v1805 = vrcp.pop %v1793
  %v1806 = vrcp.pop %v1796
  %v1807 = vrcp.pop %v1799
  %v1808 = vmul.f32 %v1761, %v1800
  %v1809 = vmul.f32 %v1763, %v1801
  %v1810 = vmul.f32 %v1765, %v1802
  %v1811 = vmul.f32 %v1767, %v1803
  %v1812 = vmul.f32 %v1769, %v1804
  %v1813 = vmul.f32 %v1771, %v1805
  %v1814 = vmul.f32 %v1773, %v1806
  %v1815 = vmul.f32 %v1775, %v1807
  %v1817 = vsel %vm708, %v1808, 0
  %v1820 = vsel %vm708, %v1809, 0
  %v1823 = vsel %vm708, %v1810, 0
  %v1826 = vsel %vm708, %v1811, 0
  %v1829 = vsel %vm708, %v1812, 0
  %v1832 = vsel %vm708, %v1813, 0
  %v1835 = vsel %vm708, %v1814, 0
  %v1838 = vsel %vm708, %v1815, 0
  %1840 = vmatprep.subr.mxu0 0.0
  %1841 = vmatpush1.msra.mxu0 %v1577
  %1842 = vmatprep.subr.mxu0 0.0
  %1843 = vmatpush1.msra.mxu0 %v1582
  %1844 = vmatprep.subr.mxu0 0.0
  %1845 = vmatpush1.msra.mxu0 0.0
  %1846 = vmatprep.subr.mxu0 0.0
  %1847 = vmatpush1.msra.mxu0 0.0
  %1848 = vmatprep.subr.mxu0 0.0
  %1849 = vmatpush1.msra.mxu0 0.0
  %1850 = vmatprep.subr.mxu0 0.0
  %1851 = vmatpush1.msra.mxu0 0.0
  %1852 = vmatprep.subr.mxu0 0.0
  %1853 = vmatpush1.msra.mxu0 0.0
  %1854 = vmatprep.subr.mxu0 0.0
  %1855 = vmatpush1.msra.mxu0 0.0
  %1856 = vmatprep.subr.mxu0 0.0
  %1857 = vmatpush1.msra.mxu0 0.0
  %1858 = vmatprep.subr.mxu0 0.0
  %1859 = vmatpush1.msra.mxu0 0.0
  %1860 = vmatprep.subr.mxu0 0.0
  %1861 = vmatpush1.msra.mxu0 0.0
  %1862 = vmatprep.subr.mxu0 0.0
  %1863 = vmatpush1.msra.mxu0 0.0
  %1864 = vmatprep.subr.mxu0 0.0
  %1865 = vmatpush1.msra.mxu0 0.0
  %1866 = vmatprep.subr.mxu0 0.0
  %1867 = vmatpush1.msra.mxu0 0.0
  %1868 = vmatprep.subr.mxu0 0.0
  %1869 = vmatpush1.msra.mxu0 0.0
  %1870 = vmatprep.subr.mxu0 0.0
  %1871 = vmatpush1.msra.mxu0 0.0
  %1872 = vmatprep.subr.mxu0 0.0
  %1873 = vmatpush1.msra.mxu0 0.0
  %1874 = vmatprep.subr.mxu0 0.0
  %1875 = vmatpush1.msra.mxu0 0.0
  %1876 = vmatprep.subr.mxu0 0.0
  %1877 = vmatpush1.msra.mxu0 0.0
  %1878 = vmatprep.subr.mxu0 0.0
  %1879 = vmatpush1.msra.mxu0 0.0
  %1880 = vmatprep.subr.mxu0 0.0
  %1881 = vmatpush1.msra.mxu0 0.0
  %1882 = vmatprep.subr.mxu0 0.0
  %1883 = vmatpush1.msra.mxu0 0.0
  %1884 = vmatprep.subr.mxu0 0.0
  %1885 = vmatpush1.msra.mxu0 0.0
  %1886 = vmatprep.subr.mxu0 0.0
  %1887 = vmatpush1.msra.mxu0 0.0
  %1888 = vmatprep.subr.mxu0 0.0
  %1889 = vmatpush1.msra.mxu0 0.0
  %1890 = vmatprep.subr.mxu0 0.0
  %1891 = vmatpush1.msra.mxu0 0.0
  %1892 = vmatprep.subr.mxu0 0.0
  %1893 = vmatpush1.msra.mxu0 0.0
  %1894 = vmatprep.subr.mxu0 0.0
  %1895 = vmatpush1.msra.mxu0 0.0
  %1896 = vmatprep.subr.mxu0 0.0
  %1897 = vmatpush1.msra.mxu0 0.0
  %1898 = vmatprep.subr.mxu0 0.0
  %1899 = vmatpush1.msra.mxu0 0.0
  %1900 = vmatprep.subr.mxu0 0.0
  %1901 = vmatpush1.msra.mxu0 0.0
  %1902 = vmatprep.subr.mxu0 0.0
  %1903 = vmatpush1.msra.mxu0 0.0
  %1904 = vmatprep.mubr.f32.mxu0 0.0
  %1905 = vmatmul.mubr.f32.gmra.mrb[0].mxu0 %v1817
  %v1906 = vpop.f32.mrb[0].mxu0
  %v1907 = vadd.f32 0.0, %v1906
  %v1908 = vpop.f32.mrb[0].mxu0
  %1909 = vmatprep.mubr.f32.mxu0 0.0
  %1910 = vmatmul.mubr.f32.gmra.mrb[0].mxu0 %v1820
  %v1911 = vpop.f32.mrb[0].mxu0
  %v1912 = vadd.f32 0.0, %v1911
  %v1913 = vpop.f32.mrb[0].mxu0
  %1914 = vmatprep.mubr.f32.mxu0 0.0
  %1915 = vmatmul.mubr.f32.gmra.mrb[0].mxu0 %v1823
  %v1916 = vpop.f32.mrb[0].mxu0
  %v1917 = vadd.f32 0.0, %v1916
  %v1918 = vpop.f32.mrb[0].mxu0
  %1919 = vmatprep.mubr.f32.mxu0 0.0
  %1920 = vmatmul.mubr.f32.gmra.mrb[0].mxu0 %v1826
  %v1921 = vpop.f32.mrb[0].mxu0
  %v1922 = vadd.f32 0.0, %v1921
  %v1923 = vpop.f32.mrb[0].mxu0
  %1924 = vmatprep.mubr.f32.mxu0 0.0
  %1925 = vmatmul.mubr.f32.gmra.mrb[0].mxu0 %v1829
  %v1926 = vpop.f32.mrb[0].mxu0
  %v1927 = vadd.f32 0.0, %v1926
  %v1928 = vpop.f32.mrb[0].mxu0
  %1929 = vmatprep.mubr.f32.mxu0 0.0
  %1930 = vmatmul.mubr.f32.gmra.mrb[0].mxu0 %v1832
  %v1931 = vpop.f32.mrb[0].mxu0
  %v1932 = vadd.f32 0.0, %v1931
  %v1933 = vpop.f32.mrb[0].mxu0
  %1934 = vmatprep.mubr.f32.mxu0 0.0
  %1935 = vmatmul.mubr.f32.gmra.mrb[0].mxu0 %v1835
  %v1936 = vpop.f32.mrb[0].mxu0
  %v1937 = vadd.f32 0.0, %v1936
  %v1938 = vpop.f32.mrb[0].mxu0
  %1939 = vmatprep.mubr.f32.mxu0 0.0
  %1940 = vmatmul.mubr.f32.gmra.mrb[0].mxu0 %v1838
  %v1941 = vpop.f32.mrb[0].mxu0
  %v1942 = vadd.f32 0.0, %v1941
  %v1943 = vpop.f32.mrb[0].mxu0
  %1944 = vdwg.mxu0
  %v1945 = vmul.f32 %v1907, %v306
  %v1946 = vmul.f32 %v1912, %v307
  %v1947 = vmul.f32 %v1917, %v308
  %v1948 = vmul.f32 %v1922, %v309
  %v1949 = vmul.f32 %v1927, %v310
  %v1950 = vmul.f32 %v1932, %v311
  %v1951 = vmul.f32 %v1937, %v312
  %v1952 = vmul.f32 %v1942, %v313
  %v1953 = vld [vmem:[%s2 + $0x2c0] sm:$0xff]
  %v1954 = vld [vmem:[%s2 + $0x2c8] sm:$0xff]
  %v1955 = vld [vmem:[%s2 + $0x2d0] sm:$0xff]
  %v1956 = vld [vmem:[%s2 + $0x2d8] sm:$0xff]
  %v1958 = vsel %vm64, %v1945, 0
  %v1961 = vsel %vm64, %v1946, 0
  %v1964 = vsel %vm64, %v1947, 0
  %v1967 = vsel %vm64, %v1948, 0
  %v1970 = vsel %vm64, %v1949, 0
  %v1973 = vsel %vm64, %v1950, 0
  %v1976 = vsel %vm64, %v1951, 0
  %v1979 = vsel %vm64, %v1952, 0
  %1981 = vmatprep.subr.mxu0 0.0
  %1982 = vmatpush1.msra.mxu0 %v1953
  %1983 = vmatprep.subr.mxu0 0.0
  %1984 = vmatpush1.msra.mxu0 %v1954
  %1985 = vmatprep.subr.mxu0 0.0
  %1986 = vmatpush1.msra.mxu0 %v1955
  %1987 = vmatprep.subr.mxu0 0.0
  %1988 = vmatpush1.msra.mxu0 %v1956
  %1989 = vmatprep.subr.mxu0 0.0
  %1990 = vmatpush1.msra.mxu0 0.0
  %1991 = vmatprep.subr.mxu0 0.0
  %1992 = vmatpush1.msra.mxu0 0.0
  %1993 = vmatprep.subr.mxu0 0.0
  %1994 = vmatpush1.msra.mxu0 0.0
  %1995 = vmatprep.subr.mxu0 0.0
  %1996 = vmatpush1.msra.mxu0 0.0
  %1997 = vmatprep.subr.mxu0 0.0
  %1998 = vmatpush1.msra.mxu0 0.0
  %1999 = vmatprep.subr.mxu0 0.0
  %2000 = vmatpush1.msra.mxu0 0.0
  %2001 = vmatprep.subr.mxu0 0.0
  %2002 = vmatpush1.msra.mxu0 0.0
  %2003 = vmatprep.subr.mxu0 0.0
  %2004 = vmatpush1.msra.mxu0 0.0
  %2005 = vmatprep.subr.mxu0 0.0
  %2006 = vmatpush1.msra.mxu0 0.0
  %2007 = vmatprep.subr.mxu0 0.0
  %2008 = vmatpush1.msra.mxu0 0.0
  %2009 = vmatprep.subr.mxu0 0.0
  %2010 = vmatpush1.msra.mxu0 0.0
  %2011 = vmatprep.subr.mxu0 0.0
  %2012 = vmatpush1.msra.mxu0 0.0
  %2013 = vmatprep.subr.mxu0 0.0
  %2014 = vmatpush1.msra.mxu0 0.0
  %2015 = vmatprep.subr.mxu0 0.0
  %2016 = vmatpush1.msra.mxu0 0.0
  %2017 = vmatprep.subr.mxu0 0.0
  %2018 = vmatpush1.msra.mxu0 0.0
  %2019 = vmatprep.subr.mxu0 0.0
  %2020 = vmatpush1.msra.mxu0 0.0
  %2021 = vmatprep.subr.mxu0 0.0
  %2022 = vmatpush1.msra.mxu0 0.0
  %2023 = vmatprep.subr.mxu0 0.0
  %2024 = vmatpush1.msra.mxu0 0.0
  %2025 = vmatprep.subr.mxu0 0.0
  %2026 = vmatpush1.msra.mxu0 0.0
  %2027 = vmatprep.subr.mxu0 0.0
  %2028 = vmatpush1.msra.mxu0 0.0
  %2029 = vmatprep.subr.mxu0 0.0
  %2030 = vmatpush1.msra.mxu0 0.0
  %2031 = vmatprep.subr.mxu0 0.0
  %2032 = vmatpush1.msra.mxu0 0.0
  %2033 = vmatprep.subr.mxu0 0.0
  %2034 = vmatpush1.msra.mxu0 0.0
  %2035 = vmatprep.subr.mxu0 0.0
  %2036 = vmatpush1.msra.mxu0 0.0
  %2037 = vmatprep.subr.mxu0 0.0
  %2038 = vmatpush1.msra.mxu0 0.0
  %2039 = vmatprep.subr.mxu0 0.0
  %2040 = vmatpush1.msra.mxu0 0.0
  %2041 = vmatprep.subr.mxu0 0.0
  %2042 = vmatpush1.msra.mxu0 0.0
  %2043 = vmatprep.subr.mxu0 0.0
  %2044 = vmatpush1.msra.mxu0 0.0
  %2045 = vmatprep.mubr.f32.mxu0 0.0
  %2046 = vmatmul.mubr.f32.gmra.mrb[0].mxu0 %v1958
  %v2047 = vpop.f32.mrb[0].mxu0
  %v2048 = vadd.f32 0.0, %v2047
  %v2049 = vpop.f32.mrb[0].mxu0
  %2050 = vmatprep.mubr.f32.mxu0 0.0
  %2051 = vmatmul.mubr.f32.gmra.mrb[0].mxu0 %v1961
  %v2052 = vpop.f32.mrb[0].mxu0
  %v2053 = vadd.f32 0.0, %v2052
  %v2054 = vpop.f32.mrb[0].mxu0
  %2055 = vmatprep.mubr.f32.mxu0 0.0
  %2056 = vmatmul.mubr.f32.gmra.mrb[0].mxu0 %v1964
  %v2057 = vpop.f32.mrb[0].mxu0
  %v2058 = vadd.f32 0.0, %v2057
  %v2059 = vpop.f32.mrb[0].mxu0
  %2060 = vmatprep.mubr.f32.mxu0 0.0
  %2061 = vmatmul.mubr.f32.gmra.mrb[0].mxu0 %v1967
  %v2062 = vpop.f32.mrb[0].mxu0
  %v2063 = vadd.f32 0.0, %v2062
  %v2064 = vpop.f32.mrb[0].mxu0
  %2065 = vmatprep.mubr.f32.mxu0 0.0
  %2066 = vmatmul.mubr.f32.gmra.mrb[0].mxu0 %v1970
  %v2067 = vpop.f32.mrb[0].mxu0
  %v2068 = vadd.f32 0.0, %v2067
  %v2069 = vpop.f32.mrb[0].mxu0
  %2070 = vmatprep.mubr.f32.mxu0 0.0
  %2071 = vmatmul.mubr.f32.gmra.mrb[0].mxu0 %v1973
  %v2072 = vpop.f32.mrb[0].mxu0
  %v2073 = vadd.f32 0.0, %v2072
  %v2074 = vpop.f32.mrb[0].mxu0
  %2075 = vmatprep.mubr.f32.mxu0 0.0
  %2076 = vmatmul.mubr.f32.gmra.mrb[0].mxu0 %v1976
  %v2077 = vpop.f32.mrb[0].mxu0
  %v2078 = vadd.f32 0.0, %v2077
  %v2079 = vpop.f32.mrb[0].mxu0
  %2080 = vmatprep.mubr.f32.mxu0 0.0
  %2081 = vmatmul.mubr.f32.gmra.mrb[0].mxu0 %v1979
  %v2082 = vpop.f32.mrb[0].mxu0
  %v2083 = vadd.f32 0.0, %v2082
  %v2084 = vpop.f32.mrb[0].mxu0
  %2085 = vdwg.mxu0
  %v2086 = vadd.f32 %v2048, %v2058
  %v2087 = vadd.f32 %v2053, %v2063
  %v2088 = vadd.f32 %v2086, %v2068
  %v2089 = vadd.f32 %v2087, %v2073
  %v2090 = vadd.f32 %v2088, %v2078
  %v2091 = vadd.f32 %v2089, %v2083
  %v2092 = vadd.f32 %v2090, %v1340
  %v2093 = vadd.f32 %v2091, %v1341
  %v2094 = vld [vmem:[%s2 + $0x2e0] sm:$0x3]
  %v2095 = vsel %vm64, %v2092, 0.0
  %2096 = vadd.xlane.f32.xlu0 %v2095
  %v2097 = vpop.xlane.xlu0 %2096
  %v2098 = vsel %vm64, %v2093, 0.0
  %2099 = vadd.xlane.f32.xlu0 %v2098
  %v2100 = vpop.xlane.xlu0 %2099
  %v2101 = vmul.f32 %v2097, %v230
  %v2102 = vmul.f32 %v2100, %v230
  %v2103 = vsub.f32 %v2092, %v2101
  %v2104 = vsub.f32 %v2093, %v2102
  %v2105 = vmul.f32 %v2103, %v2103
  %v2106 = vmul.f32 %v2104, %v2104
  %v2107 = vsel %vm64, %v2105, 0.0
  %2108 = vadd.xlane.f32.xlu0 %v2107
  %v2109 = vpop.xlane.xlu0 %2108
  %v2110 = vsel %vm64, %v2106, 0.0
  %2111 = vadd.xlane.f32.xlu0 %v2110
  %v2112 = vpop.xlane.xlu0 %2111
  %v2113 = vmul.f32 %v2109, %v230
  %v2114 = vmul.f32 %v2112, %v230
  %v2115 = vadd.f32 %v2113, 1e-06
  %v2116 = vadd.f32 %v2114, 1e-06
  %v2117 = vrsqrt.pop %v2115
  %v2118 = vrsqrt.pop %v2116
  %v2119 = vmul.f32 %v2103, %v2117
  %v2120 = vmul.f32 %v2104, %v2118
  %v2121 = vlaneseq
  %v2122 = vshrl.u32 %v2121, 7
  %v2123 = vsub.s32 0, %v2122
  %v2124 = vrot.slane %v2094, %v2123
  %v2125 = vmul.f32 %v2119, %v2124
  %v2126 = vmul.f32 %v2120, %v2124
  %v2127 = vlaneseq
  %v2128 = vshrl.u32 %v2127, 7
  %v2129 = vsub.s32 1, %v2128
  %v2130 = vrot.slane %v2094, %v2129
  %v2131 = vadd.f32 %v2125, %v2130
  %v2132 = vadd.f32 %v2126, %v2130
  %v2133 = vld [vmem:[%s3 + $0x28] sm:$0xff]
  %v2134 = vld [vmem:[%s3 + $0x30] sm:$0xff]
  %v2135 = vld [vmem:[%s3 + $0x38] sm:$0xff]
  %v2136 = vld [vmem:[%s3 + $0x40] sm:$0xff]
  %v2137 = vld [vmem:[%s3 + $0x48] sm:$0x1]
  %v2138 = vlaneseq
  %v2139 = vshrl.u32 %v2138, 7
  %v2140 = vsub.s32 0, %v2139
  %v2141 = vrot.slane %v2137, %v2140
  %v2143 = vsel %vm64, %v2131, 0
  %v2146 = vsel %vm64, %v2132, 0
  %2148 = vmatprep.subr.mxu0 0.0
  %2149 = vmatpush1.msra.mxu0 %v2133
  %2150 = vmatprep.subr.mxu0 0.0
  %2151 = vmatpush1.msra.mxu0 %v2134
  %2152 = vmatprep.subr.mxu0 0.0
  %2153 = vmatpush1.msra.mxu0 %v2135
  %2154 = vmatprep.subr.mxu0 0.0
  %2155 = vmatpush1.msra.mxu0 %v2136
  %2156 = vmatprep.subr.mxu0 0.0
  %2157 = vmatpush1.msra.mxu0 0.0
  %2158 = vmatprep.subr.mxu0 0.0
  %2159 = vmatpush1.msra.mxu0 0.0
  %2160 = vmatprep.subr.mxu0 0.0
  %2161 = vmatpush1.msra.mxu0 0.0
  %2162 = vmatprep.subr.mxu0 0.0
  %2163 = vmatpush1.msra.mxu0 0.0
  %2164 = vmatprep.subr.mxu0 0.0
  %2165 = vmatpush1.msra.mxu0 0.0
  %2166 = vmatprep.subr.mxu0 0.0
  %2167 = vmatpush1.msra.mxu0 0.0
  %2168 = vmatprep.subr.mxu0 0.0
  %2169 = vmatpush1.msra.mxu0 0.0
  %2170 = vmatprep.subr.mxu0 0.0
  %2171 = vmatpush1.msra.mxu0 0.0
  %2172 = vmatprep.subr.mxu0 0.0
  %2173 = vmatpush1.msra.mxu0 0.0
  %2174 = vmatprep.subr.mxu0 0.0
  %2175 = vmatpush1.msra.mxu0 0.0
  %2176 = vmatprep.subr.mxu0 0.0
  %2177 = vmatpush1.msra.mxu0 0.0
  %2178 = vmatprep.subr.mxu0 0.0
  %2179 = vmatpush1.msra.mxu0 0.0
  %2180 = vmatprep.subr.mxu0 0.0
  %2181 = vmatpush1.msra.mxu0 0.0
  %2182 = vmatprep.subr.mxu0 0.0
  %2183 = vmatpush1.msra.mxu0 0.0
  %2184 = vmatprep.subr.mxu0 0.0
  %2185 = vmatpush1.msra.mxu0 0.0
  %2186 = vmatprep.subr.mxu0 0.0
  %2187 = vmatpush1.msra.mxu0 0.0
  %2188 = vmatprep.subr.mxu0 0.0
  %2189 = vmatpush1.msra.mxu0 0.0
  %2190 = vmatprep.subr.mxu0 0.0
  %2191 = vmatpush1.msra.mxu0 0.0
  %2192 = vmatprep.subr.mxu0 0.0
  %2193 = vmatpush1.msra.mxu0 0.0
  %2194 = vmatprep.subr.mxu0 0.0
  %2195 = vmatpush1.msra.mxu0 0.0
  %2196 = vmatprep.subr.mxu0 0.0
  %2197 = vmatpush1.msra.mxu0 0.0
  %2198 = vmatprep.subr.mxu0 0.0
  %2199 = vmatpush1.msra.mxu0 0.0
  %2200 = vmatprep.subr.mxu0 0.0
  %2201 = vmatpush1.msra.mxu0 0.0
  %2202 = vmatprep.subr.mxu0 0.0
  %2203 = vmatpush1.msra.mxu0 0.0
  %2204 = vmatprep.subr.mxu0 0.0
  %2205 = vmatpush1.msra.mxu0 0.0
  %2206 = vmatprep.subr.mxu0 0.0
  %2207 = vmatpush1.msra.mxu0 0.0
  %2208 = vmatprep.subr.mxu0 0.0
  %2209 = vmatpush1.msra.mxu0 0.0
  %2210 = vmatprep.subr.mxu0 0.0
  %2211 = vmatpush1.msra.mxu0 0.0
  %2212 = vmatprep.mubr.f32.mxu0 0.0
  %2213 = vmatmul.mubr.f32.gmra.mrb[0].mxu0 %v2143
  %v2214 = vpop.f32.mrb[0].mxu0
  %v2215 = vadd.f32 %v2141, %v2214
  %v2216 = vpop.f32.mrb[0].mxu0
  %2217 = vmatprep.mubr.f32.mxu0 0.0
  %2218 = vmatmul.mubr.f32.gmra.mrb[0].mxu0 %v2146
  %v2219 = vpop.f32.mrb[0].mxu0
  %v2220 = vadd.f32 %v2141, %v2219
  %v2221 = vpop.f32.mrb[0].mxu0
  %2222 = vdwg.mxu0
  %v2223 = vmax.f32 %v2215, 0.0
  %v2224 = vmax.f32 %v2220, 0.0
  %v2225 = vld [vmem:[%s2 + $0x2e8] sm:$0xff]
  %v2226 = vld [vmem:[%s2 + $0x2f0] sm:$0xff]
  %v2227 = vld [vmem:[%s2 + $0x2f8] sm:$0xff]
  %v2228 = vld [vmem:[%s2 + $0x300] sm:$0xff]
  %v2229 = vld [vmem:[%s2 + $0x308] sm:$0xff]
  %v2230 = vld [vmem:[%s2 + $0x310] sm:$0xff]
  %v2231 = vld [vmem:[%s2 + $0x318] sm:$0xff]
  %v2232 = vld [vmem:[%s2 + $0x320] sm:$0xff]
  %v2233 = vld [vmem:[%s2 + $0x328] sm:$0x1]
  %v2234 = vlaneseq
  %v2235 = vshrl.u32 %v2234, 7
  %v2236 = vsub.s32 0, %v2235
  %v2237 = vrot.slane %v2233, %v2236
  %v2239 = vsel %vm1219, %v2223, 0
  %v2242 = vsel %vm1219, %v2224, 0
  %2244 = vmatprep.subr.mxu0 0.0
  %2245 = vmatpush1.msra.mxu0 %v2225
  %2246 = vmatprep.subr.mxu0 0.0
  %2247 = vmatpush1.msra.mxu0 %v2226
  %2248 = vmatprep.subr.mxu0 0.0
  %2249 = vmatpush1.msra.mxu0 %v2227
  %2250 = vmatprep.subr.mxu0 0.0
  %2251 = vmatpush1.msra.mxu0 %v2228
  %2252 = vmatprep.subr.mxu0 0.0
  %2253 = vmatpush1.msra.mxu0 %v2229
  %2254 = vmatprep.subr.mxu0 0.0
  %2255 = vmatpush1.msra.mxu0 %v2230
  %2256 = vmatprep.subr.mxu0 0.0
  %2257 = vmatpush1.msra.mxu0 %v2231
  %2258 = vmatprep.subr.mxu0 0.0
  %2259 = vmatpush1.msra.mxu0 %v2232
  %2260 = vmatprep.subr.mxu0 0.0
  %2261 = vmatpush1.msra.mxu0 0.0
  %2262 = vmatprep.subr.mxu0 0.0
  %2263 = vmatpush1.msra.mxu0 0.0
  %2264 = vmatprep.subr.mxu0 0.0
  %2265 = vmatpush1.msra.mxu0 0.0
  %2266 = vmatprep.subr.mxu0 0.0
  %2267 = vmatpush1.msra.mxu0 0.0
  %2268 = vmatprep.subr.mxu0 0.0
  %2269 = vmatpush1.msra.mxu0 0.0
  %2270 = vmatprep.subr.mxu0 0.0
  %2271 = vmatpush1.msra.mxu0 0.0
  %2272 = vmatprep.subr.mxu0 0.0
  %2273 = vmatpush1.msra.mxu0 0.0
  %2274 = vmatprep.subr.mxu0 0.0
  %2275 = vmatpush1.msra.mxu0 0.0
  %2276 = vmatprep.subr.mxu0 0.0
  %2277 = vmatpush1.msra.mxu0 0.0
  %2278 = vmatprep.subr.mxu0 0.0
  %2279 = vmatpush1.msra.mxu0 0.0
  %2280 = vmatprep.subr.mxu0 0.0
  %2281 = vmatpush1.msra.mxu0 0.0
  %2282 = vmatprep.subr.mxu0 0.0
  %2283 = vmatpush1.msra.mxu0 0.0
  %2284 = vmatprep.subr.mxu0 0.0
  %2285 = vmatpush1.msra.mxu0 0.0
  %2286 = vmatprep.subr.mxu0 0.0
  %2287 = vmatpush1.msra.mxu0 0.0
  %2288 = vmatprep.subr.mxu0 0.0
  %2289 = vmatpush1.msra.mxu0 0.0
  %2290 = vmatprep.subr.mxu0 0.0
  %2291 = vmatpush1.msra.mxu0 0.0
  %2292 = vmatprep.subr.mxu0 0.0
  %2293 = vmatpush1.msra.mxu0 0.0
  %2294 = vmatprep.subr.mxu0 0.0
  %2295 = vmatpush1.msra.mxu0 0.0
  %2296 = vmatprep.subr.mxu0 0.0
  %2297 = vmatpush1.msra.mxu0 0.0
  %2298 = vmatprep.subr.mxu0 0.0
  %2299 = vmatpush1.msra.mxu0 0.0
  %2300 = vmatprep.subr.mxu0 0.0
  %2301 = vmatpush1.msra.mxu0 0.0
  %2302 = vmatprep.subr.mxu0 0.0
  %2303 = vmatpush1.msra.mxu0 0.0
  %2304 = vmatprep.subr.mxu0 0.0
  %2305 = vmatpush1.msra.mxu0 0.0
  %2306 = vmatprep.subr.mxu0 0.0
  %2307 = vmatpush1.msra.mxu0 0.0
  %2308 = vmatprep.mubr.f32.mxu0 0.0
  %2309 = vmatmul.mubr.f32.gmra.mrb[0].mxu0 %v2239
  %v2310 = vpop.f32.mrb[0].mxu0
  %v2311 = vadd.f32 %v2237, %v2310
  %v2312 = vpop.f32.mrb[0].mxu0
  %2313 = vmatprep.mubr.f32.mxu0 0.0
  %2314 = vmatmul.mubr.f32.gmra.mrb[0].mxu0 %v2242
  %v2315 = vpop.f32.mrb[0].mxu0
  %v2316 = vadd.f32 %v2237, %v2315
  %v2317 = vpop.f32.mrb[0].mxu0
  %2318 = vdwg.mxu0
  %v2319 = vadd.f32 %v2311, %v2131
  %v2320 = vadd.f32 %v2316, %v2132
  %v2321 = vld [vmem:[%s2 + $0x330] sm:$0x3]
  %v2322 = vsel %vm64, %v2319, 0.0
  %2323 = vadd.xlane.f32.xlu0 %v2322
  %v2324 = vpop.xlane.xlu0 %2323
  %v2325 = vsel %vm64, %v2320, 0.0
  %2326 = vadd.xlane.f32.xlu0 %v2325
  %v2327 = vpop.xlane.xlu0 %2326
  %v2328 = vmul.f32 %v2324, %v230
  %v2329 = vmul.f32 %v2327, %v230
  %v2330 = vsub.f32 %v2319, %v2328
  %v2331 = vsub.f32 %v2320, %v2329
  %v2332 = vmul.f32 %v2330, %v2330
  %v2333 = vmul.f32 %v2331, %v2331
  %v2334 = vsel %vm64, %v2332, 0.0
  %2335 = vadd.xlane.f32.xlu0 %v2334
  %v2336 = vpop.xlane.xlu0 %2335
  %v2337 = vsel %vm64, %v2333, 0.0
  %2338 = vadd.xlane.f32.xlu0 %v2337
  %v2339 = vpop.xlane.xlu0 %2338
  %v2340 = vmul.f32 %v2336, %v230
  %v2341 = vmul.f32 %v2339, %v230
  %v2342 = vadd.f32 %v2340, 1e-06
  %v2343 = vadd.f32 %v2341, 1e-06
  %v2344 = vrsqrt.pop %v2342
  %v2345 = vrsqrt.pop %v2343
  %v2346 = vmul.f32 %v2330, %v2344
  %v2347 = vmul.f32 %v2331, %v2345
  %v2348 = vlaneseq
  %v2349 = vshrl.u32 %v2348, 7
  %v2350 = vsub.s32 0, %v2349
  %v2351 = vrot.slane %v2321, %v2350
  %v2352 = vmul.f32 %v2346, %v2351
  %v2353 = vmul.f32 %v2347, %v2351
  %v2354 = vlaneseq
  %v2355 = vshrl.u32 %v2354, 7
  %v2356 = vsub.s32 1, %v2355
  %v2357 = vrot.slane %v2321, %v2356
  %v2358 = vadd.f32 %v2352, %v2357
  %v2359 = vadd.f32 %v2353, %v2357
  %v2360 = vld [vmem:[%s1 + $0x40] sm:$0xff]
  %v2361 = vld [vmem:[%s1 + $0x48] sm:$0xf]
  %v2362 = vld [vmem:[%s2 + $0x338] sm:$0xff]
  %v2363 = vld [vmem:[%s2 + $0x340] sm:$0xff]
  %v2364 = vld [vmem:[%s2 + $0x348] sm:$0xff]
  %v2365 = vld [vmem:[%s2 + $0x350] sm:$0xff]
  %v2366 = vld [vmem:[%s2 + $0x358] sm:$0xff]
  %v2367 = vld [vmem:[%s2 + $0x360] sm:$0xff]
  %v2368 = vld [vmem:[%s2 + $0x368] sm:$0x1]
  %v2369 = vlaneseq
  %v2370 = vshrl.u32 %v2369, 7
  %v2371 = vsub.s32 0, %v2370
  %v2372 = vrot.slane %v2368, %v2371
  %vm2373 = vcmask 392192
  %v2375 = vsel %vm2373, %v2360, 0
  %v2378 = vsel %vm2373, %v2361, 0
  %2380 = vmatprep.subr.mxu0 0.0
  %2381 = vmatpush1.msra.mxu0 %v2362
  %2382 = vmatprep.subr.mxu0 0.0
  %2383 = vmatpush1.msra.mxu0 %v2363
  %2384 = vmatprep.subr.mxu0 0.0
  %2385 = vmatpush1.msra.mxu0 %v2364
  %2386 = vmatprep.subr.mxu0 0.0
  %2387 = vmatpush1.msra.mxu0 %v2365
  %2388 = vmatprep.subr.mxu0 0.0
  %2389 = vmatpush1.msra.mxu0 %v2366
  %2390 = vmatprep.subr.mxu0 0.0
  %2391 = vmatpush1.msra.mxu0 %v2367
  %2392 = vmatprep.subr.mxu0 0.0
  %2393 = vmatpush1.msra.mxu0 0.0
  %2394 = vmatprep.subr.mxu0 0.0
  %2395 = vmatpush1.msra.mxu0 0.0
  %2396 = vmatprep.subr.mxu0 0.0
  %2397 = vmatpush1.msra.mxu0 0.0
  %2398 = vmatprep.subr.mxu0 0.0
  %2399 = vmatpush1.msra.mxu0 0.0
  %2400 = vmatprep.subr.mxu0 0.0
  %2401 = vmatpush1.msra.mxu0 0.0
  %2402 = vmatprep.subr.mxu0 0.0
  %2403 = vmatpush1.msra.mxu0 0.0
  %2404 = vmatprep.subr.mxu0 0.0
  %2405 = vmatpush1.msra.mxu0 0.0
  %2406 = vmatprep.subr.mxu0 0.0
  %2407 = vmatpush1.msra.mxu0 0.0
  %2408 = vmatprep.subr.mxu0 0.0
  %2409 = vmatpush1.msra.mxu0 0.0
  %2410 = vmatprep.subr.mxu0 0.0
  %2411 = vmatpush1.msra.mxu0 0.0
  %2412 = vmatprep.subr.mxu0 0.0
  %2413 = vmatpush1.msra.mxu0 0.0
  %2414 = vmatprep.subr.mxu0 0.0
  %2415 = vmatpush1.msra.mxu0 0.0
  %2416 = vmatprep.subr.mxu0 0.0
  %2417 = vmatpush1.msra.mxu0 0.0
  %2418 = vmatprep.subr.mxu0 0.0
  %2419 = vmatpush1.msra.mxu0 0.0
  %2420 = vmatprep.subr.mxu0 0.0
  %2421 = vmatpush1.msra.mxu0 0.0
  %2422 = vmatprep.subr.mxu0 0.0
  %2423 = vmatpush1.msra.mxu0 0.0
  %2424 = vmatprep.subr.mxu0 0.0
  %2425 = vmatpush1.msra.mxu0 0.0
  %2426 = vmatprep.subr.mxu0 0.0
  %2427 = vmatpush1.msra.mxu0 0.0
  %2428 = vmatprep.subr.mxu0 0.0
  %2429 = vmatpush1.msra.mxu0 0.0
  %2430 = vmatprep.subr.mxu0 0.0
  %2431 = vmatpush1.msra.mxu0 0.0
  %2432 = vmatprep.subr.mxu0 0.0
  %2433 = vmatpush1.msra.mxu0 0.0
  %2434 = vmatprep.subr.mxu0 0.0
  %2435 = vmatpush1.msra.mxu0 0.0
  %2436 = vmatprep.subr.mxu0 0.0
  %2437 = vmatpush1.msra.mxu0 0.0
  %2438 = vmatprep.subr.mxu0 0.0
  %2439 = vmatpush1.msra.mxu0 0.0
  %2440 = vmatprep.subr.mxu0 0.0
  %2441 = vmatpush1.msra.mxu0 0.0
  %2442 = vmatprep.subr.mxu0 0.0
  %2443 = vmatpush1.msra.mxu0 0.0
  %2444 = vmatprep.mubr.f32.mxu0 0.0
  %2445 = vmatmul.mubr.f32.gmra.mrb[0].mxu0 %v2375
  %v2446 = vpop.f32.mrb[0].mxu0
  %v2447 = vadd.f32 %v2372, %v2446
  %v2448 = vpop.f32.mrb[0].mxu0
  %2449 = vmatprep.mubr.f32.mxu0 0.0
  %2450 = vmatmul.mubr.f32.gmra.mrb[0].mxu0 %v2378
  %v2451 = vpop.f32.mrb[0].mxu0
  %v2452 = vadd.f32 %v2372, %v2451
  %v2453 = vpop.f32.mrb[0].mxu0
  %2454 = vdwg.mxu0
  %vm2455 = vcmp.ge.f32.partialorder %v2447, 0.0
  %vm2456 = vcmp.ge.f32.partialorder %v2452, 0.0
  %v2457 = vmul.f32 %v2447, 0.01
  %v2458 = vmul.f32 %v2452, 0.01
  %v2459 = vsel %vm2455, %v2447, %v2457
  %v2460 = vsel %vm2456, %v2452, %v2458
  %v2461 = vld [vmem:[%s2 + $0x370] sm:$0x3]
  %v2462 = vsel %vm64, %v2459, 0.0
  %2463 = vadd.xlane.f32.xlu0 %v2462
  %v2464 = vpop.xlane.xlu0 %2463
  %vm2465 = vcmask 257024
  %v2466 = vsel %vm2465, %v2460, 0.0
  %2467 = vadd.xlane.f32.xlu0 %v2466
  %v2468 = vpop.xlane.xlu0 %2467
  %v2469 = vmul.f32 %v2464, %v230
  %v2470 = vmul.f32 %v2468, %v230
  %v2471 = vsub.f32 %v2459, %v2469
  %v2472 = vsub.f32 %v2460, %v2470
  %v2473 = vmul.f32 %v2471, %v2471
  %v2474 = vmul.f32 %v2472, %v2472
  %v2475 = vsel %vm64, %v2473, 0.0
  %2476 = vadd.xlane.f32.xlu0 %v2475
  %v2477 = vpop.xlane.xlu0 %2476
  %v2478 = vsel %vm2465, %v2474, 0.0
  %2479 = vadd.xlane.f32.xlu0 %v2478
  %v2480 = vpop.xlane.xlu0 %2479
  %v2481 = vmul.f32 %v2477, %v230
  %v2482 = vmul.f32 %v2480, %v230
  %v2483 = vadd.f32 %v2481, 1e-06
  %v2484 = vadd.f32 %v2482, 1e-06
  %v2485 = vrsqrt.pop %v2483
  %v2486 = vrsqrt.pop %v2484
  %v2487 = vmul.f32 %v2471, %v2485
  %v2488 = vmul.f32 %v2472, %v2486
  %v2489 = vlaneseq
  %v2490 = vshrl.u32 %v2489, 7
  %v2491 = vsub.s32 0, %v2490
  %v2492 = vrot.slane %v2461, %v2491
  %v2493 = vmul.f32 %v2487, %v2492
  %v2494 = vmul.f32 %v2488, %v2492
  %v2495 = vlaneseq
  %v2496 = vshrl.u32 %v2495, 7
  %v2497 = vsub.s32 1, %v2496
  %v2498 = vrot.slane %v2461, %v2497
  %v2499 = vadd.f32 %v2493, %v2498
  %v2500 = vadd.f32 %v2494, %v2498
  %v2501 = vld [vmem:[%s2 + $0x378] sm:$0xff]
  %v2502 = vld [vmem:[%s2 + $0x380] sm:$0xff]
  %v2503 = vld [vmem:[%s2 + $0x388] sm:$0xff]
  %v2504 = vld [vmem:[%s2 + $0x390] sm:$0xff]
  %2506 = vset.pattern.permute.xlu0 0
  %2507 = vperm.xlu0 %2506, %v2503
  %v2508 = vpop.permute.xlu0 %2507
  %2511 = vset.pattern.permute.xlu0 0
  %2512 = vperm.xlu0 %2511, %v2504
  %v2513 = vpop.permute.xlu0 %2512
  %vm2515 = vcmask 97280
  %v2517 = vsel %vm2515, %v2501, 0
  %v2520 = vsel %vm2515, %v2502, 0
  %vm2522 = vcmask 1043456
  %v2524 = vsel %vm2522, %v2500, 0
  %2526 = vmatprep.subr.mxu0 0.0
  %2527 = vmatpush1.msra.mxu0 %v2499
  %2528 = vmatprep.subr.mxu0 0.0
  %2529 = vmatpush1.msra.mxu0 %v2524
  %2530 = vmatprep.subr.mxu0 0.0
  %2531 = vmatpush1.msra.mxu0 0.0
  %2532 = vmatprep.subr.mxu0 0.0
  %2533 = vmatpush1.msra.mxu0 0.0
  %2534 = vmatprep.subr.mxu0 0.0
  %2535 = vmatpush1.msra.mxu0 0.0
  %2536 = vmatprep.subr.mxu0 0.0
  %2537 = vmatpush1.msra.mxu0 0.0
  %2538 = vmatprep.subr.mxu0 0.0
  %2539 = vmatpush1.msra.mxu0 0.0
  %2540 = vmatprep.subr.mxu0 0.0
  %2541 = vmatpush1.msra.mxu0 0.0
  %2542 = vmatprep.subr.mxu0 0.0
  %2543 = vmatpush1.msra.mxu0 0.0
  %2544 = vmatprep.subr.mxu0 0.0
  %2545 = vmatpush1.msra.mxu0 0.0
  %2546 = vmatprep.subr.mxu0 0.0
  %2547 = vmatpush1.msra.mxu0 0.0
  %2548 = vmatprep.subr.mxu0 0.0
  %2549 = vmatpush1.msra.mxu0 0.0
  %2550 = vmatprep.subr.mxu0 0.0
  %2551 = vmatpush1.msra.mxu0 0.0
  %2552 = vmatprep.subr.mxu0 0.0
  %2553 = vmatpush1.msra.mxu0 0.0
  %2554 = vmatprep.subr.mxu0 0.0
  %2555 = vmatpush1.msra.mxu0 0.0
  %2556 = vmatprep.subr.mxu0 0.0
  %2557 = vmatpush1.msra.mxu0 0.0
  %2558 = vmatprep.subr.mxu0 0.0
  %2559 = vmatpush1.msra.mxu0 0.0
  %2560 = vmatprep.subr.mxu0 0.0
  %2561 = vmatpush1.msra.mxu0 0.0
  %2562 = vmatprep.subr.mxu0 0.0
  %2563 = vmatpush1.msra.mxu0 0.0
  %2564 = vmatprep.subr.mxu0 0.0
  %2565 = vmatpush1.msra.mxu0 0.0
  %2566 = vmatprep.subr.mxu0 0.0
  %2567 = vmatpush1.msra.mxu0 0.0
  %2568 = vmatprep.subr.mxu0 0.0
  %2569 = vmatpush1.msra.mxu0 0.0
  %2570 = vmatprep.subr.mxu0 0.0
  %2571 = vmatpush1.msra.mxu0 0.0
  %2572 = vmatprep.subr.mxu0 0.0
  %2573 = vmatpush1.msra.mxu0 0.0
  %2574 = vmatprep.subr.mxu0 0.0
  %2575 = vmatpush1.msra.mxu0 0.0
  %2576 = vmatprep.subr.mxu0 0.0
  %2577 = vmatpush1.msra.mxu0 0.0
  %2578 = vmatprep.subr.mxu0 0.0
  %2579 = vmatpush1.msra.mxu0 0.0
  %2580 = vmatprep.subr.mxu0 0.0
  %2581 = vmatpush1.msra.mxu0 0.0
  %2582 = vmatprep.subr.mxu0 0.0
  %2583 = vmatpush1.msra.mxu0 0.0
  %2584 = vmatprep.subr.mxu0 0.0
  %2585 = vmatpush1.msra.mxu0 0.0
  %2586 = vmatprep.subr.mxu0 0.0
  %2587 = vmatpush1.msra.mxu0 0.0
  %2588 = vmatprep.subr.mxu0 0.0
  %2589 = vmatpush1.msra.mxu0 0.0
  %2590 = vmatprep.mubr.f32.mxu0 0.0
  %2591 = vmatmul.mubr.f32.gmra.mrb[0].mxu0 %v2517
  %v2592 = vpop.f32.mrb[0].mxu0
  %v2593 = vadd.f32 %v2508, %v2592
  %v2594 = vpop.f32.mrb[0].mxu0
  %2595 = vmatprep.mubr.f32.mxu0 0.0
  %2596 = vmatmul.mubr.f32.gmra.mrb[0].mxu0 %v2520
  %v2597 = vpop.f32.mrb[0].mxu0
  %v2598 = vadd.f32 %v2513, %v2597
  %v2599 = vpop.f32.mrb[0].mxu0
  %2600 = vdwg.mxu0
  %v2601 = vld [vmem:[%s2 + $0x398] sm:$0x3]
  %v2602 = vsel %vm64, %v2593, 0.0
  %2603 = vadd.xlane.f32.xlu0 %v2602
  %v2604 = vpop.xlane.xlu0 %2603
  %v2605 = vsel %vm64, %v2598, 0.0
  %2606 = vadd.xlane.f32.xlu0 %v2605
  %v2607 = vpop.xlane.xlu0 %2606
  %v2608 = vmul.f32 %v2604, %v230
  %v2609 = vmul.f32 %v2607, %v230
  %v2610 = vsub.f32 %v2593, %v2608
  %v2611 = vsub.f32 %v2598, %v2609
  %v2612 = vmul.f32 %v2610, %v2610
  %v2613 = vmul.f32 %v2611, %v2611
  %v2614 = vsel %vm64, %v2612, 0.0
  %2615 = vadd.xlane.f32.xlu0 %v2614
  %v2616 = vpop.xlane.xlu0 %2615
  %v2617 = vsel %vm64, %v2613, 0.0
  %2618 = vadd.xlane.f32.xlu0 %v2617
  %v2619 = vpop.xlane.xlu0 %2618
  %v2620 = vmul.f32 %v2616, %v230
  %v2621 = vmul.f32 %v2619, %v230
  %v2622 = vadd.f32 %v2620, 1e-06
  %v2623 = vadd.f32 %v2621, 1e-06
  %v2624 = vrsqrt.pop %v2622
  %v2625 = vrsqrt.pop %v2623
  %v2626 = vmul.f32 %v2610, %v2624
  %v2627 = vmul.f32 %v2611, %v2625
  %v2628 = vlaneseq
  %v2629 = vshrl.u32 %v2628, 7
  %v2630 = vsub.s32 0, %v2629
  %v2631 = vrot.slane %v2601, %v2630
  %v2632 = vmul.f32 %v2626, %v2631
  %v2633 = vmul.f32 %v2627, %v2631
  %v2634 = vlaneseq
  %v2635 = vshrl.u32 %v2634, 7
  %v2636 = vsub.s32 1, %v2635
  %v2637 = vrot.slane %v2601, %v2636
  %v2638 = vadd.f32 %v2632, %v2637
  %v2639 = vadd.f32 %v2633, %v2637
  %v2640 = vld [vmem:[%s3 + $0x50] sm:$0xff]
  %v2641 = vld [vmem:[%s3 + $0x58] sm:$0xff]
  %v2642 = vld [vmem:[%s3 + $0x60] sm:$0xff]
  %v2643 = vld [vmem:[%s3 + $0x68] sm:$0xff]
  %v2644 = vld [vmem:[%s3 + $0x70] sm:$0xff]
  %v2645 = vld [vmem:[%s3 + $0x78] sm:$0xff]
  %v2646 = vld [vmem:[%s3 + $0x80] sm:$0xff]
  %v2647 = vld [vmem:[%s3 + $0x88] sm:$0xff]
  %v2649 = vsel %vm64, %v2638, 0
  %v2652 = vsel %vm64, %v2639, 0
  %2654 = vmatprep.subr.mxu0 0.0
  %2655 = vmatpush1.msra.mxu0 %v2644
  %2656 = vmatprep.subr.mxu0 0.0
  %2657 = vmatpush1.msra.mxu0 %v2645
  %2658 = vmatprep.subr.mxu0 0.0
  %2659 = vmatpush1.msra.mxu0 %v2646
  %2660 = vmatprep.subr.mxu0 0.0
  %2661 = vmatpush1.msra.mxu0 %v2647
  %2662 = vmatprep.subr.mxu0 0.0
  %2663 = vmatpush1.msra.mxu0 0.0
  %2664 = vmatprep.subr.mxu0 0.0
  %2665 = vmatpush1.msra.mxu0 0.0
  %2666 = vmatprep.subr.mxu0 0.0
  %2667 = vmatpush1.msra.mxu0 0.0
  %2668 = vmatprep.subr.mxu0 0.0
  %2669 = vmatpush1.msra.mxu0 0.0
  %2670 = vmatprep.subr.mxu0 0.0
  %2671 = vmatpush1.msra.mxu0 0.0
  %2672 = vmatprep.subr.mxu0 0.0
  %2673 = vmatpush1.msra.mxu0 0.0
  %2674 = vmatprep.subr.mxu0 0.0
  %2675 = vmatpush1.msra.mxu0 0.0
  %2676 = vmatprep.subr.mxu0 0.0
  %2677 = vmatpush1.msra.mxu0 0.0
  %2678 = vmatprep.subr.mxu0 0.0
  %2679 = vmatpush1.msra.mxu0 0.0
  %2680 = vmatprep.subr.mxu0 0.0
  %2681 = vmatpush1.msra.mxu0 0.0
  %2682 = vmatprep.subr.mxu0 0.0
  %2683 = vmatpush1.msra.mxu0 0.0
  %2684 = vmatprep.subr.mxu0 0.0
  %2685 = vmatpush1.msra.mxu0 0.0
  %2686 = vmatprep.subr.mxu0 0.0
  %2687 = vmatpush1.msra.mxu0 0.0
  %2688 = vmatprep.subr.mxu0 0.0
  %2689 = vmatpush1.msra.mxu0 0.0
  %2690 = vmatprep.subr.mxu0 0.0
  %2691 = vmatpush1.msra.mxu0 0.0
  %2692 = vmatprep.subr.mxu0 0.0
  %2693 = vmatpush1.msra.mxu0 0.0
  %2694 = vmatprep.subr.mxu0 0.0
  %2695 = vmatpush1.msra.mxu0 0.0
  %2696 = vmatprep.subr.mxu0 0.0
  %2697 = vmatpush1.msra.mxu0 0.0
  %2698 = vmatprep.subr.mxu0 0.0
  %2699 = vmatpush1.msra.mxu0 0.0
  %2700 = vmatprep.subr.mxu0 0.0
  %2701 = vmatpush1.msra.mxu0 0.0
  %2702 = vmatprep.subr.mxu0 0.0
  %2703 = vmatpush1.msra.mxu0 0.0
  %2704 = vmatprep.subr.mxu0 0.0
  %2705 = vmatpush1.msra.mxu0 0.0
  %2706 = vmatprep.subr.mxu0 0.0
  %2707 = vmatpush1.msra.mxu0 0.0
  %2708 = vmatprep.subr.mxu0 0.0
  %2709 = vmatpush1.msra.mxu0 0.0
  %2710 = vmatprep.subr.mxu0 0.0
  %2711 = vmatpush1.msra.mxu0 0.0
  %2712 = vmatprep.subr.mxu0 0.0
  %2713 = vmatpush1.msra.mxu0 0.0
  %2714 = vmatprep.subr.mxu0 0.0
  %2715 = vmatpush1.msra.mxu0 0.0
  %2716 = vmatprep.subr.mxu0 0.0
  %2717 = vmatpush1.msra.mxu0 0.0
  %2718 = vmatprep.mubr.f32.mxu0 0.0
  %2719 = vmatmul.mubr.f32.gmra.mrb[0].mxu0 %v2649
  %v2720 = vpop.f32.mrb[0].mxu0
  %v2721 = vadd.f32 0.0, %v2720
  %v2722 = vpop.f32.mrb[0].mxu0
  %2723 = vmatprep.mubr.f32.mxu0 0.0
  %2724 = vmatmul.mubr.f32.gmra.mrb[0].mxu0 %v2652
  %v2725 = vpop.f32.mrb[0].mxu0
  %v2726 = vadd.f32 0.0, %v2725
  %v2727 = vpop.f32.mrb[0].mxu0
  %2728 = vdwg.mxu0
  %v2730 = vsel %vm64, %v2358, 0
  %v2733 = vsel %vm64, %v2359, 0
  %2735 = vmatprep.subr.mxu0 0.0
  %2736 = vmatpush1.msra.mxu0 %v2640
  %2737 = vmatprep.subr.mxu0 0.0
  %2738 = vmatpush1.msra.mxu0 %v2641
  %2739 = vmatprep.subr.mxu0 0.0
  %2740 = vmatpush1.msra.mxu0 %v2642
  %2741 = vmatprep.subr.mxu0 0.0
  %2742 = vmatpush1.msra.mxu0 %v2643
  %2743 = vmatprep.subr.mxu0 0.0
  %2744 = vmatpush1.msra.mxu0 0.0
  %2745 = vmatprep.subr.mxu0 0.0
  %2746 = vmatpush1.msra.mxu0 0.0
  %2747 = vmatprep.subr.mxu0 0.0
  %2748 = vmatpush1.msra.mxu0 0.0
  %2749 = vmatprep.subr.mxu0 0.0
  %2750 = vmatpush1.msra.mxu0 0.0
  %2751 = vmatprep.subr.mxu0 0.0
  %2752 = vmatpush1.msra.mxu0 0.0
  %2753 = vmatprep.subr.mxu0 0.0
  %2754 = vmatpush1.msra.mxu0 0.0
  %2755 = vmatprep.subr.mxu0 0.0
  %2756 = vmatpush1.msra.mxu0 0.0
  %2757 = vmatprep.subr.mxu0 0.0
  %2758 = vmatpush1.msra.mxu0 0.0
  %2759 = vmatprep.subr.mxu0 0.0
  %2760 = vmatpush1.msra.mxu0 0.0
  %2761 = vmatprep.subr.mxu0 0.0
  %2762 = vmatpush1.msra.mxu0 0.0
  %2763 = vmatprep.subr.mxu0 0.0
  %2764 = vmatpush1.msra.mxu0 0.0
  %2765 = vmatprep.subr.mxu0 0.0
  %2766 = vmatpush1.msra.mxu0 0.0
  %2767 = vmatprep.subr.mxu0 0.0
  %2768 = vmatpush1.msra.mxu0 0.0
  %2769 = vmatprep.subr.mxu0 0.0
  %2770 = vmatpush1.msra.mxu0 0.0
  %2771 = vmatprep.subr.mxu0 0.0
  %2772 = vmatpush1.msra.mxu0 0.0
  %2773 = vmatprep.subr.mxu0 0.0
  %2774 = vmatpush1.msra.mxu0 0.0
  %2775 = vmatprep.subr.mxu0 0.0
  %2776 = vmatpush1.msra.mxu0 0.0
  %2777 = vmatprep.subr.mxu0 0.0
  %2778 = vmatpush1.msra.mxu0 0.0
  %2779 = vmatprep.subr.mxu0 0.0
  %2780 = vmatpush1.msra.mxu0 0.0
  %2781 = vmatprep.subr.mxu0 0.0
  %2782 = vmatpush1.msra.mxu0 0.0
  %2783 = vmatprep.subr.mxu0 0.0
  %2784 = vmatpush1.msra.mxu0 0.0
  %2785 = vmatprep.subr.mxu0 0.0
  %2786 = vmatpush1.msra.mxu0 0.0
  %2787 = vmatprep.subr.mxu0 0.0
  %2788 = vmatpush1.msra.mxu0 0.0
  %2789 = vmatprep.subr.mxu0 0.0
  %2790 = vmatpush1.msra.mxu0 0.0
  %2791 = vmatprep.subr.mxu0 0.0
  %2792 = vmatpush1.msra.mxu0 0.0
  %2793 = vmatprep.subr.mxu0 0.0
  %2794 = vmatpush1.msra.mxu0 0.0
  %2795 = vmatprep.subr.mxu0 0.0
  %2796 = vmatpush1.msra.mxu0 0.0
  %2797 = vmatprep.subr.mxu0 0.0
  %2798 = vmatpush1.msra.mxu0 0.0
  %2799 = vmatprep.mubr.f32.mxu0 0.0
  %2800 = vmatmul.mubr.f32.gmra.mrb[0].mxu0 %v2730
  %v2801 = vpop.f32.mrb[0].mxu0
  %v2802 = vadd.f32 %v2721, %v2801
  %v2803 = vpop.f32.mrb[0].mxu0
  %2804 = vmatprep.mubr.f32.mxu0 0.0
  %2805 = vmatmul.mubr.f32.gmra.mrb[0].mxu0 %v2733
  %v2806 = vpop.f32.mrb[0].mxu0
  %v2807 = vadd.f32 %v2726, %v2806
  %v2808 = vpop.f32.mrb[0].mxu0
  %2809 = vdwg.mxu0
  %2810 = vst [vmem:[%s4] sm:$0xff] %v2802
  %2811 = vst [vmem:[%s4 + $0x8] sm:$0xff] %v2807
  // Predicated region
  $region18: #{forward.1} parent=0 // pred_check
    _
  $region19: #{forward.1} parent=0 // pred_check_branch
    %2813 = sbr.rel (0) target = $region21
  $region20: #{forward.1} parent=0 // pred_region
    _
  $region21: #{forward.1} parent=0 // pred_fallthru
    _
  // Predicated region
  $region22: #{forward.1} parent=0 // pred_check
    _
  $region23: #{forward.1} parent=0 // pred_check_branch
    %2815 = sbr.rel (0) target = $region25
  $region24: #{forward.1} parent=0 // pred_region
    _
  $region25: #{forward.1} parent=0 // pred_fallthru
    _

</llo_original>
